<compile_context>
chip_gen: v7x
topology: tpu7x:2x2x1
jax: 0.10.0
libtpu: 0.0.40
codegen_flags: <defaults>
</compile_context>

<pallas_src>
import functools

import jax
import jax.numpy as jnp
from jax.experimental import pallas as pl
from jax.experimental.pallas import tpu as pltpu


# ----------------------------- config -----------------------------

PREFIX_LENGTH = 4      # self.prefix_length
PREFIX_SIZE   = 16     # prefix_size (CLIP feature dim)
EMBED_DIM     = 32     # gpt_embedding_size
VOCAB         = 50
VOCAB_PAD     = 128    # lane-dense logits / padded embedding table
N_LAYERS      = 2
N_HEADS       = 4
MAX_POS       = 64

_BF16 = jnp.bfloat16
_VMEM = pl.BlockSpec(memory_space=pltpu.MemorySpace.VMEM)
_NEG_INF = -1e30


# ----------------------------- in-kernel helpers -----------------------------

def _ln(x, g, b, eps=1e-5):
    """LayerNorm over the last dim, f32 math; g/b are (1, E)."""
    mu = jnp.mean(x, axis=-1, keepdims=True)
    xc = x - mu
    var = jnp.mean(xc * xc, axis=-1, keepdims=True)
    return xc * jax.lax.rsqrt(var + eps) * g + b


def _mm(x, w, b=None):
    """MXU matmul with bf16 operands (w already bf16) and f32 accumulation; optional bias."""
    y = jnp.dot(x.astype(w.dtype), w, preferred_element_type=jnp.float32)
    return y if b is None else y + b


def _gelu_new(y):
    """GPT-2 gelu (tanh approximation), f32."""
    return 0.5 * y * (1.0 + jnp.tanh(0.7978845608028654 * (y + 0.044715 * y * y * y)))


# ----------------------------- fused Pallas kernel -----------------------------

def _clip_caption_kernel(tok_ref, prefix_ref, wte_ref, wpe_ref, bias_ref,
                         mlp_w1_ref, mlp_b1_ref, mlp_w2_ref, mlp_b2_ref,
                         ln1_g_ref, ln1_b_ref, attn_w_ref, attn_b_ref,
                         proj_w_ref, proj_b_ref, ln2_g_ref, ln2_b_ref,
                         fc_w_ref, fc_b_ref, fc2_w_ref, fc2_b_ref,
                         lnf_g_ref, lnf_b_ref, wte_lm_ref,
                         logits_ref, *, n_heads):
    """clip_project MLP + token gather + concat + full GPT2LMHead forward, all in VMEM."""
    B = prefix_ref.shape[0]
    Vp, E = wte_ref.shape                           # padded vocab, embedding dim
    PL = mlp_w2_ref.shape[0]                        # prefix_length
    T = wpe_ref.shape[0]                            # prefix_length + n_tokens
    T_tok = T - PL
    L = ln1_g_ref.shape[0]
    Dh = E // n_heads
    scale = 1.0 / (Dh ** 0.5)
    nt = (((1,), (1,)), ((), ()))                   # contract last dims of both operands (A @ B^T)

    # ---- embedding_text = wte(tokens): exact-row one-hot gather, fully vectorized ----
    tok = tok_ref[...]                                                    # (B*T_tok, 1) int32
    one_hot = (tok == jax.lax.broadcasted_iota(jnp.int32, (B * T_tok, Vp), 1)
               ).astype(jnp.float32)
    text_emb = jnp.dot(one_hot, wte_ref[...],
                       preferred_element_type=jnp.float32)                # (B*T_tok, E) f32

    # ---- prefix_projections = clip_project(prefix): Linear -> Tanh -> Linear ----
    h = jnp.tanh(_mm(prefix_ref[...], mlp_w1_ref[...], mlp_b1_ref[...]))  # (B, H1)
    # second layer pre-split per prefix position at init -> PL small matmuls, no reshapes
    pref = [_mm(h, mlp_w2_ref[p], mlp_b2_ref[p]) for p in range(PL)]      # PL x (B, E)

    # ---- embedding_cat + position embeddings, assembled as one flat (B*T, E) stream ----
    wpe = wpe_ref[...]                                                    # (T, E)
    rows = []
    for b in range(B):
        pre_b = jnp.concatenate([pref[p][b:b + 1, :] for p in range(PL)], axis=0)  # (PL, E)
        txt_b = text_emb[b * T_tok:(b + 1) * T_tok, :]                             # (T_tok, E)
        rows.append(jnp.concatenate([pre_b, txt_b], axis=0) + wpe)                 # (T, E)
    x = jnp.concatenate(rows, axis=0)                                     # (B*T, E) f32

    # block-diagonal causal additive bias over the flat stream (built once in the wrapper)
    bias = bias_ref[...]                                                  # (B*T, B*T) f32

    for l in range(L):
        # ---- attention sub-block (pre-LN, causal, all batches at once) ----
        hx = _ln(x, ln1_g_ref[l], ln1_b_ref[l])
        qkv = _mm(hx, attn_w_ref[l], attn_b_ref[l])                       # (B*T, 3E) f32
        qkv_bf = qkv.astype(_BF16)                                        # single cast per layer
        o_heads = []
        for hh in range(n_heads):
            q = qkv_bf[:, hh * Dh:(hh + 1) * Dh]
            k = qkv_bf[:, E + hh * Dh:E + (hh + 1) * Dh]
            v = qkv_bf[:, 2 * E + hh * Dh:2 * E + (hh + 1) * Dh]
            s = jax.lax.dot_general(q, k, nt,
                                    preferred_element_type=jnp.float32) * scale + bias
            s = s - jnp.max(s, axis=-1, keepdims=True)
            p = jnp.exp(s)
            p = p * pl.reciprocal(jnp.sum(p, axis=-1, keepdims=True), approx=True)
            o_heads.append(jnp.dot(p.astype(_BF16), v,
                                   preferred_element_type=jnp.float32))   # (B*T, Dh)
        attn = jnp.concatenate(o_heads, axis=-1)                          # (B*T, E)
        x = x + _mm(attn, proj_w_ref[l], proj_b_ref[l])                   # one packed proj matmul

        # ---- MLP sub-block (pre-LN, gelu_new) ----
        hx = _ln(x, ln2_g_ref[l], ln2_b_ref[l])
        hx = _gelu_new(_mm(hx, fc_w_ref[l], fc_b_ref[l]))                 # (B*T, 4E)
        x = x + _mm(hx, fc2_w_ref[l], fc2_b_ref[l])                       # (B*T, E)

    # ---- final LN + tied lm_head (contract over E; vocab padded to lane-dense 128) ----
    xf = _ln(x, lnf_g_ref[...], lnf_b_ref[...])
    logits_ref[...] = jax.lax.dot_general(xf.astype(_BF16), wte_lm_ref[...], nt,
                                          preferred_element_type=jnp.float32)


# ----------------------------- params -----------------------------

def init_params(key):
    E, L, PL = EMBED_DIM, N_LAYERS, PREFIX_LENGTH
    H1 = E * PL // 2
    ks = iter(jax.random.split(key, 16))

    def rnd(shape, scale=0.02):
        return (scale * jax.random.normal(next(ks), shape)).astype(jnp.float32)

    wte = rnd((VOCAB, E))
    # tied embedding / lm_head weight, zero-padded along vocab to a lane-dense width:
    #   f32 copy used for the in-kernel token gather, bf16 copy used as the MXU lm_head
    #   operand (contracts over E -> no per-forward transpose).
    wte_pad = jnp.zeros((VOCAB_PAD, E), jnp.float32).at[:VOCAB].set(wte)

    params = {
        "wte_pad": wte_pad,                               # f32 (VOCAB_PAD, E)
        "wte_lm": wte_pad.astype(_BF16),                  # bf16 (VOCAB_PAD, E)
        "wpe": rnd((MAX_POS, E)),
        "lnf_g": jnp.ones((1, E), jnp.float32),
        "lnf_b": jnp.zeros((1, E), jnp.float32),
        # clip_project = MLP((prefix_size, E*prefix_len//2, E*prefix_len)) with Tanh between;
        # second layer pre-split per prefix position: (PL, H1, E).
        "mlp_w1": rnd((PREFIX_SIZE, H1)).astype(_BF16),
        "mlp_b1": jnp.zeros((1, H1), jnp.float32),
        "mlp_w2": rnd((PL, H1, E)).astype(_BF16),
        "mlp_b2": jnp.zeros((PL, 1, E), jnp.float32),
        # transformer blocks, stacked along a leading layer axis
        "ln1_g": jnp.ones((L, 1, E), jnp.float32),
        "ln1_b": jnp.zeros((L, 1, E), jnp.float32),
        "attn_w": rnd((L, E, 3 * E)).astype(_BF16),
        "attn_b": jnp.zeros((L, 1, 3 * E), jnp.float32),
        "proj_w": rnd((L, E, E)).astype(_BF16),           # packed -> one proj matmul per layer
        "proj_b": jnp.zeros((L, 1, E), jnp.float32),
        "ln2_g": jnp.ones((L, 1, E), jnp.float32),
        "ln2_b": jnp.zeros((L, 1, E), jnp.float32),
        "fc_w": rnd((L, E, 4 * E)).astype(_BF16),
        "fc_b": jnp.zeros((L, 1, 4 * E), jnp.float32),
        "fc2_w": rnd((L, 4 * E, E)).astype(_BF16),
        "fc2_b": jnp.zeros((L, 1, E), jnp.float32),
    }
    return params


# ----------------------------- forward pass -----------------------------

def clip_caption_forward(params, tokens, prefix):
    """ClipCaptionModel.forward(tokens, prefix, mask=None, labels=None) -> logits (B, T, V)."""
    B, T_tok = tokens.shape
    T = PREFIX_LENGTH + T_tok
    BT = B * T

    # token ids as a lane-trivial int32 column (gathered in-kernel via one-hot matmul)
    tok_col = tokens.reshape(B * T_tok, 1).astype(jnp.int32)
    # only the first T rows of the learned position table are needed
    wpe = params["wpe"][:T, :]

    # block-diagonal causal additive bias over the flat (B*T) stream; shape-only constant,
    # folded by XLA under jit and DMA'd once per call.
    ri = jnp.arange(BT, dtype=jnp.int32)[:, None]
    ci = jnp.arange(BT, dtype=jnp.int32)[None, :]
    attn_bias = jnp.where(((ri // T) == (ci // T)) & (ci <= ri),
                          0.0, _NEG_INF).astype(jnp.float32)

    logits_flat = pl.pallas_call(
        functools.partial(_clip_caption_kernel, n_heads=N_HEADS),
        out_shape=jax.ShapeDtypeStruct((BT, VOCAB_PAD), jnp.float32),
        in_specs=[_VMEM] * 24,
        out_specs=_VMEM,
    )(tok_col, prefix, params["wte_pad"], wpe, attn_bias,
      params["mlp_w1"], params["mlp_b1"], params["mlp_w2"], params["mlp_b2"],
      params["ln1_g"], params["ln1_b"], params["attn_w"], params["attn_b"],
      params["proj_w"], params["proj_b"], params["ln2_g"], params["ln2_b"],
      params["fc_w"], params["fc_b"], params["fc2_w"], params["fc2_b"],
      params["lnf_g"], params["lnf_b"], params["wte_lm"])

    # strip the lane-dense vocab padding and restore the (B, T, V) view
    return logits_flat.reshape(B, T, VOCAB_PAD)[:, :, :VOCAB]


# ----------------------------- main -----------------------------

if __name__ == "__main__":
    key = jax.random.PRNGKey(0)
    k_params, k_tok, k_pref = jax.random.split(key, 3)

    params = init_params(k_params)

    B, T_TOK = 2, 8
    tokens = jax.random.randint(k_tok, (B, T_TOK), 0, VOCAB, dtype=jnp.int32)
    prefix = jax.random.normal(k_pref, (B, PREFIX_SIZE), dtype=jnp.float32)

    logits = jax.jit(clip_caption_forward)(params, tokens, prefix)
    jax.block_until_ready(logits)

    assert logits.shape == (B, PREFIX_LENGTH + T_TOK, VOCAB)
    assert bool(jnp.all(jnp.isfinite(logits)))
    print("KERNEL_OK")
</pallas_src>

<mosaic_0001>
module attributes {stable_mosaic.version = 11 : i64} {
  func.func @_clip_caption_kernel(%arg0: memref<16x1xi32, #tpu.memory_space<vmem>>, %arg1: memref<2x16xf32, #tpu.memory_space<vmem>>, %arg2: memref<128x32xf32, #tpu.memory_space<vmem>>, %arg3: memref<12x32xf32, #tpu.memory_space<vmem>>, %arg4: memref<24x24xf32, #tpu.memory_space<vmem>>, %arg5: memref<16x64xbf16, #tpu.memory_space<vmem>>, %arg6: memref<1x64xf32, #tpu.memory_space<vmem>>, %arg7: memref<4x64x32xbf16, #tpu.memory_space<vmem>>, %arg8: memref<4x1x32xf32, #tpu.memory_space<vmem>>, %arg9: memref<2x1x32xf32, #tpu.memory_space<vmem>>, %arg10: memref<2x1x32xf32, #tpu.memory_space<vmem>>, %arg11: memref<2x32x96xbf16, #tpu.memory_space<vmem>>, %arg12: memref<2x1x96xf32, #tpu.memory_space<vmem>>, %arg13: memref<2x32x32xbf16, #tpu.memory_space<vmem>>, %arg14: memref<2x1x32xf32, #tpu.memory_space<vmem>>, %arg15: memref<2x1x32xf32, #tpu.memory_space<vmem>>, %arg16: memref<2x1x32xf32, #tpu.memory_space<vmem>>, %arg17: memref<2x32x128xbf16, #tpu.memory_space<vmem>>, %arg18: memref<2x1x128xf32, #tpu.memory_space<vmem>>, %arg19: memref<2x128x32xbf16, #tpu.memory_space<vmem>>, %arg20: memref<2x1x32xf32, #tpu.memory_space<vmem>>, %arg21: memref<1x32xf32, #tpu.memory_space<vmem>>, %arg22: memref<1x32xf32, #tpu.memory_space<vmem>>, %arg23: memref<128x32xbf16, #tpu.memory_space<vmem>>, %arg24: memref<24x128xf32, #tpu.memory_space<vmem>>) attributes {dimension_semantics = [], scalar_prefetch = 0 : i64, scratch_operands = 0 : i64, tpu.core_type = #tpu.core_type<tc>} {
    %c0 = arith.constant 0 : index
    %c0_0 = arith.constant 0 : index
    %0 = vector.load %arg0[%c0, %c0_0] : memref<16x1xi32, #tpu.memory_space<vmem>>, vector<16x1xi32>
    %1 = tpu.iota {dimensions = array<i32: 1>} : vector<16x128xi32>
    %2 = vector.broadcast %0 : vector<16x1xi32> to vector<16x128xi32>
    %3 = arith.cmpi eq, %2, %1 : vector<16x128xi32>
    %4 = arith.extui %3 : vector<16x128xi1> to vector<16x128xi32>
    %5 = arith.sitofp %4 : vector<16x128xi32> to vector<16x128xf32>
    %c0_1 = arith.constant 0 : index
    %c0_2 = arith.constant 0 : index
    %6 = vector.load %arg2[%c0_1, %c0_2] : memref<128x32xf32, #tpu.memory_space<vmem>>, vector<128x32xf32>
    %cst = arith.constant dense<0.000000e+00> : vector<16x32xf32>
    %7 = tpu.matmul %5, %6, %cst {dimension_numbers = #tpu.dot_dimension_numbers<[1], [0], [0], [1], [0, 0, 1, 1], [], []>} : vector<16x128xf32>, vector<128x32xf32>, vector<16x32xf32> -> vector<16x32xf32>
    %c0_3 = arith.constant 0 : index
    %c0_4 = arith.constant 0 : index
    %8 = vector.load %arg1[%c0_3, %c0_4] : memref<2x16xf32, #tpu.memory_space<vmem>>, vector<2x16xf32>
    %c0_5 = arith.constant 0 : index
    %c0_6 = arith.constant 0 : index
    %9 = vector.load %arg5[%c0_5, %c0_6] : memref<16x64xbf16, #tpu.memory_space<vmem>>, vector<16x64xbf16>
    %c0_7 = arith.constant 0 : index
    %c0_8 = arith.constant 0 : index
    %10 = vector.load %arg6[%c0_7, %c0_8] : memref<1x64xf32, #tpu.memory_space<vmem>>, vector<1x64xf32>
    %11 = arith.truncf %8 : vector<2x16xf32> to vector<2x16xbf16>
    %cst_9 = arith.constant dense<0.000000e+00> : vector<2x64xf32>
    %12 = tpu.matmul %11, %9, %cst_9 {dimension_numbers = #tpu.dot_dimension_numbers<[1], [0], [0], [1], [0, 0, 1, 1], [], []>} : vector<2x16xbf16>, vector<16x64xbf16>, vector<2x64xf32> -> vector<2x64xf32>
    %13 = vector.broadcast %10 : vector<1x64xf32> to vector<2x64xf32>
    %14 = arith.addf %12, %13 : vector<2x64xf32>
    %15 = math.tanh %14 : vector<2x64xf32>
    %c0_10 = arith.constant 0 : index
    %c0_11 = arith.constant 0 : index
    %c0_12 = arith.constant 0 : index
    %16 = vector.load %arg7[%c0_10, %c0_11, %c0_12] : memref<4x64x32xbf16, #tpu.memory_space<vmem>>, vector<1x64x32xbf16>
    %17 = vector.shape_cast %16 : vector<1x64x32xbf16> to vector<64x32xbf16>
    %c0_13 = arith.constant 0 : index
    %c0_14 = arith.constant 0 : index
    %c0_15 = arith.constant 0 : index
    %18 = vector.load %arg8[%c0_13, %c0_14, %c0_15] : memref<4x1x32xf32, #tpu.memory_space<vmem>>, vector<1x1x32xf32>
    %19 = vector.shape_cast %18 : vector<1x1x32xf32> to vector<1x32xf32>
    %20 = arith.truncf %15 : vector<2x64xf32> to vector<2x64xbf16>
    %cst_16 = arith.constant dense<0.000000e+00> : vector<2x32xf32>
    %21 = tpu.matmul %20, %17, %cst_16 {dimension_numbers = #tpu.dot_dimension_numbers<[1], [0], [0], [1], [0, 0, 1, 1], [], []>} : vector<2x64xbf16>, vector<64x32xbf16>, vector<2x32xf32> -> vector<2x32xf32>
    %22 = vector.broadcast %19 : vector<1x32xf32> to vector<2x32xf32>
    %23 = arith.addf %21, %22 : vector<2x32xf32>
    %c1 = arith.constant 1 : index
    %c0_17 = arith.constant 0 : index
    %c0_18 = arith.constant 0 : index
    %24 = vector.load %arg7[%c1, %c0_17, %c0_18] : memref<4x64x32xbf16, #tpu.memory_space<vmem>>, vector<1x64x32xbf16>
    %25 = vector.shape_cast %24 : vector<1x64x32xbf16> to vector<64x32xbf16>
    %c1_19 = arith.constant 1 : index
    %c0_20 = arith.constant 0 : index
    %c0_21 = arith.constant 0 : index
    %26 = vector.load %arg8[%c1_19, %c0_20, %c0_21] : memref<4x1x32xf32, #tpu.memory_space<vmem>>, vector<1x1x32xf32>
    %27 = vector.shape_cast %26 : vector<1x1x32xf32> to vector<1x32xf32>
    %28 = arith.truncf %15 : vector<2x64xf32> to vector<2x64xbf16>
    %cst_22 = arith.constant dense<0.000000e+00> : vector<2x32xf32>
    %29 = tpu.matmul %28, %25, %cst_22 {dimension_numbers = #tpu.dot_dimension_numbers<[1], [0], [0], [1], [0, 0, 1, 1], [], []>} : vector<2x64xbf16>, vector<64x32xbf16>, vector<2x32xf32> -> vector<2x32xf32>
    %30 = vector.broadcast %27 : vector<1x32xf32> to vector<2x32xf32>
    %31 = arith.addf %29, %30 : vector<2x32xf32>
    %c2 = arith.constant 2 : index
    %c0_23 = arith.constant 0 : index
    %c0_24 = arith.constant 0 : index
    %32 = vector.load %arg7[%c2, %c0_23, %c0_24] : memref<4x64x32xbf16, #tpu.memory_space<vmem>>, vector<1x64x32xbf16>
    %33 = vector.shape_cast %32 : vector<1x64x32xbf16> to vector<64x32xbf16>
    %c2_25 = arith.constant 2 : index
    %c0_26 = arith.constant 0 : index
    %c0_27 = arith.constant 0 : index
    %34 = vector.load %arg8[%c2_25, %c0_26, %c0_27] : memref<4x1x32xf32, #tpu.memory_space<vmem>>, vector<1x1x32xf32>
    %35 = vector.shape_cast %34 : vector<1x1x32xf32> to vector<1x32xf32>
    %36 = arith.truncf %15 : vector<2x64xf32> to vector<2x64xbf16>
    %cst_28 = arith.constant dense<0.000000e+00> : vector<2x32xf32>
    %37 = tpu.matmul %36, %33, %cst_28 {dimension_numbers = #tpu.dot_dimension_numbers<[1], [0], [0], [1], [0, 0, 1, 1], [], []>} : vector<2x64xbf16>, vector<64x32xbf16>, vector<2x32xf32> -> vector<2x32xf32>
    %38 = vector.broadcast %35 : vector<1x32xf32> to vector<2x32xf32>
    %39 = arith.addf %37, %38 : vector<2x32xf32>
    %c3 = arith.constant 3 : index
    %c0_29 = arith.constant 0 : index
    %c0_30 = arith.constant 0 : index
    %40 = vector.load %arg7[%c3, %c0_29, %c0_30] : memref<4x64x32xbf16, #tpu.memory_space<vmem>>, vector<1x64x32xbf16>
    %41 = vector.shape_cast %40 : vector<1x64x32xbf16> to vector<64x32xbf16>
    %c3_31 = arith.constant 3 : index
    %c0_32 = arith.constant 0 : index
    %c0_33 = arith.constant 0 : index
    %42 = vector.load %arg8[%c3_31, %c0_32, %c0_33] : memref<4x1x32xf32, #tpu.memory_space<vmem>>, vector<1x1x32xf32>
    %43 = vector.shape_cast %42 : vector<1x1x32xf32> to vector<1x32xf32>
    %44 = arith.truncf %15 : vector<2x64xf32> to vector<2x64xbf16>
    %cst_34 = arith.constant dense<0.000000e+00> : vector<2x32xf32>
    %45 = tpu.matmul %44, %41, %cst_34 {dimension_numbers = #tpu.dot_dimension_numbers<[1], [0], [0], [1], [0, 0, 1, 1], [], []>} : vector<2x64xbf16>, vector<64x32xbf16>, vector<2x32xf32> -> vector<2x32xf32>
    %46 = vector.broadcast %43 : vector<1x32xf32> to vector<2x32xf32>
    %47 = arith.addf %45, %46 : vector<2x32xf32>
    %c0_35 = arith.constant 0 : index
    %c0_36 = arith.constant 0 : index
    %48 = vector.load %arg3[%c0_35, %c0_36] : memref<12x32xf32, #tpu.memory_space<vmem>>, vector<12x32xf32>
    %49 = vector.extract_strided_slice %23 {offsets = [0, 0], sizes = [1, 32], strides = [1, 1]} : vector<2x32xf32> to vector<1x32xf32>
    %50 = vector.extract_strided_slice %31 {offsets = [0, 0], sizes = [1, 32], strides = [1, 1]} : vector<2x32xf32> to vector<1x32xf32>
    %51 = vector.extract_strided_slice %39 {offsets = [0, 0], sizes = [1, 32], strides = [1, 1]} : vector<2x32xf32> to vector<1x32xf32>
    %52 = vector.extract_strided_slice %47 {offsets = [0, 0], sizes = [1, 32], strides = [1, 1]} : vector<2x32xf32> to vector<1x32xf32>
    %53 = tpu.concatenate %49, %50, %51, %52 in 0 : vector<1x32xf32>, vector<1x32xf32>, vector<1x32xf32>, vector<1x32xf32> -> vector<4x32xf32>
    %54 = vector.extract_strided_slice %7 {offsets = [0, 0], sizes = [8, 32], strides = [1, 1]} : vector<16x32xf32> to vector<8x32xf32>
    %55 = tpu.concatenate %53, %54 in 0 : vector<4x32xf32>, vector<8x32xf32> -> vector<12x32xf32>
    %56 = arith.addf %55, %48 : vector<12x32xf32>
    %57 = vector.extract_strided_slice %23 {offsets = [1, 0], sizes = [1, 32], strides = [1, 1]} : vector<2x32xf32> to vector<1x32xf32>
    %58 = vector.extract_strided_slice %31 {offsets = [1, 0], sizes = [1, 32], strides = [1, 1]} : vector<2x32xf32> to vector<1x32xf32>
    %59 = vector.extract_strided_slice %39 {offsets = [1, 0], sizes = [1, 32], strides = [1, 1]} : vector<2x32xf32> to vector<1x32xf32>
    %60 = vector.extract_strided_slice %47 {offsets = [1, 0], sizes = [1, 32], strides = [1, 1]} : vector<2x32xf32> to vector<1x32xf32>
    %61 = tpu.concatenate %57, %58, %59, %60 in 0 : vector<1x32xf32>, vector<1x32xf32>, vector<1x32xf32>, vector<1x32xf32> -> vector<4x32xf32>
    %62 = vector.extract_strided_slice %7 {offsets = [8, 0], sizes = [8, 32], strides = [1, 1]} : vector<16x32xf32> to vector<8x32xf32>
    %63 = tpu.concatenate %61, %62 in 0 : vector<4x32xf32>, vector<8x32xf32> -> vector<12x32xf32>
    %64 = arith.addf %63, %48 : vector<12x32xf32>
    %65 = tpu.concatenate %56, %64 in 0 : vector<12x32xf32>, vector<12x32xf32> -> vector<24x32xf32>
    %c0_37 = arith.constant 0 : index
    %c0_38 = arith.constant 0 : index
    %66 = vector.load %arg4[%c0_37, %c0_38] : memref<24x24xf32, #tpu.memory_space<vmem>>, vector<24x24xf32>
    %c0_39 = arith.constant 0 : index
    %c0_40 = arith.constant 0 : index
    %c0_41 = arith.constant 0 : index
    %67 = vector.load %arg9[%c0_39, %c0_40, %c0_41] : memref<2x1x32xf32, #tpu.memory_space<vmem>>, vector<1x1x32xf32>
    %68 = vector.shape_cast %67 : vector<1x1x32xf32> to vector<1x32xf32>
    %c0_42 = arith.constant 0 : index
    %c0_43 = arith.constant 0 : index
    %c0_44 = arith.constant 0 : index
    %69 = vector.load %arg10[%c0_42, %c0_43, %c0_44] : memref<2x1x32xf32, #tpu.memory_space<vmem>>, vector<1x1x32xf32>
    %70 = vector.shape_cast %69 : vector<1x1x32xf32> to vector<1x32xf32>
    %cst_45 = arith.constant dense<0.000000e+00> : vector<24xf32>
    %71 = vector.multi_reduction <add>, %65, %cst_45 [1] : vector<24x32xf32> to vector<24xf32>
    %72 = vector.shape_cast %71 : vector<24xf32> to vector<24x1xf32>
    %cst_46 = arith.constant 3.200000e+01 : f32
    %73 = vector.broadcast %cst_46 : f32 to vector<24x1xf32>
    %74 = arith.divf %72, %73 : vector<24x1xf32>
    %75 = vector.broadcast %74 : vector<24x1xf32> to vector<24x32xf32>
    %76 = arith.subf %65, %75 : vector<24x32xf32>
    %77 = arith.mulf %76, %76 : vector<24x32xf32>
    %cst_47 = arith.constant dense<0.000000e+00> : vector<24xf32>
    %78 = vector.multi_reduction <add>, %77, %cst_47 [1] : vector<24x32xf32> to vector<24xf32>
    %79 = vector.shape_cast %78 : vector<24xf32> to vector<24x1xf32>
    %cst_48 = arith.constant 3.200000e+01 : f32
    %80 = vector.broadcast %cst_48 : f32 to vector<24x1xf32>
    %81 = arith.divf %79, %80 : vector<24x1xf32>
    %cst_49 = arith.constant 9.99999974E-6 : f32
    %82 = vector.broadcast %cst_49 : f32 to vector<24x1xf32>
    %83 = arith.addf %81, %82 : vector<24x1xf32>
    %84 = math.rsqrt %83 : vector<24x1xf32>
    %85 = vector.broadcast %84 : vector<24x1xf32> to vector<24x32xf32>
    %86 = arith.mulf %76, %85 : vector<24x32xf32>
    %87 = vector.broadcast %68 : vector<1x32xf32> to vector<24x32xf32>
    %88 = arith.mulf %86, %87 : vector<24x32xf32>
    %89 = vector.broadcast %70 : vector<1x32xf32> to vector<24x32xf32>
    %90 = arith.addf %88, %89 : vector<24x32xf32>
    %c0_50 = arith.constant 0 : index
    %c0_51 = arith.constant 0 : index
    %c0_52 = arith.constant 0 : index
    %91 = vector.load %arg11[%c0_50, %c0_51, %c0_52] : memref<2x32x96xbf16, #tpu.memory_space<vmem>>, vector<1x32x96xbf16>
    %92 = vector.shape_cast %91 : vector<1x32x96xbf16> to vector<32x96xbf16>
    %c0_53 = arith.constant 0 : index
    %c0_54 = arith.constant 0 : index
    %c0_55 = arith.constant 0 : index
    %93 = vector.load %arg12[%c0_53, %c0_54, %c0_55] : memref<2x1x96xf32, #tpu.memory_space<vmem>>, vector<1x1x96xf32>
    %94 = vector.shape_cast %93 : vector<1x1x96xf32> to vector<1x96xf32>
    %95 = arith.truncf %90 : vector<24x32xf32> to vector<24x32xbf16>
    %cst_56 = arith.constant dense<0.000000e+00> : vector<24x96xf32>
    %96 = tpu.matmul %95, %92, %cst_56 {dimension_numbers = #tpu.dot_dimension_numbers<[1], [0], [0], [1], [0, 0, 1, 1], [], []>} : vector<24x32xbf16>, vector<32x96xbf16>, vector<24x96xf32> -> vector<24x96xf32>
    %97 = vector.broadcast %94 : vector<1x96xf32> to vector<24x96xf32>
    %98 = arith.addf %96, %97 : vector<24x96xf32>
    %99 = arith.truncf %98 : vector<24x96xf32> to vector<24x96xbf16>
    %100 = vector.extract_strided_slice %99 {offsets = [0, 0], sizes = [24, 8], strides = [1, 1]} : vector<24x96xbf16> to vector<24x8xbf16>
    %101 = vector.extract_strided_slice %99 {offsets = [0, 32], sizes = [24, 8], strides = [1, 1]} : vector<24x96xbf16> to vector<24x8xbf16>
    %102 = vector.extract_strided_slice %99 {offsets = [0, 64], sizes = [24, 8], strides = [1, 1]} : vector<24x96xbf16> to vector<24x8xbf16>
    %cst_57 = arith.constant dense<0.000000e+00> : vector<24x24xf32>
    %103 = tpu.matmul %100, %101, %cst_57 {dimension_numbers = #tpu.dot_dimension_numbers<[1], [1], [0], [0], [0, 0, 1, 0], [], []>} : vector<24x8xbf16>, vector<24x8xbf16>, vector<24x24xf32> -> vector<24x24xf32>
    %cst_58 = arith.constant 0.353553385 : f32
    %104 = vector.broadcast %cst_58 : f32 to vector<24x24xf32>
    %105 = arith.mulf %103, %104 : vector<24x24xf32>
    %106 = arith.addf %105, %66 : vector<24x24xf32>
    %cst_59 = arith.constant dense<0xFF800000> : vector<24xf32>
    %107 = vector.multi_reduction <maximumf>, %106, %cst_59 [1] : vector<24x24xf32> to vector<24xf32>
    %108 = vector.shape_cast %107 : vector<24xf32> to vector<24x1xf32>
    %109 = vector.broadcast %108 : vector<24x1xf32> to vector<24x24xf32>
    %110 = arith.subf %106, %109 : vector<24x24xf32>
    %111 = math.exp %110 : vector<24x24xf32>
    %cst_60 = arith.constant dense<0.000000e+00> : vector<24xf32>
    %112 = vector.multi_reduction <add>, %111, %cst_60 [1] : vector<24x24xf32> to vector<24xf32>
    %113 = vector.shape_cast %112 : vector<24xf32> to vector<24x1xf32>
    %114 = tpu.reciprocal %113 {approx = true} : vector<24x1xf32> -> vector<24x1xf32>
    %115 = vector.broadcast %114 : vector<24x1xf32> to vector<24x24xf32>
    %116 = arith.mulf %111, %115 : vector<24x24xf32>
    %117 = arith.truncf %116 : vector<24x24xf32> to vector<24x24xbf16>
    %cst_61 = arith.constant dense<0.000000e+00> : vector<24x8xf32>
    %118 = tpu.matmul %117, %102, %cst_61 {dimension_numbers = #tpu.dot_dimension_numbers<[1], [0], [0], [1], [0, 0, 1, 1], [], []>} : vector<24x24xbf16>, vector<24x8xbf16>, vector<24x8xf32> -> vector<24x8xf32>
    %119 = vector.extract_strided_slice %99 {offsets = [0, 8], sizes = [24, 8], strides = [1, 1]} : vector<24x96xbf16> to vector<24x8xbf16>
    %120 = vector.extract_strided_slice %99 {offsets = [0, 40], sizes = [24, 8], strides = [1, 1]} : vector<24x96xbf16> to vector<24x8xbf16>
    %121 = vector.extract_strided_slice %99 {offsets = [0, 72], sizes = [24, 8], strides = [1, 1]} : vector<24x96xbf16> to vector<24x8xbf16>
    %cst_62 = arith.constant dense<0.000000e+00> : vector<24x24xf32>
    %122 = tpu.matmul %119, %120, %cst_62 {dimension_numbers = #tpu.dot_dimension_numbers<[1], [1], [0], [0], [0, 0, 1, 0], [], []>} : vector<24x8xbf16>, vector<24x8xbf16>, vector<24x24xf32> -> vector<24x24xf32>
    %cst_63 = arith.constant 0.353553385 : f32
    %123 = vector.broadcast %cst_63 : f32 to vector<24x24xf32>
    %124 = arith.mulf %122, %123 : vector<24x24xf32>
    %125 = arith.addf %124, %66 : vector<24x24xf32>
    %cst_64 = arith.constant dense<0xFF800000> : vector<24xf32>
    %126 = vector.multi_reduction <maximumf>, %125, %cst_64 [1] : vector<24x24xf32> to vector<24xf32>
    %127 = vector.shape_cast %126 : vector<24xf32> to vector<24x1xf32>
    %128 = vector.broadcast %127 : vector<24x1xf32> to vector<24x24xf32>
    %129 = arith.subf %125, %128 : vector<24x24xf32>
    %130 = math.exp %129 : vector<24x24xf32>
    %cst_65 = arith.constant dense<0.000000e+00> : vector<24xf32>
    %131 = vector.multi_reduction <add>, %130, %cst_65 [1] : vector<24x24xf32> to vector<24xf32>
    %132 = vector.shape_cast %131 : vector<24xf32> to vector<24x1xf32>
    %133 = tpu.reciprocal %132 {approx = true} : vector<24x1xf32> -> vector<24x1xf32>
    %134 = vector.broadcast %133 : vector<24x1xf32> to vector<24x24xf32>
    %135 = arith.mulf %130, %134 : vector<24x24xf32>
    %136 = arith.truncf %135 : vector<24x24xf32> to vector<24x24xbf16>
    %cst_66 = arith.constant dense<0.000000e+00> : vector<24x8xf32>
    %137 = tpu.matmul %136, %121, %cst_66 {dimension_numbers = #tpu.dot_dimension_numbers<[1], [0], [0], [1], [0, 0, 1, 1], [], []>} : vector<24x24xbf16>, vector<24x8xbf16>, vector<24x8xf32> -> vector<24x8xf32>
    %138 = vector.extract_strided_slice %99 {offsets = [0, 16], sizes = [24, 8], strides = [1, 1]} : vector<24x96xbf16> to vector<24x8xbf16>
    %139 = vector.extract_strided_slice %99 {offsets = [0, 48], sizes = [24, 8], strides = [1, 1]} : vector<24x96xbf16> to vector<24x8xbf16>
    %140 = vector.extract_strided_slice %99 {offsets = [0, 80], sizes = [24, 8], strides = [1, 1]} : vector<24x96xbf16> to vector<24x8xbf16>
    %cst_67 = arith.constant dense<0.000000e+00> : vector<24x24xf32>
    %141 = tpu.matmul %138, %139, %cst_67 {dimension_numbers = #tpu.dot_dimension_numbers<[1], [1], [0], [0], [0, 0, 1, 0], [], []>} : vector<24x8xbf16>, vector<24x8xbf16>, vector<24x24xf32> -> vector<24x24xf32>
    %cst_68 = arith.constant 0.353553385 : f32
    %142 = vector.broadcast %cst_68 : f32 to vector<24x24xf32>
    %143 = arith.mulf %141, %142 : vector<24x24xf32>
    %144 = arith.addf %143, %66 : vector<24x24xf32>
    %cst_69 = arith.constant dense<0xFF800000> : vector<24xf32>
    %145 = vector.multi_reduction <maximumf>, %144, %cst_69 [1] : vector<24x24xf32> to vector<24xf32>
    %146 = vector.shape_cast %145 : vector<24xf32> to vector<24x1xf32>
    %147 = vector.broadcast %146 : vector<24x1xf32> to vector<24x24xf32>
    %148 = arith.subf %144, %147 : vector<24x24xf32>
    %149 = math.exp %148 : vector<24x24xf32>
    %cst_70 = arith.constant dense<0.000000e+00> : vector<24xf32>
    %150 = vector.multi_reduction <add>, %149, %cst_70 [1] : vector<24x24xf32> to vector<24xf32>
    %151 = vector.shape_cast %150 : vector<24xf32> to vector<24x1xf32>
    %152 = tpu.reciprocal %151 {approx = true} : vector<24x1xf32> -> vector<24x1xf32>
    %153 = vector.broadcast %152 : vector<24x1xf32> to vector<24x24xf32>
    %154 = arith.mulf %149, %153 : vector<24x24xf32>
    %155 = arith.truncf %154 : vector<24x24xf32> to vector<24x24xbf16>
    %cst_71 = arith.constant dense<0.000000e+00> : vector<24x8xf32>
    %156 = tpu.matmul %155, %140, %cst_71 {dimension_numbers = #tpu.dot_dimension_numbers<[1], [0], [0], [1], [0, 0, 1, 1], [], []>} : vector<24x24xbf16>, vector<24x8xbf16>, vector<24x8xf32> -> vector<24x8xf32>
    %157 = vector.extract_strided_slice %99 {offsets = [0, 24], sizes = [24, 8], strides = [1, 1]} : vector<24x96xbf16> to vector<24x8xbf16>
    %158 = vector.extract_strided_slice %99 {offsets = [0, 56], sizes = [24, 8], strides = [1, 1]} : vector<24x96xbf16> to vector<24x8xbf16>
    %159 = vector.extract_strided_slice %99 {offsets = [0, 88], sizes = [24, 8], strides = [1, 1]} : vector<24x96xbf16> to vector<24x8xbf16>
    %cst_72 = arith.constant dense<0.000000e+00> : vector<24x24xf32>
    %160 = tpu.matmul %157, %158, %cst_72 {dimension_numbers = #tpu.dot_dimension_numbers<[1], [1], [0], [0], [0, 0, 1, 0], [], []>} : vector<24x8xbf16>, vector<24x8xbf16>, vector<24x24xf32> -> vector<24x24xf32>
    %cst_73 = arith.constant 0.353553385 : f32
    %161 = vector.broadcast %cst_73 : f32 to vector<24x24xf32>
    %162 = arith.mulf %160, %161 : vector<24x24xf32>
    %163 = arith.addf %162, %66 : vector<24x24xf32>
    %cst_74 = arith.constant dense<0xFF800000> : vector<24xf32>
    %164 = vector.multi_reduction <maximumf>, %163, %cst_74 [1] : vector<24x24xf32> to vector<24xf32>
    %165 = vector.shape_cast %164 : vector<24xf32> to vector<24x1xf32>
    %166 = vector.broadcast %165 : vector<24x1xf32> to vector<24x24xf32>
    %167 = arith.subf %163, %166 : vector<24x24xf32>
    %168 = math.exp %167 : vector<24x24xf32>
    %cst_75 = arith.constant dense<0.000000e+00> : vector<24xf32>
    %169 = vector.multi_reduction <add>, %168, %cst_75 [1] : vector<24x24xf32> to vector<24xf32>
    %170 = vector.shape_cast %169 : vector<24xf32> to vector<24x1xf32>
    %171 = tpu.reciprocal %170 {approx = true} : vector<24x1xf32> -> vector<24x1xf32>
    %172 = vector.broadcast %171 : vector<24x1xf32> to vector<24x24xf32>
    %173 = arith.mulf %168, %172 : vector<24x24xf32>
    %174 = arith.truncf %173 : vector<24x24xf32> to vector<24x24xbf16>
    %cst_76 = arith.constant dense<0.000000e+00> : vector<24x8xf32>
    %175 = tpu.matmul %174, %159, %cst_76 {dimension_numbers = #tpu.dot_dimension_numbers<[1], [0], [0], [1], [0, 0, 1, 1], [], []>} : vector<24x24xbf16>, vector<24x8xbf16>, vector<24x8xf32> -> vector<24x8xf32>
    %176 = tpu.concatenate %118, %137, %156, %175 in 1 : vector<24x8xf32>, vector<24x8xf32>, vector<24x8xf32>, vector<24x8xf32> -> vector<24x32xf32>
    %c0_77 = arith.constant 0 : index
    %c0_78 = arith.constant 0 : index
    %c0_79 = arith.constant 0 : index
    %177 = vector.load %arg13[%c0_77, %c0_78, %c0_79] : memref<2x32x32xbf16, #tpu.memory_space<vmem>>, vector<1x32x32xbf16>
    %178 = vector.shape_cast %177 : vector<1x32x32xbf16> to vector<32x32xbf16>
    %c0_80 = arith.constant 0 : index
    %c0_81 = arith.constant 0 : index
    %c0_82 = arith.constant 0 : index
    %179 = vector.load %arg14[%c0_80, %c0_81, %c0_82] : memref<2x1x32xf32, #tpu.memory_space<vmem>>, vector<1x1x32xf32>
    %180 = vector.shape_cast %179 : vector<1x1x32xf32> to vector<1x32xf32>
    %181 = arith.truncf %176 : vector<24x32xf32> to vector<24x32xbf16>
    %cst_83 = arith.constant dense<0.000000e+00> : vector<24x32xf32>
    %182 = tpu.matmul %181, %178, %cst_83 {dimension_numbers = #tpu.dot_dimension_numbers<[1], [0], [0], [1], [0, 0, 1, 1], [], []>} : vector<24x32xbf16>, vector<32x32xbf16>, vector<24x32xf32> -> vector<24x32xf32>
    %183 = vector.broadcast %180 : vector<1x32xf32> to vector<24x32xf32>
    %184 = arith.addf %182, %183 : vector<24x32xf32>
    %185 = arith.addf %65, %184 : vector<24x32xf32>
    %c0_84 = arith.constant 0 : index
    %c0_85 = arith.constant 0 : index
    %c0_86 = arith.constant 0 : index
    %186 = vector.load %arg15[%c0_84, %c0_85, %c0_86] : memref<2x1x32xf32, #tpu.memory_space<vmem>>, vector<1x1x32xf32>
    %187 = vector.shape_cast %186 : vector<1x1x32xf32> to vector<1x32xf32>
    %c0_87 = arith.constant 0 : index
    %c0_88 = arith.constant 0 : index
    %c0_89 = arith.constant 0 : index
    %188 = vector.load %arg16[%c0_87, %c0_88, %c0_89] : memref<2x1x32xf32, #tpu.memory_space<vmem>>, vector<1x1x32xf32>
    %189 = vector.shape_cast %188 : vector<1x1x32xf32> to vector<1x32xf32>
    %cst_90 = arith.constant dense<0.000000e+00> : vector<24xf32>
    %190 = vector.multi_reduction <add>, %185, %cst_90 [1] : vector<24x32xf32> to vector<24xf32>
    %191 = vector.shape_cast %190 : vector<24xf32> to vector<24x1xf32>
    %cst_91 = arith.constant 3.200000e+01 : f32
    %192 = vector.broadcast %cst_91 : f32 to vector<24x1xf32>
    %193 = arith.divf %191, %192 : vector<24x1xf32>
    %194 = vector.broadcast %193 : vector<24x1xf32> to vector<24x32xf32>
    %195 = arith.subf %185, %194 : vector<24x32xf32>
    %196 = arith.mulf %195, %195 : vector<24x32xf32>
    %cst_92 = arith.constant dense<0.000000e+00> : vector<24xf32>
    %197 = vector.multi_reduction <add>, %196, %cst_92 [1] : vector<24x32xf32> to vector<24xf32>
    %198 = vector.shape_cast %197 : vector<24xf32> to vector<24x1xf32>
    %cst_93 = arith.constant 3.200000e+01 : f32
    %199 = vector.broadcast %cst_93 : f32 to vector<24x1xf32>
    %200 = arith.divf %198, %199 : vector<24x1xf32>
    %cst_94 = arith.constant 9.99999974E-6 : f32
    %201 = vector.broadcast %cst_94 : f32 to vector<24x1xf32>
    %202 = arith.addf %200, %201 : vector<24x1xf32>
    %203 = math.rsqrt %202 : vector<24x1xf32>
    %204 = vector.broadcast %203 : vector<24x1xf32> to vector<24x32xf32>
    %205 = arith.mulf %195, %204 : vector<24x32xf32>
    %206 = vector.broadcast %187 : vector<1x32xf32> to vector<24x32xf32>
    %207 = arith.mulf %205, %206 : vector<24x32xf32>
    %208 = vector.broadcast %189 : vector<1x32xf32> to vector<24x32xf32>
    %209 = arith.addf %207, %208 : vector<24x32xf32>
    %c0_95 = arith.constant 0 : index
    %c0_96 = arith.constant 0 : index
    %c0_97 = arith.constant 0 : index
    %210 = vector.load %arg17[%c0_95, %c0_96, %c0_97] : memref<2x32x128xbf16, #tpu.memory_space<vmem>>, vector<1x32x128xbf16>
    %211 = vector.shape_cast %210 : vector<1x32x128xbf16> to vector<32x128xbf16>
    %c0_98 = arith.constant 0 : index
    %c0_99 = arith.constant 0 : index
    %c0_100 = arith.constant 0 : index
    %212 = vector.load %arg18[%c0_98, %c0_99, %c0_100] : memref<2x1x128xf32, #tpu.memory_space<vmem>>, vector<1x1x128xf32>
    %213 = vector.shape_cast %212 : vector<1x1x128xf32> to vector<1x128xf32>
    %214 = arith.truncf %209 : vector<24x32xf32> to vector<24x32xbf16>
    %cst_101 = arith.constant dense<0.000000e+00> : vector<24x128xf32>
    %215 = tpu.matmul %214, %211, %cst_101 {dimension_numbers = #tpu.dot_dimension_numbers<[1], [0], [0], [1], [0, 0, 1, 1], [], []>} : vector<24x32xbf16>, vector<32x128xbf16>, vector<24x128xf32> -> vector<24x128xf32>
    %216 = vector.broadcast %213 : vector<1x128xf32> to vector<24x128xf32>
    %217 = arith.addf %215, %216 : vector<24x128xf32>
    %cst_102 = arith.constant 5.000000e-01 : f32
    %218 = vector.broadcast %cst_102 : f32 to vector<24x128xf32>
    %219 = arith.mulf %218, %217 : vector<24x128xf32>
    %cst_103 = arith.constant 4.471500e-02 : f32
    %220 = vector.broadcast %cst_103 : f32 to vector<24x128xf32>
    %221 = arith.mulf %220, %217 : vector<24x128xf32>
    %222 = arith.mulf %221, %217 : vector<24x128xf32>
    %223 = arith.mulf %222, %217 : vector<24x128xf32>
    %224 = arith.addf %217, %223 : vector<24x128xf32>
    %cst_104 = arith.constant 0.797884583 : f32
    %225 = vector.broadcast %cst_104 : f32 to vector<24x128xf32>
    %226 = arith.mulf %225, %224 : vector<24x128xf32>
    %227 = math.tanh %226 : vector<24x128xf32>
    %cst_105 = arith.constant 1.000000e+00 : f32
    %228 = vector.broadcast %cst_105 : f32 to vector<24x128xf32>
    %229 = arith.addf %228, %227 : vector<24x128xf32>
    %230 = arith.mulf %219, %229 : vector<24x128xf32>
    %c0_106 = arith.constant 0 : index
    %c0_107 = arith.constant 0 : index
    %c0_108 = arith.constant 0 : index
    %231 = vector.load %arg19[%c0_106, %c0_107, %c0_108] : memref<2x128x32xbf16, #tpu.memory_space<vmem>>, vector<1x128x32xbf16>
    %232 = vector.shape_cast %231 : vector<1x128x32xbf16> to vector<128x32xbf16>
    %c0_109 = arith.constant 0 : index
    %c0_110 = arith.constant 0 : index
    %c0_111 = arith.constant 0 : index
    %233 = vector.load %arg20[%c0_109, %c0_110, %c0_111] : memref<2x1x32xf32, #tpu.memory_space<vmem>>, vector<1x1x32xf32>
    %234 = vector.shape_cast %233 : vector<1x1x32xf32> to vector<1x32xf32>
    %235 = arith.truncf %230 : vector<24x128xf32> to vector<24x128xbf16>
    %cst_112 = arith.constant dense<0.000000e+00> : vector<24x32xf32>
    %236 = tpu.matmul %235, %232, %cst_112 {dimension_numbers = #tpu.dot_dimension_numbers<[1], [0], [0], [1], [0, 0, 1, 1], [], []>} : vector<24x128xbf16>, vector<128x32xbf16>, vector<24x32xf32> -> vector<24x32xf32>
    %237 = vector.broadcast %234 : vector<1x32xf32> to vector<24x32xf32>
    %238 = arith.addf %236, %237 : vector<24x32xf32>
    %239 = arith.addf %185, %238 : vector<24x32xf32>
    %c1_113 = arith.constant 1 : index
    %c0_114 = arith.constant 0 : index
    %c0_115 = arith.constant 0 : index
    %240 = vector.load %arg9[%c1_113, %c0_114, %c0_115] : memref<2x1x32xf32, #tpu.memory_space<vmem>>, vector<1x1x32xf32>
    %241 = vector.shape_cast %240 : vector<1x1x32xf32> to vector<1x32xf32>
    %c1_116 = arith.constant 1 : index
    %c0_117 = arith.constant 0 : index
    %c0_118 = arith.constant 0 : index
    %242 = vector.load %arg10[%c1_116, %c0_117, %c0_118] : memref<2x1x32xf32, #tpu.memory_space<vmem>>, vector<1x1x32xf32>
    %243 = vector.shape_cast %242 : vector<1x1x32xf32> to vector<1x32xf32>
    %cst_119 = arith.constant dense<0.000000e+00> : vector<24xf32>
    %244 = vector.multi_reduction <add>, %239, %cst_119 [1] : vector<24x32xf32> to vector<24xf32>
    %245 = vector.shape_cast %244 : vector<24xf32> to vector<24x1xf32>
    %cst_120 = arith.constant 3.200000e+01 : f32
    %246 = vector.broadcast %cst_120 : f32 to vector<24x1xf32>
    %247 = arith.divf %245, %246 : vector<24x1xf32>
    %248 = vector.broadcast %247 : vector<24x1xf32> to vector<24x32xf32>
    %249 = arith.subf %239, %248 : vector<24x32xf32>
    %250 = arith.mulf %249, %249 : vector<24x32xf32>
    %cst_121 = arith.constant dense<0.000000e+00> : vector<24xf32>
    %251 = vector.multi_reduction <add>, %250, %cst_121 [1] : vector<24x32xf32> to vector<24xf32>
    %252 = vector.shape_cast %251 : vector<24xf32> to vector<24x1xf32>
    %cst_122 = arith.constant 3.200000e+01 : f32
    %253 = vector.broadcast %cst_122 : f32 to vector<24x1xf32>
    %254 = arith.divf %252, %253 : vector<24x1xf32>
    %cst_123 = arith.constant 9.99999974E-6 : f32
    %255 = vector.broadcast %cst_123 : f32 to vector<24x1xf32>
    %256 = arith.addf %254, %255 : vector<24x1xf32>
    %257 = math.rsqrt %256 : vector<24x1xf32>
    %258 = vector.broadcast %257 : vector<24x1xf32> to vector<24x32xf32>
    %259 = arith.mulf %249, %258 : vector<24x32xf32>
    %260 = vector.broadcast %241 : vector<1x32xf32> to vector<24x32xf32>
    %261 = arith.mulf %259, %260 : vector<24x32xf32>
    %262 = vector.broadcast %243 : vector<1x32xf32> to vector<24x32xf32>
    %263 = arith.addf %261, %262 : vector<24x32xf32>
    %c1_124 = arith.constant 1 : index
    %c0_125 = arith.constant 0 : index
    %c0_126 = arith.constant 0 : index
    %264 = vector.load %arg11[%c1_124, %c0_125, %c0_126] : memref<2x32x96xbf16, #tpu.memory_space<vmem>>, vector<1x32x96xbf16>
    %265 = vector.shape_cast %264 : vector<1x32x96xbf16> to vector<32x96xbf16>
    %c1_127 = arith.constant 1 : index
    %c0_128 = arith.constant 0 : index
    %c0_129 = arith.constant 0 : index
    %266 = vector.load %arg12[%c1_127, %c0_128, %c0_129] : memref<2x1x96xf32, #tpu.memory_space<vmem>>, vector<1x1x96xf32>
    %267 = vector.shape_cast %266 : vector<1x1x96xf32> to vector<1x96xf32>
    %268 = arith.truncf %263 : vector<24x32xf32> to vector<24x32xbf16>
    %cst_130 = arith.constant dense<0.000000e+00> : vector<24x96xf32>
    %269 = tpu.matmul %268, %265, %cst_130 {dimension_numbers = #tpu.dot_dimension_numbers<[1], [0], [0], [1], [0, 0, 1, 1], [], []>} : vector<24x32xbf16>, vector<32x96xbf16>, vector<24x96xf32> -> vector<24x96xf32>
    %270 = vector.broadcast %267 : vector<1x96xf32> to vector<24x96xf32>
    %271 = arith.addf %269, %270 : vector<24x96xf32>
    %272 = arith.truncf %271 : vector<24x96xf32> to vector<24x96xbf16>
    %273 = vector.extract_strided_slice %272 {offsets = [0, 0], sizes = [24, 8], strides = [1, 1]} : vector<24x96xbf16> to vector<24x8xbf16>
    %274 = vector.extract_strided_slice %272 {offsets = [0, 32], sizes = [24, 8], strides = [1, 1]} : vector<24x96xbf16> to vector<24x8xbf16>
    %275 = vector.extract_strided_slice %272 {offsets = [0, 64], sizes = [24, 8], strides = [1, 1]} : vector<24x96xbf16> to vector<24x8xbf16>
    %cst_131 = arith.constant dense<0.000000e+00> : vector<24x24xf32>
    %276 = tpu.matmul %273, %274, %cst_131 {dimension_numbers = #tpu.dot_dimension_numbers<[1], [1], [0], [0], [0, 0, 1, 0], [], []>} : vector<24x8xbf16>, vector<24x8xbf16>, vector<24x24xf32> -> vector<24x24xf32>
    %cst_132 = arith.constant 0.353553385 : f32
    %277 = vector.broadcast %cst_132 : f32 to vector<24x24xf32>
    %278 = arith.mulf %276, %277 : vector<24x24xf32>
    %279 = arith.addf %278, %66 : vector<24x24xf32>
    %cst_133 = arith.constant dense<0xFF800000> : vector<24xf32>
    %280 = vector.multi_reduction <maximumf>, %279, %cst_133 [1] : vector<24x24xf32> to vector<24xf32>
    %281 = vector.shape_cast %280 : vector<24xf32> to vector<24x1xf32>
    %282 = vector.broadcast %281 : vector<24x1xf32> to vector<24x24xf32>
    %283 = arith.subf %279, %282 : vector<24x24xf32>
    %284 = math.exp %283 : vector<24x24xf32>
    %cst_134 = arith.constant dense<0.000000e+00> : vector<24xf32>
    %285 = vector.multi_reduction <add>, %284, %cst_134 [1] : vector<24x24xf32> to vector<24xf32>
    %286 = vector.shape_cast %285 : vector<24xf32> to vector<24x1xf32>
    %287 = tpu.reciprocal %286 {approx = true} : vector<24x1xf32> -> vector<24x1xf32>
    %288 = vector.broadcast %287 : vector<24x1xf32> to vector<24x24xf32>
    %289 = arith.mulf %284, %288 : vector<24x24xf32>
    %290 = arith.truncf %289 : vector<24x24xf32> to vector<24x24xbf16>
    %cst_135 = arith.constant dense<0.000000e+00> : vector<24x8xf32>
    %291 = tpu.matmul %290, %275, %cst_135 {dimension_numbers = #tpu.dot_dimension_numbers<[1], [0], [0], [1], [0, 0, 1, 1], [], []>} : vector<24x24xbf16>, vector<24x8xbf16>, vector<24x8xf32> -> vector<24x8xf32>
    %292 = vector.extract_strided_slice %272 {offsets = [0, 8], sizes = [24, 8], strides = [1, 1]} : vector<24x96xbf16> to vector<24x8xbf16>
    %293 = vector.extract_strided_slice %272 {offsets = [0, 40], sizes = [24, 8], strides = [1, 1]} : vector<24x96xbf16> to vector<24x8xbf16>
    %294 = vector.extract_strided_slice %272 {offsets = [0, 72], sizes = [24, 8], strides = [1, 1]} : vector<24x96xbf16> to vector<24x8xbf16>
    %cst_136 = arith.constant dense<0.000000e+00> : vector<24x24xf32>
    %295 = tpu.matmul %292, %293, %cst_136 {dimension_numbers = #tpu.dot_dimension_numbers<[1], [1], [0], [0], [0, 0, 1, 0], [], []>} : vector<24x8xbf16>, vector<24x8xbf16>, vector<24x24xf32> -> vector<24x24xf32>
    %cst_137 = arith.constant 0.353553385 : f32
    %296 = vector.broadcast %cst_137 : f32 to vector<24x24xf32>
    %297 = arith.mulf %295, %296 : vector<24x24xf32>
    %298 = arith.addf %297, %66 : vector<24x24xf32>
    %cst_138 = arith.constant dense<0xFF800000> : vector<24xf32>
    %299 = vector.multi_reduction <maximumf>, %298, %cst_138 [1] : vector<24x24xf32> to vector<24xf32>
    %300 = vector.shape_cast %299 : vector<24xf32> to vector<24x1xf32>
    %301 = vector.broadcast %300 : vector<24x1xf32> to vector<24x24xf32>
    %302 = arith.subf %298, %301 : vector<24x24xf32>
    %303 = math.exp %302 : vector<24x24xf32>
    %cst_139 = arith.constant dense<0.000000e+00> : vector<24xf32>
    %304 = vector.multi_reduction <add>, %303, %cst_139 [1] : vector<24x24xf32> to vector<24xf32>
    %305 = vector.shape_cast %304 : vector<24xf32> to vector<24x1xf32>
    %306 = tpu.reciprocal %305 {approx = true} : vector<24x1xf32> -> vector<24x1xf32>
    %307 = vector.broadcast %306 : vector<24x1xf32> to vector<24x24xf32>
    %308 = arith.mulf %303, %307 : vector<24x24xf32>
    %309 = arith.truncf %308 : vector<24x24xf32> to vector<24x24xbf16>
    %cst_140 = arith.constant dense<0.000000e+00> : vector<24x8xf32>
    %310 = tpu.matmul %309, %294, %cst_140 {dimension_numbers = #tpu.dot_dimension_numbers<[1], [0], [0], [1], [0, 0, 1, 1], [], []>} : vector<24x24xbf16>, vector<24x8xbf16>, vector<24x8xf32> -> vector<24x8xf32>
    %311 = vector.extract_strided_slice %272 {offsets = [0, 16], sizes = [24, 8], strides = [1, 1]} : vector<24x96xbf16> to vector<24x8xbf16>
    %312 = vector.extract_strided_slice %272 {offsets = [0, 48], sizes = [24, 8], strides = [1, 1]} : vector<24x96xbf16> to vector<24x8xbf16>
    %313 = vector.extract_strided_slice %272 {offsets = [0, 80], sizes = [24, 8], strides = [1, 1]} : vector<24x96xbf16> to vector<24x8xbf16>
    %cst_141 = arith.constant dense<0.000000e+00> : vector<24x24xf32>
    %314 = tpu.matmul %311, %312, %cst_141 {dimension_numbers = #tpu.dot_dimension_numbers<[1], [1], [0], [0], [0, 0, 1, 0], [], []>} : vector<24x8xbf16>, vector<24x8xbf16>, vector<24x24xf32> -> vector<24x24xf32>
    %cst_142 = arith.constant 0.353553385 : f32
    %315 = vector.broadcast %cst_142 : f32 to vector<24x24xf32>
    %316 = arith.mulf %314, %315 : vector<24x24xf32>
    %317 = arith.addf %316, %66 : vector<24x24xf32>
    %cst_143 = arith.constant dense<0xFF800000> : vector<24xf32>
    %318 = vector.multi_reduction <maximumf>, %317, %cst_143 [1] : vector<24x24xf32> to vector<24xf32>
    %319 = vector.shape_cast %318 : vector<24xf32> to vector<24x1xf32>
    %320 = vector.broadcast %319 : vector<24x1xf32> to vector<24x24xf32>
    %321 = arith.subf %317, %320 : vector<24x24xf32>
    %322 = math.exp %321 : vector<24x24xf32>
    %cst_144 = arith.constant dense<0.000000e+00> : vector<24xf32>
    %323 = vector.multi_reduction <add>, %322, %cst_144 [1] : vector<24x24xf32> to vector<24xf32>
    %324 = vector.shape_cast %323 : vector<24xf32> to vector<24x1xf32>
    %325 = tpu.reciprocal %324 {approx = true} : vector<24x1xf32> -> vector<24x1xf32>
    %326 = vector.broadcast %325 : vector<24x1xf32> to vector<24x24xf32>
    %327 = arith.mulf %322, %326 : vector<24x24xf32>
    %328 = arith.truncf %327 : vector<24x24xf32> to vector<24x24xbf16>
    %cst_145 = arith.constant dense<0.000000e+00> : vector<24x8xf32>
    %329 = tpu.matmul %328, %313, %cst_145 {dimension_numbers = #tpu.dot_dimension_numbers<[1], [0], [0], [1], [0, 0, 1, 1], [], []>} : vector<24x24xbf16>, vector<24x8xbf16>, vector<24x8xf32> -> vector<24x8xf32>
    %330 = vector.extract_strided_slice %272 {offsets = [0, 24], sizes = [24, 8], strides = [1, 1]} : vector<24x96xbf16> to vector<24x8xbf16>
    %331 = vector.extract_strided_slice %272 {offsets = [0, 56], sizes = [24, 8], strides = [1, 1]} : vector<24x96xbf16> to vector<24x8xbf16>
    %332 = vector.extract_strided_slice %272 {offsets = [0, 88], sizes = [24, 8], strides = [1, 1]} : vector<24x96xbf16> to vector<24x8xbf16>
    %cst_146 = arith.constant dense<0.000000e+00> : vector<24x24xf32>
    %333 = tpu.matmul %330, %331, %cst_146 {dimension_numbers = #tpu.dot_dimension_numbers<[1], [1], [0], [0], [0, 0, 1, 0], [], []>} : vector<24x8xbf16>, vector<24x8xbf16>, vector<24x24xf32> -> vector<24x24xf32>
    %cst_147 = arith.constant 0.353553385 : f32
    %334 = vector.broadcast %cst_147 : f32 to vector<24x24xf32>
    %335 = arith.mulf %333, %334 : vector<24x24xf32>
    %336 = arith.addf %335, %66 : vector<24x24xf32>
    %cst_148 = arith.constant dense<0xFF800000> : vector<24xf32>
    %337 = vector.multi_reduction <maximumf>, %336, %cst_148 [1] : vector<24x24xf32> to vector<24xf32>
    %338 = vector.shape_cast %337 : vector<24xf32> to vector<24x1xf32>
    %339 = vector.broadcast %338 : vector<24x1xf32> to vector<24x24xf32>
    %340 = arith.subf %336, %339 : vector<24x24xf32>
    %341 = math.exp %340 : vector<24x24xf32>
    %cst_149 = arith.constant dense<0.000000e+00> : vector<24xf32>
    %342 = vector.multi_reduction <add>, %341, %cst_149 [1] : vector<24x24xf32> to vector<24xf32>
    %343 = vector.shape_cast %342 : vector<24xf32> to vector<24x1xf32>
    %344 = tpu.reciprocal %343 {approx = true} : vector<24x1xf32> -> vector<24x1xf32>
    %345 = vector.broadcast %344 : vector<24x1xf32> to vector<24x24xf32>
    %346 = arith.mulf %341, %345 : vector<24x24xf32>
    %347 = arith.truncf %346 : vector<24x24xf32> to vector<24x24xbf16>
    %cst_150 = arith.constant dense<0.000000e+00> : vector<24x8xf32>
    %348 = tpu.matmul %347, %332, %cst_150 {dimension_numbers = #tpu.dot_dimension_numbers<[1], [0], [0], [1], [0, 0, 1, 1], [], []>} : vector<24x24xbf16>, vector<24x8xbf16>, vector<24x8xf32> -> vector<24x8xf32>
    %349 = tpu.concatenate %291, %310, %329, %348 in 1 : vector<24x8xf32>, vector<24x8xf32>, vector<24x8xf32>, vector<24x8xf32> -> vector<24x32xf32>
    %c1_151 = arith.constant 1 : index
    %c0_152 = arith.constant 0 : index
    %c0_153 = arith.constant 0 : index
    %350 = vector.load %arg13[%c1_151, %c0_152, %c0_153] : memref<2x32x32xbf16, #tpu.memory_space<vmem>>, vector<1x32x32xbf16>
    %351 = vector.shape_cast %350 : vector<1x32x32xbf16> to vector<32x32xbf16>
    %c1_154 = arith.constant 1 : index
    %c0_155 = arith.constant 0 : index
    %c0_156 = arith.constant 0 : index
    %352 = vector.load %arg14[%c1_154, %c0_155, %c0_156] : memref<2x1x32xf32, #tpu.memory_space<vmem>>, vector<1x1x32xf32>
    %353 = vector.shape_cast %352 : vector<1x1x32xf32> to vector<1x32xf32>
    %354 = arith.truncf %349 : vector<24x32xf32> to vector<24x32xbf16>
    %cst_157 = arith.constant dense<0.000000e+00> : vector<24x32xf32>
    %355 = tpu.matmul %354, %351, %cst_157 {dimension_numbers = #tpu.dot_dimension_numbers<[1], [0], [0], [1], [0, 0, 1, 1], [], []>} : vector<24x32xbf16>, vector<32x32xbf16>, vector<24x32xf32> -> vector<24x32xf32>
    %356 = vector.broadcast %353 : vector<1x32xf32> to vector<24x32xf32>
    %357 = arith.addf %355, %356 : vector<24x32xf32>
    %358 = arith.addf %239, %357 : vector<24x32xf32>
    %c1_158 = arith.constant 1 : index
    %c0_159 = arith.constant 0 : index
    %c0_160 = arith.constant 0 : index
    %359 = vector.load %arg15[%c1_158, %c0_159, %c0_160] : memref<2x1x32xf32, #tpu.memory_space<vmem>>, vector<1x1x32xf32>
    %360 = vector.shape_cast %359 : vector<1x1x32xf32> to vector<1x32xf32>
    %c1_161 = arith.constant 1 : index
    %c0_162 = arith.constant 0 : index
    %c0_163 = arith.constant 0 : index
    %361 = vector.load %arg16[%c1_161, %c0_162, %c0_163] : memref<2x1x32xf32, #tpu.memory_space<vmem>>, vector<1x1x32xf32>
    %362 = vector.shape_cast %361 : vector<1x1x32xf32> to vector<1x32xf32>
    %cst_164 = arith.constant dense<0.000000e+00> : vector<24xf32>
    %363 = vector.multi_reduction <add>, %358, %cst_164 [1] : vector<24x32xf32> to vector<24xf32>
    %364 = vector.shape_cast %363 : vector<24xf32> to vector<24x1xf32>
    %cst_165 = arith.constant 3.200000e+01 : f32
    %365 = vector.broadcast %cst_165 : f32 to vector<24x1xf32>
    %366 = arith.divf %364, %365 : vector<24x1xf32>
    %367 = vector.broadcast %366 : vector<24x1xf32> to vector<24x32xf32>
    %368 = arith.subf %358, %367 : vector<24x32xf32>
    %369 = arith.mulf %368, %368 : vector<24x32xf32>
    %cst_166 = arith.constant dense<0.000000e+00> : vector<24xf32>
    %370 = vector.multi_reduction <add>, %369, %cst_166 [1] : vector<24x32xf32> to vector<24xf32>
    %371 = vector.shape_cast %370 : vector<24xf32> to vector<24x1xf32>
    %cst_167 = arith.constant 3.200000e+01 : f32
    %372 = vector.broadcast %cst_167 : f32 to vector<24x1xf32>
    %373 = arith.divf %371, %372 : vector<24x1xf32>
    %cst_168 = arith.constant 9.99999974E-6 : f32
    %374 = vector.broadcast %cst_168 : f32 to vector<24x1xf32>
    %375 = arith.addf %373, %374 : vector<24x1xf32>
    %376 = math.rsqrt %375 : vector<24x1xf32>
    %377 = vector.broadcast %376 : vector<24x1xf32> to vector<24x32xf32>
    %378 = arith.mulf %368, %377 : vector<24x32xf32>
    %379 = vector.broadcast %360 : vector<1x32xf32> to vector<24x32xf32>
    %380 = arith.mulf %378, %379 : vector<24x32xf32>
    %381 = vector.broadcast %362 : vector<1x32xf32> to vector<24x32xf32>
    %382 = arith.addf %380, %381 : vector<24x32xf32>
    %c1_169 = arith.constant 1 : index
    %c0_170 = arith.constant 0 : index
    %c0_171 = arith.constant 0 : index
    %383 = vector.load %arg17[%c1_169, %c0_170, %c0_171] : memref<2x32x128xbf16, #tpu.memory_space<vmem>>, vector<1x32x128xbf16>
    %384 = vector.shape_cast %383 : vector<1x32x128xbf16> to vector<32x128xbf16>
    %c1_172 = arith.constant 1 : index
    %c0_173 = arith.constant 0 : index
    %c0_174 = arith.constant 0 : index
    %385 = vector.load %arg18[%c1_172, %c0_173, %c0_174] : memref<2x1x128xf32, #tpu.memory_space<vmem>>, vector<1x1x128xf32>
    %386 = vector.shape_cast %385 : vector<1x1x128xf32> to vector<1x128xf32>
    %387 = arith.truncf %382 : vector<24x32xf32> to vector<24x32xbf16>
    %cst_175 = arith.constant dense<0.000000e+00> : vector<24x128xf32>
    %388 = tpu.matmul %387, %384, %cst_175 {dimension_numbers = #tpu.dot_dimension_numbers<[1], [0], [0], [1], [0, 0, 1, 1], [], []>} : vector<24x32xbf16>, vector<32x128xbf16>, vector<24x128xf32> -> vector<24x128xf32>
    %389 = vector.broadcast %386 : vector<1x128xf32> to vector<24x128xf32>
    %390 = arith.addf %388, %389 : vector<24x128xf32>
    %cst_176 = arith.constant 5.000000e-01 : f32
    %391 = vector.broadcast %cst_176 : f32 to vector<24x128xf32>
    %392 = arith.mulf %391, %390 : vector<24x128xf32>
    %cst_177 = arith.constant 4.471500e-02 : f32
    %393 = vector.broadcast %cst_177 : f32 to vector<24x128xf32>
    %394 = arith.mulf %393, %390 : vector<24x128xf32>
    %395 = arith.mulf %394, %390 : vector<24x128xf32>
    %396 = arith.mulf %395, %390 : vector<24x128xf32>
    %397 = arith.addf %390, %396 : vector<24x128xf32>
    %cst_178 = arith.constant 0.797884583 : f32
    %398 = vector.broadcast %cst_178 : f32 to vector<24x128xf32>
    %399 = arith.mulf %398, %397 : vector<24x128xf32>
    %400 = math.tanh %399 : vector<24x128xf32>
    %cst_179 = arith.constant 1.000000e+00 : f32
    %401 = vector.broadcast %cst_179 : f32 to vector<24x128xf32>
    %402 = arith.addf %401, %400 : vector<24x128xf32>
    %403 = arith.mulf %392, %402 : vector<24x128xf32>
    %c1_180 = arith.constant 1 : index
    %c0_181 = arith.constant 0 : index
    %c0_182 = arith.constant 0 : index
    %404 = vector.load %arg19[%c1_180, %c0_181, %c0_182] : memref<2x128x32xbf16, #tpu.memory_space<vmem>>, vector<1x128x32xbf16>
    %405 = vector.shape_cast %404 : vector<1x128x32xbf16> to vector<128x32xbf16>
    %c1_183 = arith.constant 1 : index
    %c0_184 = arith.constant 0 : index
    %c0_185 = arith.constant 0 : index
    %406 = vector.load %arg20[%c1_183, %c0_184, %c0_185] : memref<2x1x32xf32, #tpu.memory_space<vmem>>, vector<1x1x32xf32>
    %407 = vector.shape_cast %406 : vector<1x1x32xf32> to vector<1x32xf32>
    %408 = arith.truncf %403 : vector<24x128xf32> to vector<24x128xbf16>
    %cst_186 = arith.constant dense<0.000000e+00> : vector<24x32xf32>
    %409 = tpu.matmul %408, %405, %cst_186 {dimension_numbers = #tpu.dot_dimension_numbers<[1], [0], [0], [1], [0, 0, 1, 1], [], []>} : vector<24x128xbf16>, vector<128x32xbf16>, vector<24x32xf32> -> vector<24x32xf32>
    %410 = vector.broadcast %407 : vector<1x32xf32> to vector<24x32xf32>
    %411 = arith.addf %409, %410 : vector<24x32xf32>
    %412 = arith.addf %358, %411 : vector<24x32xf32>
    %c0_187 = arith.constant 0 : index
    %c0_188 = arith.constant 0 : index
    %413 = vector.load %arg21[%c0_187, %c0_188] : memref<1x32xf32, #tpu.memory_space<vmem>>, vector<1x32xf32>
    %c0_189 = arith.constant 0 : index
    %c0_190 = arith.constant 0 : index
    %414 = vector.load %arg22[%c0_189, %c0_190] : memref<1x32xf32, #tpu.memory_space<vmem>>, vector<1x32xf32>
    %cst_191 = arith.constant dense<0.000000e+00> : vector<24xf32>
    %415 = vector.multi_reduction <add>, %412, %cst_191 [1] : vector<24x32xf32> to vector<24xf32>
    %416 = vector.shape_cast %415 : vector<24xf32> to vector<24x1xf32>
    %cst_192 = arith.constant 3.200000e+01 : f32
    %417 = vector.broadcast %cst_192 : f32 to vector<24x1xf32>
    %418 = arith.divf %416, %417 : vector<24x1xf32>
    %419 = vector.broadcast %418 : vector<24x1xf32> to vector<24x32xf32>
    %420 = arith.subf %412, %419 : vector<24x32xf32>
    %421 = arith.mulf %420, %420 : vector<24x32xf32>
    %cst_193 = arith.constant dense<0.000000e+00> : vector<24xf32>
    %422 = vector.multi_reduction <add>, %421, %cst_193 [1] : vector<24x32xf32> to vector<24xf32>
    %423 = vector.shape_cast %422 : vector<24xf32> to vector<24x1xf32>
    %cst_194 = arith.constant 3.200000e+01 : f32
    %424 = vector.broadcast %cst_194 : f32 to vector<24x1xf32>
    %425 = arith.divf %423, %424 : vector<24x1xf32>
    %cst_195 = arith.constant 9.99999974E-6 : f32
    %426 = vector.broadcast %cst_195 : f32 to vector<24x1xf32>
    %427 = arith.addf %425, %426 : vector<24x1xf32>
    %428 = math.rsqrt %427 : vector<24x1xf32>
    %429 = vector.broadcast %428 : vector<24x1xf32> to vector<24x32xf32>
    %430 = arith.mulf %420, %429 : vector<24x32xf32>
    %431 = vector.broadcast %413 : vector<1x32xf32> to vector<24x32xf32>
    %432 = arith.mulf %430, %431 : vector<24x32xf32>
    %433 = vector.broadcast %414 : vector<1x32xf32> to vector<24x32xf32>
    %434 = arith.addf %432, %433 : vector<24x32xf32>
    %435 = arith.truncf %434 : vector<24x32xf32> to vector<24x32xbf16>
    %c0_196 = arith.constant 0 : index
    %c0_197 = arith.constant 0 : index
    %436 = vector.load %arg23[%c0_196, %c0_197] : memref<128x32xbf16, #tpu.memory_space<vmem>>, vector<128x32xbf16>
    %cst_198 = arith.constant dense<0.000000e+00> : vector<24x128xf32>
    %437 = tpu.matmul %435, %436, %cst_198 {dimension_numbers = #tpu.dot_dimension_numbers<[1], [1], [0], [0], [0, 0, 1, 0], [], []>} : vector<24x32xbf16>, vector<128x32xbf16>, vector<24x128xf32> -> vector<24x128xf32>
    %c0_199 = arith.constant 0 : index
    %c0_200 = arith.constant 0 : index
    %438 = vector.load %arg24[%c0_199, %c0_200] : memref<24x128xf32, #tpu.memory_space<vmem>>, vector<24x128xf32>
    tpu.vector_store %arg24[%c0_199, %c0_200], %437 {strides = array<i32>} : memref<24x128xf32, #tpu.memory_space<vmem>>, vector<24x128xf32>,
    return
  }
}

</mosaic_0001>

<llo_original>
// kernel: clip_caption_forward.1
$region0: #{clip_caption_forward.1}
  #allocation0 [shape = 'u32[]', space=smem, size = 0x4, offset = 0x4, fixed_abs, tag = 'smem constant byte address 0x4 - core index']
  #allocation1 [shape = 'u32[144,128]{1,0:T(1,128)}', space=vmem, size = 0x12000, scoped, tag = 'internal scratch']
  %s0 = inlined_call_operand.vmem [shape: s32[16,1], index: 0, kind: input, shape index: {}]
  %s1 = inlined_call_operand.vmem [shape: f32[2,16], index: 1, kind: input, shape index: {}]
  %s2 = inlined_call_operand.vmem [shape: f32[128,32], index: 2, kind: input, shape index: {}]
  %s3 = inlined_call_operand.vmem [shape: f32[12,32], index: 3, kind: input, shape index: {}]
  %s4 = inlined_call_operand.vmem [shape: f32[24,24], index: 4, kind: input, shape index: {}]
  %s5 = inlined_call_operand.vmem [shape: bf16[16,64], index: 5, kind: input, shape index: {}]
  %s6 = inlined_call_operand.vmem [shape: f32[1,64], index: 6, kind: input, shape index: {}]
  %s7 = inlined_call_operand.vmem [shape: bf16[4,64,32], index: 7, kind: input, shape index: {}]
  %s8 = inlined_call_operand.vmem [shape: f32[4,1,32], index: 8, kind: input, shape index: {}]
  %s9 = inlined_call_operand.vmem [shape: f32[2,1,32], index: 9, kind: input, shape index: {}]
  %s10 = inlined_call_operand.vmem [shape: f32[2,1,32], index: 10, kind: input, shape index: {}]
  %s11 = inlined_call_operand.vmem [shape: bf16[2,32,96], index: 11, kind: input, shape index: {}]
  %s12 = inlined_call_operand.vmem [shape: f32[2,1,96], index: 12, kind: input, shape index: {}]
  %s13 = inlined_call_operand.vmem [shape: bf16[2,32,32], index: 13, kind: input, shape index: {}]
  %s14 = inlined_call_operand.vmem [shape: f32[2,1,32], index: 14, kind: input, shape index: {}]
  %s15 = inlined_call_operand.vmem [shape: f32[2,1,32], index: 15, kind: input, shape index: {}]
  %s16 = inlined_call_operand.vmem [shape: f32[2,1,32], index: 16, kind: input, shape index: {}]
  %s17 = inlined_call_operand.vmem [shape: bf16[2,32,128], index: 17, kind: input, shape index: {}]
  %s18 = inlined_call_operand.vmem [shape: f32[2,1,128], index: 18, kind: input, shape index: {}]
  %s19 = inlined_call_operand.vmem [shape: bf16[2,128,32], index: 19, kind: input, shape index: {}]
  %s20 = inlined_call_operand.vmem [shape: f32[2,1,32], index: 20, kind: input, shape index: {}]
  %s21 = inlined_call_operand.vmem [shape: f32[1,32], index: 21, kind: input, shape index: {}]
  %s22 = inlined_call_operand.vmem [shape: f32[1,32], index: 22, kind: input, shape index: {}]
  %s23 = inlined_call_operand.vmem [shape: bf16[128,32], index: 23, kind: input, shape index: {}]
  %s24 = inlined_call_operand.vmem [shape: f32[24,128], index: 24, kind: output, shape index: {}]
  %s25 = sld [smem:[#allocation0]]
  $region106: #{clip_caption_forward.1} parent=0
    _
  %s27 = ssub.s32 1, %s25
  %s28 = scalar_select 0, %s27, %s25
  // Predicated region
  $region2: #{clip_caption_forward.1} parent=0 // pred_check
    _
  $region3: #{clip_caption_forward.1} parent=0 // pred_check_branch
    %30 = sbr.rel (0) target = $region5
  $region4: #{clip_caption_forward.1} parent=0 // pred_region
    _
  $region5: #{clip_caption_forward.1} parent=0 // pred_fallthru
    _
  // Predicated region
  $region6: #{clip_caption_forward.1} parent=0 // pred_check
    _
  $region7: #{clip_caption_forward.1} parent=0 // pred_check_branch
    %32 = sbr.rel (0) target = $region9
  $region8: #{clip_caption_forward.1} parent=0 // pred_region
    _
  $region9: #{clip_caption_forward.1} parent=0 // pred_fallthru
    _
  // Predicated region
  $region10: #{clip_caption_forward.1} parent=0 // pred_check
    _
  $region11: #{clip_caption_forward.1} parent=0 // pred_check_branch
    %34 = sbr.rel (0) target = $region13
  $region12: #{clip_caption_forward.1} parent=0 // pred_region
    _
  $region13: #{clip_caption_forward.1} parent=0 // pred_fallthru
    _
  // Predicated region
  $region14: #{clip_caption_forward.1} parent=0 // pred_check
    _
  $region15: #{clip_caption_forward.1} parent=0 // pred_check_branch
    %36 = sbr.rel (0) target = $region17
  $region16: #{clip_caption_forward.1} parent=0 // pred_region
    _
  $region17: #{clip_caption_forward.1} parent=0 // pred_fallthru
    _
  // Predicated region
  $region18: #{clip_caption_forward.1} parent=0 // pred_check
    _
  $region19: #{clip_caption_forward.1} parent=0 // pred_check_branch
    %38 = sbr.rel (0) target = $region21
  $region20: #{clip_caption_forward.1} parent=0 // pred_region
    _
  $region21: #{clip_caption_forward.1} parent=0 // pred_fallthru
    _
  // Predicated region
  $region22: #{clip_caption_forward.1} parent=0 // pred_check
    _
  $region23: #{clip_caption_forward.1} parent=0 // pred_check_branch
    %40 = sbr.rel (0) target = $region25
  $region24: #{clip_caption_forward.1} parent=0 // pred_region
    _
  $region25: #{clip_caption_forward.1} parent=0 // pred_fallthru
    _
  // Predicated region
  $region26: #{clip_caption_forward.1} parent=0 // pred_check
    _
  $region27: #{clip_caption_forward.1} parent=0 // pred_check_branch
    %42 = sbr.rel (0) target = $region29
  $region28: #{clip_caption_forward.1} parent=0 // pred_region
    _
  $region29: #{clip_caption_forward.1} parent=0 // pred_fallthru
    _
  // Predicated region
  $region30: #{clip_caption_forward.1} parent=0 // pred_check
    _
  $region31: #{clip_caption_forward.1} parent=0 // pred_check_branch
    %44 = sbr.rel (0) target = $region33
  $region32: #{clip_caption_forward.1} parent=0 // pred_region
    _
  $region33: #{clip_caption_forward.1} parent=0 // pred_fallthru
    _
  // Predicated region
  $region34: #{clip_caption_forward.1} parent=0 // pred_check
    _
  $region35: #{clip_caption_forward.1} parent=0 // pred_check_branch
    %46 = sbr.rel (0) target = $region37
  $region36: #{clip_caption_forward.1} parent=0 // pred_region
    _
  $region37: #{clip_caption_forward.1} parent=0 // pred_fallthru
    _
  // Predicated region
  $region38: #{clip_caption_forward.1} parent=0 // pred_check
    _
  $region39: #{clip_caption_forward.1} parent=0 // pred_check_branch
    %48 = sbr.rel (0) target = $region41
  $region40: #{clip_caption_forward.1} parent=0 // pred_region
    _
  $region41: #{clip_caption_forward.1} parent=0 // pred_fallthru
    _
  // Predicated region
  $region42: #{clip_caption_forward.1} parent=0 // pred_check
    _
  $region43: #{clip_caption_forward.1} parent=0 // pred_check_branch
    %50 = sbr.rel (0) target = $region45
  $region44: #{clip_caption_forward.1} parent=0 // pred_region
    _
  $region45: #{clip_caption_forward.1} parent=0 // pred_fallthru
    _
  // Predicated region
  $region46: #{clip_caption_forward.1} parent=0 // pred_check
    _
  $region47: #{clip_caption_forward.1} parent=0 // pred_check_branch
    %52 = sbr.rel (0) target = $region49
  $region48: #{clip_caption_forward.1} parent=0 // pred_region
    _
  $region49: #{clip_caption_forward.1} parent=0 // pred_fallthru
    _
  // Predicated region
  $region50: #{clip_caption_forward.1} parent=0 // pred_check
    _
  $region51: #{clip_caption_forward.1} parent=0 // pred_check_branch
    %54 = sbr.rel (0) target = $region53
  $region52: #{clip_caption_forward.1} parent=0 // pred_region
    _
  $region53: #{clip_caption_forward.1} parent=0 // pred_fallthru
    _
  // Predicated region
  $region54: #{clip_caption_forward.1} parent=0 // pred_check
    _
  $region55: #{clip_caption_forward.1} parent=0 // pred_check_branch
    %56 = sbr.rel (0) target = $region57
  $region56: #{clip_caption_forward.1} parent=0 // pred_region
    _
  $region57: #{clip_caption_forward.1} parent=0 // pred_fallthru
    _
  // Predicated region
  $region58: #{clip_caption_forward.1} parent=0 // pred_check
    _
  $region59: #{clip_caption_forward.1} parent=0 // pred_check_branch
    %58 = sbr.rel (0) target = $region61
  $region60: #{clip_caption_forward.1} parent=0 // pred_region
    _
  $region61: #{clip_caption_forward.1} parent=0 // pred_fallthru
    _
  // Predicated region
  $region62: #{clip_caption_forward.1} parent=0 // pred_check
    _
  $region63: #{clip_caption_forward.1} parent=0 // pred_check_branch
    %60 = sbr.rel (0) target = $region65
  $region64: #{clip_caption_forward.1} parent=0 // pred_region
    _
  $region65: #{clip_caption_forward.1} parent=0 // pred_fallthru
    _
  // Predicated region
  $region66: #{clip_caption_forward.1} parent=0 // pred_check
    _
  $region67: #{clip_caption_forward.1} parent=0 // pred_check_branch
    %62 = sbr.rel (0) target = $region69
  $region68: #{clip_caption_forward.1} parent=0 // pred_region
    _
  $region69: #{clip_caption_forward.1} parent=0 // pred_fallthru
    _
  // Predicated region
  $region70: #{clip_caption_forward.1} parent=0 // pred_check
    _
  $region71: #{clip_caption_forward.1} parent=0 // pred_check_branch
    %64 = sbr.rel (0) target = $region73
  $region72: #{clip_caption_forward.1} parent=0 // pred_region
    _
  $region73: #{clip_caption_forward.1} parent=0 // pred_fallthru
    _
  // Predicated region
  $region74: #{clip_caption_forward.1} parent=0 // pred_check
    _
  $region75: #{clip_caption_forward.1} parent=0 // pred_check_branch
    %66 = sbr.rel (0) target = $region77
  $region76: #{clip_caption_forward.1} parent=0 // pred_region
    _
  $region77: #{clip_caption_forward.1} parent=0 // pred_fallthru
    _
  // Predicated region
  $region78: #{clip_caption_forward.1} parent=0 // pred_check
    _
  $region79: #{clip_caption_forward.1} parent=0 // pred_check_branch
    %68 = sbr.rel (0) target = $region81
  $region80: #{clip_caption_forward.1} parent=0 // pred_region
    _
  $region81: #{clip_caption_forward.1} parent=0 // pred_fallthru
    _
  // Predicated region
  $region82: #{clip_caption_forward.1} parent=0 // pred_check
    _
  $region83: #{clip_caption_forward.1} parent=0 // pred_check_branch
    %70 = sbr.rel (0) target = $region85
  $region84: #{clip_caption_forward.1} parent=0 // pred_region
    _
  $region85: #{clip_caption_forward.1} parent=0 // pred_fallthru
    _
  // Predicated region
  $region86: #{clip_caption_forward.1} parent=0 // pred_check
    _
  $region87: #{clip_caption_forward.1} parent=0 // pred_check_branch
    %72 = sbr.rel (0) target = $region89
  $region88: #{clip_caption_forward.1} parent=0 // pred_region
    _
  $region89: #{clip_caption_forward.1} parent=0 // pred_fallthru
    _
  // Predicated region
  $region90: #{clip_caption_forward.1} parent=0 // pred_check
    _
  $region91: #{clip_caption_forward.1} parent=0 // pred_check_branch
    %74 = sbr.rel (0) target = $region93
  $region92: #{clip_caption_forward.1} parent=0 // pred_region
    _
  $region93: #{clip_caption_forward.1} parent=0 // pred_fallthru
    _
  // Predicated region
  $region94: #{clip_caption_forward.1} parent=0 // pred_check
    _
  $region95: #{clip_caption_forward.1} parent=0 // pred_check_branch
    %76 = sbr.rel (0) target = $region97
  $region96: #{clip_caption_forward.1} parent=0 // pred_region
    _
  $region97: #{clip_caption_forward.1} parent=0 // pred_fallthru
    _
  %v78 = vld [vmem:[%s0] sm:$0xff]
  %v79 = vld [vmem:[%s0 + $0x8] sm:$0xff]
  %v80 = vlaneseq
  %v81 = vand.u32 %v80, 127
  %82 = vset.pattern.permute.xlu0 0
  %83 = vperm.xlu0 %82, %v78
  %v84 = vpop.permute.xlu0 %83
  %85 = vset.pattern.permute.xlu0 0
  %86 = vperm.xlu0 %85, %v79
  %v87 = vpop.permute.xlu0 %86
  %vm88 = vcmp.eq.s32.totalorder %v84, %v81
  %vm89 = vcmp.eq.s32.totalorder %v87, %v81
  %v90 = vsel %vm88, 1, 0
  %v91 = vsel %vm89, 1, 0
  %v92 = vcvt.s32.f32 %v90
  %v93 = vcvt.s32.f32 %v91
  %v94 = vld [vmem:[%s2] sm:$0xff]
  %v95 = vld [vmem:[%s2 + $0x8] sm:$0xff]
  %v96 = vld [vmem:[%s2 + $0x10] sm:$0xff]
  %v97 = vld [vmem:[%s2 + $0x18] sm:$0xff]
  %v98 = vld [vmem:[%s2 + $0x20] sm:$0xff]
  %v99 = vld [vmem:[%s2 + $0x28] sm:$0xff]
  %v100 = vld [vmem:[%s2 + $0x30] sm:$0xff]
  %v101 = vld [vmem:[%s2 + $0x38] sm:$0xff]
  %v102 = vld [vmem:[%s2 + $0x40] sm:$0xff]
  %v103 = vld [vmem:[%s2 + $0x48] sm:$0xff]
  %v104 = vld [vmem:[%s2 + $0x50] sm:$0xff]
  %v105 = vld [vmem:[%s2 + $0x58] sm:$0xff]
  %v106 = vld [vmem:[%s2 + $0x60] sm:$0xff]
  %v107 = vld [vmem:[%s2 + $0x68] sm:$0xff]
  %v108 = vld [vmem:[%s2 + $0x70] sm:$0xff]
  %v109 = vld [vmem:[%s2 + $0x78] sm:$0xff]
  %110 = vmatprep.subr.mxu0 0.0
  %111 = vmatpush1.msra.mxu0 %v94
  %112 = vmatprep.subr.mxu0 0.0
  %113 = vmatpush1.msra.mxu0 %v95
  %114 = vmatprep.subr.mxu0 0.0
  %115 = vmatpush1.msra.mxu0 %v96
  %116 = vmatprep.subr.mxu0 0.0
  %117 = vmatpush1.msra.mxu0 %v97
  %118 = vmatprep.subr.mxu0 0.0
  %119 = vmatpush1.msra.mxu0 %v98
  %120 = vmatprep.subr.mxu0 0.0
  %121 = vmatpush1.msra.mxu0 %v99
  %122 = vmatprep.subr.mxu0 0.0
  %123 = vmatpush1.msra.mxu0 %v100
  %124 = vmatprep.subr.mxu0 0.0
  %125 = vmatpush1.msra.mxu0 %v101
  %126 = vmatprep.subr.mxu0 0.0
  %127 = vmatpush1.msra.mxu0 %v102
  %128 = vmatprep.subr.mxu0 0.0
  %129 = vmatpush1.msra.mxu0 %v103
  %130 = vmatprep.subr.mxu0 0.0
  %131 = vmatpush1.msra.mxu0 %v104
  %132 = vmatprep.subr.mxu0 0.0
  %133 = vmatpush1.msra.mxu0 %v105
  %134 = vmatprep.subr.mxu0 0.0
  %135 = vmatpush1.msra.mxu0 %v106
  %136 = vmatprep.subr.mxu0 0.0
  %137 = vmatpush1.msra.mxu0 %v107
  %138 = vmatprep.subr.mxu0 0.0
  %139 = vmatpush1.msra.mxu0 %v108
  %140 = vmatprep.subr.mxu0 0.0
  %141 = vmatpush1.msra.mxu0 %v109
  %142 = vmatprep.subr.mxu0 0.0
  %143 = vmatpush1.msra.mxu0 0.0
  %144 = vmatprep.subr.mxu0 0.0
  %145 = vmatpush1.msra.mxu0 0.0
  %146 = vmatprep.subr.mxu0 0.0
  %147 = vmatpush1.msra.mxu0 0.0
  %148 = vmatprep.subr.mxu0 0.0
  %149 = vmatpush1.msra.mxu0 0.0
  %150 = vmatprep.subr.mxu0 0.0
  %151 = vmatpush1.msra.mxu0 0.0
  %152 = vmatprep.subr.mxu0 0.0
  %153 = vmatpush1.msra.mxu0 0.0
  %154 = vmatprep.subr.mxu0 0.0
  %155 = vmatpush1.msra.mxu0 0.0
  %156 = vmatprep.subr.mxu0 0.0
  %157 = vmatpush1.msra.mxu0 0.0
  %158 = vmatprep.subr.mxu0 0.0
  %159 = vmatpush1.msra.mxu0 0.0
  %160 = vmatprep.subr.mxu0 0.0
  %161 = vmatpush1.msra.mxu0 0.0
  %162 = vmatprep.subr.mxu0 0.0
  %163 = vmatpush1.msra.mxu0 0.0
  %164 = vmatprep.subr.mxu0 0.0
  %165 = vmatpush1.msra.mxu0 0.0
  %166 = vmatprep.subr.mxu0 0.0
  %167 = vmatpush1.msra.mxu0 0.0
  %168 = vmatprep.subr.mxu0 0.0
  %169 = vmatpush1.msra.mxu0 0.0
  %170 = vmatprep.subr.mxu0 0.0
  %171 = vmatpush1.msra.mxu0 0.0
  %172 = vmatprep.subr.mxu0 0.0
  %173 = vmatpush1.msra.mxu0 0.0
  %174 = vmatprep.mubr.f32.mxu0 0.0
  %175 = vmatmul.mubr.f32.gmra.mrb[0].mxu0 %v92
  %v176 = vpop.f32.mrb[0].mxu0
  %v177 = vadd.f32 0.0, %v176
  %v178 = vpop.f32.mrb[0].mxu0
  %179 = vmatprep.mubr.f32.mxu0 0.0
  %180 = vmatmul.mubr.f32.gmra.mrb[0].mxu0 %v93
  %v181 = vpop.f32.mrb[0].mxu0
  %v182 = vadd.f32 0.0, %v181
  %v183 = vpop.f32.mrb[0].mxu0
  %184 = vdwg.mxu0
  %v185 = vld [vmem:[%s1] sm:$0x3]
  %v186 = vld [vmem:[%s5] sm:$0xf]
  %v187 = vld [vmem:[%s5 + $0x4] sm:$0xf]
  %v188 = vld [vmem:[%s6] sm:$0x1]
  %v189 = vpack.c.bf16 %v185, %v185
  %v191 = vlaneseq
  %v192 = vshrl.u32 %v191, 7
  %v193 = vsub.s32 0, %v192
  %v194 = vrot.slane %v188, %v193
  %v198 = vunpack.c.l.b16 %v186
  %v199 = vunpack.c.l.b16 %v187
  %v200 = vpack.c.b16 %v199, %v198
  %vm202 = vcmask 130048
  %v204 = vsel %vm202, %v189, 0
  %206 = vmatprep.subr.bf16.mxu0 0
  %207 = vmatpush1.bf16.msra.mxu0 %v200
  %208 = vmatprep.subr.bf16.mxu0 0
  %209 = vmatpush1.bf16.msra.mxu0 0
  %210 = vmatprep.subr.bf16.mxu0 0
  %211 = vmatpush1.bf16.msra.mxu0 0
  %212 = vmatprep.subr.bf16.mxu0 0
  %213 = vmatpush1.bf16.msra.mxu0 0
  %214 = vmatprep.subr.bf16.mxu0 0
  %215 = vmatpush1.bf16.msra.mxu0 0
  %216 = vmatprep.subr.bf16.mxu0 0
  %217 = vmatpush1.bf16.msra.mxu0 0
  %218 = vmatprep.subr.bf16.mxu0 0
  %219 = vmatpush1.bf16.msra.mxu0 0
  %220 = vmatprep.subr.bf16.mxu0 0
  %221 = vmatpush1.bf16.msra.mxu0 0
  %222 = vmatprep.subr.bf16.mxu0 0
  %223 = vmatpush1.bf16.msra.mxu0 0
  %224 = vmatprep.subr.bf16.mxu0 0
  %225 = vmatpush1.bf16.msra.mxu0 0
  %226 = vmatprep.subr.bf16.mxu0 0
  %227 = vmatpush1.bf16.msra.mxu0 0
  %228 = vmatprep.subr.bf16.mxu0 0
  %229 = vmatpush1.bf16.msra.mxu0 0
  %230 = vmatprep.subr.bf16.mxu0 0
  %231 = vmatpush1.bf16.msra.mxu0 0
  %232 = vmatprep.subr.bf16.mxu0 0
  %233 = vmatpush1.bf16.msra.mxu0 0
  %234 = vmatprep.subr.bf16.mxu0 0
  %235 = vmatpush1.bf16.msra.mxu0 0
  %236 = vmatprep.subr.bf16.mxu0 0
  %237 = vmatpush1.bf16.msra.mxu0 0
  %238 = vmatprep.mubr.bf16.mxu0 0
  %239 = vmatmul.mubr.bf16.gmra.mrb[0].mxu0 %v204
  %v240 = vpop.f32.mrb[0].mxu0
  %v241 = vadd.f32 %v194, %v240
  %v242 = vpop.f32.mrb[0].mxu0
  %v243 = vpop.f32.mrb[0].mxu0
  %v244 = vpop.f32.mrb[0].mxu0
  %245 = vdwg.mxu0
  %v246 = vtanh.pop %v241
  %v247 = vld [vmem:[%s7] sm:$0xf]
  %v248 = vld [vmem:[%s7 + $0x4] sm:$0xf]
  %v249 = vld [vmem:[%s7 + $0x8] sm:$0xf]
  %v250 = vld [vmem:[%s7 + $0xc] sm:$0xf]
  %v251 = vld [vmem:[%s7 + $0x10] sm:$0xf]
  %v252 = vld [vmem:[%s7 + $0x14] sm:$0xf]
  %v253 = vld [vmem:[%s7 + $0x18] sm:$0xf]
  %v254 = vld [vmem:[%s7 + $0x1c] sm:$0xf]
  %v255 = vld [vmem:[%s8] sm:$0x1]
  %v256 = vpack.c.bf16 %v246, %v246
  %v258 = vlaneseq
  %v259 = vshrl.u32 %v258, 7
  %v260 = vsub.s32 0, %v259
  %v261 = vrot.slane %v255, %v260
  %v271 = vunpack.c.l.b16 %v247
  %v272 = vunpack.c.l.b16 %v248
  %v273 = vunpack.c.l.b16 %v249
  %v274 = vunpack.c.l.b16 %v250
  %v275 = vunpack.c.l.b16 %v251
  %v276 = vunpack.c.l.b16 %v252
  %v277 = vunpack.c.l.b16 %v253
  %v278 = vunpack.c.l.b16 %v254
  %v279 = vpack.c.b16 %v272, %v271
  %v280 = vpack.c.b16 %v274, %v273
  %v281 = vpack.c.b16 %v276, %v275
  %v282 = vpack.c.b16 %v278, %v277
  %vm287 = vcmask 523264
  %v289 = vsel %vm287, %v256, 0
  %291 = vmatprep.subr.bf16.mxu0 0
  %292 = vmatpush1.bf16.msra.mxu0 %v279
  %293 = vmatprep.subr.bf16.mxu0 0
  %294 = vmatpush1.bf16.msra.mxu0 %v280
  %295 = vmatprep.subr.bf16.mxu0 0
  %296 = vmatpush1.bf16.msra.mxu0 %v281
  %297 = vmatprep.subr.bf16.mxu0 0
  %298 = vmatpush1.bf16.msra.mxu0 %v282
  %299 = vmatprep.subr.bf16.mxu0 0
  %300 = vmatpush1.bf16.msra.mxu0 0
  %301 = vmatprep.subr.bf16.mxu0 0
  %302 = vmatpush1.bf16.msra.mxu0 0
  %303 = vmatprep.subr.bf16.mxu0 0
  %304 = vmatpush1.bf16.msra.mxu0 0
  %305 = vmatprep.subr.bf16.mxu0 0
  %306 = vmatpush1.bf16.msra.mxu0 0
  %307 = vmatprep.subr.bf16.mxu0 0
  %308 = vmatpush1.bf16.msra.mxu0 0
  %309 = vmatprep.subr.bf16.mxu0 0
  %310 = vmatpush1.bf16.msra.mxu0 0
  %311 = vmatprep.subr.bf16.mxu0 0
  %312 = vmatpush1.bf16.msra.mxu0 0
  %313 = vmatprep.subr.bf16.mxu0 0
  %314 = vmatpush1.bf16.msra.mxu0 0
  %315 = vmatprep.subr.bf16.mxu0 0
  %316 = vmatpush1.bf16.msra.mxu0 0
  %317 = vmatprep.subr.bf16.mxu0 0
  %318 = vmatpush1.bf16.msra.mxu0 0
  %319 = vmatprep.subr.bf16.mxu0 0
  %320 = vmatpush1.bf16.msra.mxu0 0
  %321 = vmatprep.subr.bf16.mxu0 0
  %322 = vmatpush1.bf16.msra.mxu0 0
  %323 = vmatprep.mubr.bf16.mxu0 0
  %324 = vmatmul.mubr.bf16.gmra.mrb[0].mxu0 %v289
  %v325 = vpop.f32.mrb[0].mxu0
  %v326 = vadd.f32 %v261, %v325
  %v327 = vpop.f32.mrb[0].mxu0
  %v328 = vpop.f32.mrb[0].mxu0
  %v329 = vpop.f32.mrb[0].mxu0
  %330 = vdwg.mxu0
  %s331 = scalar_lea.vmem %s7, 32
  %v332 = vld [vmem:[%s331] sm:$0xf]
  %v333 = vld [vmem:[%s331 + $0x4] sm:$0xf]
  %v334 = vld [vmem:[%s331 + $0x8] sm:$0xf]
  %v335 = vld [vmem:[%s331 + $0xc] sm:$0xf]
  %v336 = vld [vmem:[%s331 + $0x10] sm:$0xf]
  %v337 = vld [vmem:[%s331 + $0x14] sm:$0xf]
  %v338 = vld [vmem:[%s331 + $0x18] sm:$0xf]
  %v339 = vld [vmem:[%s331 + $0x1c] sm:$0xf]
  %s340 = scalar_lea.vmem %s8, 1
  %v341 = vld [vmem:[%s340] sm:$0x1]
  %v343 = vlaneseq
  %v344 = vshrl.u32 %v343, 7
  %v345 = vsub.s32 0, %v344
  %v346 = vrot.slane %v341, %v345
  %v356 = vunpack.c.l.b16 %v332
  %v357 = vunpack.c.l.b16 %v333
  %v358 = vunpack.c.l.b16 %v334
  %v359 = vunpack.c.l.b16 %v335
  %v360 = vunpack.c.l.b16 %v336
  %v361 = vunpack.c.l.b16 %v337
  %v362 = vunpack.c.l.b16 %v338
  %v363 = vunpack.c.l.b16 %v339
  %v364 = vpack.c.b16 %v357, %v356
  %v365 = vpack.c.b16 %v359, %v358
  %v366 = vpack.c.b16 %v361, %v360
  %v367 = vpack.c.b16 %v363, %v362
  %372 = vmatprep.subr.bf16.mxu0 0
  %373 = vmatpush1.bf16.msra.mxu0 %v364
  %374 = vmatprep.subr.bf16.mxu0 0
  %375 = vmatpush1.bf16.msra.mxu0 %v365
  %376 = vmatprep.subr.bf16.mxu0 0
  %377 = vmatpush1.bf16.msra.mxu0 %v366
  %378 = vmatprep.subr.bf16.mxu0 0
  %379 = vmatpush1.bf16.msra.mxu0 %v367
  %380 = vmatprep.subr.bf16.mxu0 0
  %381 = vmatpush1.bf16.msra.mxu0 0
  %382 = vmatprep.subr.bf16.mxu0 0
  %383 = vmatpush1.bf16.msra.mxu0 0
  %384 = vmatprep.subr.bf16.mxu0 0
  %385 = vmatpush1.bf16.msra.mxu0 0
  %386 = vmatprep.subr.bf16.mxu0 0
  %387 = vmatpush1.bf16.msra.mxu0 0
  %388 = vmatprep.subr.bf16.mxu0 0
  %389 = vmatpush1.bf16.msra.mxu0 0
  %390 = vmatprep.subr.bf16.mxu0 0
  %391 = vmatpush1.bf16.msra.mxu0 0
  %392 = vmatprep.subr.bf16.mxu0 0
  %393 = vmatpush1.bf16.msra.mxu0 0
  %394 = vmatprep.subr.bf16.mxu0 0
  %395 = vmatpush1.bf16.msra.mxu0 0
  %396 = vmatprep.subr.bf16.mxu0 0
  %397 = vmatpush1.bf16.msra.mxu0 0
  %398 = vmatprep.subr.bf16.mxu0 0
  %399 = vmatpush1.bf16.msra.mxu0 0
  %400 = vmatprep.subr.bf16.mxu0 0
  %401 = vmatpush1.bf16.msra.mxu0 0
  %402 = vmatprep.subr.bf16.mxu0 0
  %403 = vmatpush1.bf16.msra.mxu0 0
  %404 = vmatprep.mubr.bf16.mxu0 0
  %405 = vmatmul.mubr.bf16.gmra.mrb[0].mxu0 %v289
  %v406 = vpop.f32.mrb[0].mxu0
  %v407 = vadd.f32 %v346, %v406
  %v408 = vpop.f32.mrb[0].mxu0
  %v409 = vpop.f32.mrb[0].mxu0
  %v410 = vpop.f32.mrb[0].mxu0
  %411 = vdwg.mxu0
  %s412 = scalar_lea.vmem %s7, 64
  %v413 = vld [vmem:[%s412] sm:$0xf]
  %v414 = vld [vmem:[%s412 + $0x4] sm:$0xf]
  %v415 = vld [vmem:[%s412 + $0x8] sm:$0xf]
  %v416 = vld [vmem:[%s412 + $0xc] sm:$0xf]
  %v417 = vld [vmem:[%s412 + $0x10] sm:$0xf]
  %v418 = vld [vmem:[%s412 + $0x14] sm:$0xf]
  %v419 = vld [vmem:[%s412 + $0x18] sm:$0xf]
  %v420 = vld [vmem:[%s412 + $0x1c] sm:$0xf]
  %s421 = scalar_lea.vmem %s8, 2
  %v422 = vld [vmem:[%s421] sm:$0x1]
  %v424 = vlaneseq
  %v425 = vshrl.u32 %v424, 7
  %v426 = vsub.s32 0, %v425
  %v427 = vrot.slane %v422, %v426
  %v437 = vunpack.c.l.b16 %v413
  %v438 = vunpack.c.l.b16 %v414
  %v439 = vunpack.c.l.b16 %v415
  %v440 = vunpack.c.l.b16 %v416
  %v441 = vunpack.c.l.b16 %v417
  %v442 = vunpack.c.l.b16 %v418
  %v443 = vunpack.c.l.b16 %v419
  %v444 = vunpack.c.l.b16 %v420
  %v445 = vpack.c.b16 %v438, %v437
  %v446 = vpack.c.b16 %v440, %v439
  %v447 = vpack.c.b16 %v442, %v441
  %v448 = vpack.c.b16 %v444, %v443
  %453 = vmatprep.subr.bf16.mxu0 0
  %454 = vmatpush1.bf16.msra.mxu0 %v445
  %455 = vmatprep.subr.bf16.mxu0 0
  %456 = vmatpush1.bf16.msra.mxu0 %v446
  %457 = vmatprep.subr.bf16.mxu0 0
  %458 = vmatpush1.bf16.msra.mxu0 %v447
  %459 = vmatprep.subr.bf16.mxu0 0
  %460 = vmatpush1.bf16.msra.mxu0 %v448
  %461 = vmatprep.subr.bf16.mxu0 0
  %462 = vmatpush1.bf16.msra.mxu0 0
  %463 = vmatprep.subr.bf16.mxu0 0
  %464 = vmatpush1.bf16.msra.mxu0 0
  %465 = vmatprep.subr.bf16.mxu0 0
  %466 = vmatpush1.bf16.msra.mxu0 0
  %467 = vmatprep.subr.bf16.mxu0 0
  %468 = vmatpush1.bf16.msra.mxu0 0
  %469 = vmatprep.subr.bf16.mxu0 0
  %470 = vmatpush1.bf16.msra.mxu0 0
  %471 = vmatprep.subr.bf16.mxu0 0
  %472 = vmatpush1.bf16.msra.mxu0 0
  %473 = vmatprep.subr.bf16.mxu0 0
  %474 = vmatpush1.bf16.msra.mxu0 0
  %475 = vmatprep.subr.bf16.mxu0 0
  %476 = vmatpush1.bf16.msra.mxu0 0
  %477 = vmatprep.subr.bf16.mxu0 0
  %478 = vmatpush1.bf16.msra.mxu0 0
  %479 = vmatprep.subr.bf16.mxu0 0
  %480 = vmatpush1.bf16.msra.mxu0 0
  %481 = vmatprep.subr.bf16.mxu0 0
  %482 = vmatpush1.bf16.msra.mxu0 0
  %483 = vmatprep.subr.bf16.mxu0 0
  %484 = vmatpush1.bf16.msra.mxu0 0
  %485 = vmatprep.mubr.bf16.mxu0 0
  %486 = vmatmul.mubr.bf16.gmra.mrb[0].mxu0 %v289
  %v487 = vpop.f32.mrb[0].mxu0
  %v488 = vadd.f32 %v427, %v487
  %v489 = vpop.f32.mrb[0].mxu0
  %v490 = vpop.f32.mrb[0].mxu0
  %v491 = vpop.f32.mrb[0].mxu0
  %492 = vdwg.mxu0
  %s493 = scalar_lea.vmem %s7, 96
  %v494 = vld [vmem:[%s493] sm:$0xf]
  %v495 = vld [vmem:[%s493 + $0x4] sm:$0xf]
  %v496 = vld [vmem:[%s493 + $0x8] sm:$0xf]
  %v497 = vld [vmem:[%s493 + $0xc] sm:$0xf]
  %v498 = vld [vmem:[%s493 + $0x10] sm:$0xf]
  %v499 = vld [vmem:[%s493 + $0x14] sm:$0xf]
  %v500 = vld [vmem:[%s493 + $0x18] sm:$0xf]
  %v501 = vld [vmem:[%s493 + $0x1c] sm:$0xf]
  %s502 = scalar_lea.vmem %s8, 3
  %v503 = vld [vmem:[%s502] sm:$0x1]
  %v505 = vlaneseq
  %v506 = vshrl.u32 %v505, 7
  %v507 = vsub.s32 0, %v506
  %v508 = vrot.slane %v503, %v507
  %v518 = vunpack.c.l.b16 %v494
  %v519 = vunpack.c.l.b16 %v495
  %v520 = vunpack.c.l.b16 %v496
  %v521 = vunpack.c.l.b16 %v497
  %v522 = vunpack.c.l.b16 %v498
  %v523 = vunpack.c.l.b16 %v499
  %v524 = vunpack.c.l.b16 %v500
  %v525 = vunpack.c.l.b16 %v501
  %v526 = vpack.c.b16 %v519, %v518
  %v527 = vpack.c.b16 %v521, %v520
  %v528 = vpack.c.b16 %v523, %v522
  %v529 = vpack.c.b16 %v525, %v524
  %534 = vmatprep.subr.bf16.mxu0 0
  %535 = vmatpush1.bf16.msra.mxu0 %v526
  %536 = vmatprep.subr.bf16.mxu0 0
  %537 = vmatpush1.bf16.msra.mxu0 %v527
  %538 = vmatprep.subr.bf16.mxu0 0
  %539 = vmatpush1.bf16.msra.mxu0 %v528
  %540 = vmatprep.subr.bf16.mxu0 0
  %541 = vmatpush1.bf16.msra.mxu0 %v529
  %542 = vmatprep.subr.bf16.mxu0 0
  %543 = vmatpush1.bf16.msra.mxu0 0
  %544 = vmatprep.subr.bf16.mxu0 0
  %545 = vmatpush1.bf16.msra.mxu0 0
  %546 = vmatprep.subr.bf16.mxu0 0
  %547 = vmatpush1.bf16.msra.mxu0 0
  %548 = vmatprep.subr.bf16.mxu0 0
  %549 = vmatpush1.bf16.msra.mxu0 0
  %550 = vmatprep.subr.bf16.mxu0 0
  %551 = vmatpush1.bf16.msra.mxu0 0
  %552 = vmatprep.subr.bf16.mxu0 0
  %553 = vmatpush1.bf16.msra.mxu0 0
  %554 = vmatprep.subr.bf16.mxu0 0
  %555 = vmatpush1.bf16.msra.mxu0 0
  %556 = vmatprep.subr.bf16.mxu0 0
  %557 = vmatpush1.bf16.msra.mxu0 0
  %558 = vmatprep.subr.bf16.mxu0 0
  %559 = vmatpush1.bf16.msra.mxu0 0
  %560 = vmatprep.subr.bf16.mxu0 0
  %561 = vmatpush1.bf16.msra.mxu0 0
  %562 = vmatprep.subr.bf16.mxu0 0
  %563 = vmatpush1.bf16.msra.mxu0 0
  %564 = vmatprep.subr.bf16.mxu0 0
  %565 = vmatpush1.bf16.msra.mxu0 0
  %566 = vmatprep.mubr.bf16.mxu0 0
  %567 = vmatmul.mubr.bf16.gmra.mrb[0].mxu0 %v289
  %v568 = vpop.f32.mrb[0].mxu0
  %v569 = vadd.f32 %v508, %v568
  %v570 = vpop.f32.mrb[0].mxu0
  %v571 = vpop.f32.mrb[0].mxu0
  %v572 = vpop.f32.mrb[0].mxu0
  %573 = vdwg.mxu0
  %v574 = vld [vmem:[%s3] sm:$0xff]
  %v575 = vld [vmem:[%s3 + $0x8] sm:$0xf]
  %v577 = vrot.slane %v407, 7
  %v580 = vrot.slane %v488, 6
  %v583 = vrot.slane %v569, 5
  %vm585 = vcmask 1040384
  %v586 = vsel %vm585, %v326, %v577
  %vm587 = vcmask 1041408
  %v588 = vsel %vm587, %v586, %v580
  %vm589 = vcmask 1042432
  %v590 = vsel %vm589, %v588, %v583
  %v592 = vrot.slane %v177, 4
  %vm594 = vcmask 1043456
  %v595 = vsel %vm594, %v590, %v592
  %v596 = vadd.f32 %v595, %v574
  %v597 = vadd.f32 %v592, %v575
  %v599 = vrot.slane %v326, 1
  %v601 = vrot.slane %v488, 7
  %v603 = vrot.slane %v569, 6
  %v605 = vsel %vm585, %v599, %v407
  %v606 = vsel %vm587, %v605, %v601
  %v607 = vsel %vm589, %v606, %v603
  %v609 = vrot.slane %v182, 4
  %v611 = vsel %vm594, %v607, %v609
  %v612 = vadd.f32 %v611, %v574
  %v613 = vadd.f32 %v609, %v575
  %v616 = vrot.slane %v612, 4
  %v617 = vrot.slane %v613, 4
  %v618 = vsel %vm594, %v616, %v617
  %v621 = vsel %vm594, %v597, %v616
  %v622 = vld [vmem:[%s4] sm:$0xff]
  %v623 = vld [vmem:[%s4 + $0x8] sm:$0xff]
  %v624 = vld [vmem:[%s4 + $0x10] sm:$0xff]
  %v625 = vld [vmem:[%s9] sm:$0x1]
  %v626 = vld [vmem:[%s10] sm:$0x1]
  %vm627 = vcmask 261120
  %v628 = vsel %vm627, %v596, 0.0
  %629 = vadd.xlane.f32.xlu0 %v628
  %v630 = vpop.xlane.xlu0 %629
  %v631 = vsel %vm627, %v621, 0.0
  %632 = vadd.xlane.f32.xlu0 %v631
  %v633 = vpop.xlane.xlu0 %632
  %v634 = vsel %vm627, %v618, 0.0
  %635 = vadd.xlane.f32.xlu0 %v634
  %v636 = vpop.xlane.xlu0 %635
  %v637 = vrcp.pop 32.0
  %v638 = vmul.f32 %v630, %v637
  %v639 = vmul.f32 %v633, %v637
  %v640 = vmul.f32 %v636, %v637
  %v641 = vsub.f32 %v596, %v638
  %v642 = vsub.f32 %v621, %v639
  %v643 = vsub.f32 %v618, %v640
  %v644 = vmul.f32 %v641, %v641
  %v645 = vmul.f32 %v642, %v642
  %v646 = vmul.f32 %v643, %v643
  %v647 = vsel %vm627, %v644, 0.0
  %648 = vadd.xlane.f32.xlu0 %v647
  %v649 = vpop.xlane.xlu0 %648
  %v650 = vsel %vm627, %v645, 0.0
  %651 = vadd.xlane.f32.xlu0 %v650
  %v652 = vpop.xlane.xlu0 %651
  %v653 = vsel %vm627, %v646, 0.0
  %654 = vadd.xlane.f32.xlu0 %v653
  %v655 = vpop.xlane.xlu0 %654
  %v656 = vmul.f32 %v649, %v637
  %v657 = vmul.f32 %v652, %v637
  %v658 = vmul.f32 %v655, %v637
  %v659 = vadd.f32 %v656, 1e-05
  %v660 = vadd.f32 %v657, 1e-05
  %v661 = vadd.f32 %v658, 1e-05
  %v662 = vrsqrt.pop %v659
  %v663 = vrsqrt.pop %v660
  %v664 = vrsqrt.pop %v661
  %v665 = vmul.f32 %v641, %v662
  %v666 = vmul.f32 %v642, %v663
  %v667 = vmul.f32 %v643, %v664
  %v669 = vlaneseq
  %v670 = vshrl.u32 %v669, 7
  %v671 = vsub.s32 0, %v670
  %v672 = vrot.slane %v625, %v671
  %v674 = vmul.f32 %v665, %v672
  %v675 = vmul.f32 %v666, %v672
  %v676 = vmul.f32 %v667, %v672
  %v678 = vlaneseq
  %v679 = vshrl.u32 %v678, 7
  %v680 = vsub.s32 0, %v679
  %v681 = vrot.slane %v626, %v680
  %v683 = vadd.f32 %v674, %v681
  %v684 = vadd.f32 %v675, %v681
  %v685 = vadd.f32 %v676, %v681
  %v686 = vld [vmem:[%s11] sm:$0xf]
  %v687 = vld [vmem:[%s11 + $0x4] sm:$0xf]
  %v688 = vld [vmem:[%s11 + $0x8] sm:$0xf]
  %v689 = vld [vmem:[%s11 + $0xc] sm:$0xf]
  %v690 = vld [vmem:[%s12] sm:$0x1]
  %v691 = vpack.c.bf16 %v684, %v683
  %v692 = vpack.c.bf16 %v685, %v685
  %v694 = vlaneseq
  %v695 = vshrl.u32 %v694, 7
  %v696 = vsub.s32 0, %v695
  %v697 = vrot.slane %v690, %v696
  %v703 = vunpack.c.l.b16 %v686
  %v704 = vunpack.c.l.b16 %v687
  %v705 = vunpack.c.l.b16 %v688
  %v706 = vunpack.c.l.b16 %v689
  %v707 = vpack.c.b16 %v704, %v703
  %v708 = vpack.c.b16 %v706, %v705
  %v712 = vsel %vm627, %v691, 0
  %v715 = vsel %vm627, %v692, 0
  %717 = vmatprep.subr.bf16.mxu0 0
  %718 = vmatpush1.bf16.msra.mxu0 %v707
  %719 = vmatprep.subr.bf16.mxu0 0
  %720 = vmatpush1.bf16.msra.mxu0 %v708
  %721 = vmatprep.subr.bf16.mxu0 0
  %722 = vmatpush1.bf16.msra.mxu0 0
  %723 = vmatprep.subr.bf16.mxu0 0
  %724 = vmatpush1.bf16.msra.mxu0 0
  %725 = vmatprep.subr.bf16.mxu0 0
  %726 = vmatpush1.bf16.msra.mxu0 0
  %727 = vmatprep.subr.bf16.mxu0 0
  %728 = vmatpush1.bf16.msra.mxu0 0
  %729 = vmatprep.subr.bf16.mxu0 0
  %730 = vmatpush1.bf16.msra.mxu0 0
  %731 = vmatprep.subr.bf16.mxu0 0
  %732 = vmatpush1.bf16.msra.mxu0 0
  %733 = vmatprep.subr.bf16.mxu0 0
  %734 = vmatpush1.bf16.msra.mxu0 0
  %735 = vmatprep.subr.bf16.mxu0 0
  %736 = vmatpush1.bf16.msra.mxu0 0
  %737 = vmatprep.subr.bf16.mxu0 0
  %738 = vmatpush1.bf16.msra.mxu0 0
  %739 = vmatprep.subr.bf16.mxu0 0
  %740 = vmatpush1.bf16.msra.mxu0 0
  %741 = vmatprep.subr.bf16.mxu0 0
  %742 = vmatpush1.bf16.msra.mxu0 0
  %743 = vmatprep.subr.bf16.mxu0 0
  %744 = vmatpush1.bf16.msra.mxu0 0
  %745 = vmatprep.subr.bf16.mxu0 0
  %746 = vmatpush1.bf16.msra.mxu0 0
  %747 = vmatprep.subr.bf16.mxu0 0
  %748 = vmatpush1.bf16.msra.mxu0 0
  %749 = vmatprep.mubr.bf16.mxu0 0
  %750 = vmatmul.mubr.bf16.gmra.mrb[0].mxu0 %v712
  %v751 = vpop.f32.mrb[0].mxu0
  %v752 = vadd.f32 %v697, %v751
  %v753 = vpop.f32.mrb[0].mxu0
  %v754 = vpop.f32.mrb[0].mxu0
  %v755 = vadd.f32 %v697, %v754
  %v756 = vpop.f32.mrb[0].mxu0
  %757 = vmatprep.mubr.bf16.mxu0 0
  %758 = vmatmul.mubr.bf16.gmra.mrb[0].mxu0 %v715
  %v759 = vpop.f32.mrb[0].mxu0
  %v760 = vadd.f32 %v697, %v759
  %v761 = vpop.f32.mrb[0].mxu0
  %v762 = vpop.f32.mrb[0].mxu0
  %v763 = vpop.f32.mrb[0].mxu0
  %764 = vdwg.mxu0
  %v765 = vpack.c.bf16 %v755, %v752
  %v766 = vpack.c.bf16 %v760, %v760
  %769 = vrot.lane.b32.xlu0 %v765, 96
  %v770 = vpop.permute.xlu0 %769
  %771 = vrot.lane.b32.xlu0 %v766, 96
  %v772 = vpop.permute.xlu0 %771
  %vm773 = vcmask 64512
  %v775 = vsel %vm773, %v765, 0
  %v778 = vsel %vm773, %v766, 0
  %v781 = vsel %vm773, %v770, 0
  %v784 = vsel %vm773, %v772, 0
  %786 = vmatprep.subr.bf16.mxu0 0
  %787 = vmatpush1.bf16.xpose.msra.mxu0 %v781
  %788 = vmatprep.subr.bf16.mxu0 0
  %789 = vmatpush1.bf16.xpose.msra.mxu0 %v784
  %790 = vmatprep.subr.bf16.mxu0 0
  %791 = vmatpush1.bf16.xpose.msra.mxu0 0
  %792 = vmatprep.subr.bf16.mxu0 0
  %793 = vmatpush1.bf16.xpose.msra.mxu0 0
  %794 = vmatprep.subr.bf16.mxu0 0
  %795 = vmatpush1.bf16.xpose.msra.mxu0 0
  %796 = vmatprep.subr.bf16.mxu0 0
  %797 = vmatpush1.bf16.xpose.msra.mxu0 0
  %798 = vmatprep.subr.bf16.mxu0 0
  %799 = vmatpush1.bf16.xpose.msra.mxu0 0
  %800 = vmatprep.subr.bf16.mxu0 0
  %801 = vmatpush1.bf16.xpose.msra.mxu0 0
  %802 = vmatprep.subr.bf16.mxu0 0
  %803 = vmatpush1.bf16.xpose.msra.mxu0 0
  %804 = vmatprep.subr.bf16.mxu0 0
  %805 = vmatpush1.bf16.xpose.msra.mxu0 0
  %806 = vmatprep.subr.bf16.mxu0 0
  %807 = vmatpush1.bf16.xpose.msra.mxu0 0
  %808 = vmatprep.subr.bf16.mxu0 0
  %809 = vmatpush1.bf16.xpose.msra.mxu0 0
  %810 = vmatprep.subr.bf16.mxu0 0
  %811 = vmatpush1.bf16.xpose.msra.mxu0 0
  %812 = vmatprep.subr.bf16.mxu0 0
  %813 = vmatpush1.bf16.xpose.msra.mxu0 0
  %814 = vmatprep.subr.bf16.mxu0 0
  %815 = vmatpush1.bf16.xpose.msra.mxu0 0
  %816 = vmatprep.subr.bf16.mxu0 0
  %817 = vmatpush1.bf16.xpose.msra.mxu0 0
  %818 = vmatprep.mubr.bf16.mxu0 0
  %819 = vmatmul.mubr.bf16.gmra.mrb[0].mxu0 %v775
  %v820 = vpop.f32.mrb[0].mxu0
  %v821 = vadd.f32 0.0, %v820
  %v822 = vpop.f32.mrb[0].mxu0
  %v823 = vpop.f32.mrb[0].mxu0
  %v824 = vadd.f32 0.0, %v823
  %v825 = vpop.f32.mrb[0].mxu0
  %826 = vmatprep.mubr.bf16.mxu0 0
  %827 = vmatmul.mubr.bf16.gmra.mrb[0].mxu0 %v778
  %v828 = vpop.f32.mrb[0].mxu0
  %v829 = vadd.f32 0.0, %v828
  %v830 = vpop.f32.mrb[0].mxu0
  %v831 = vpop.f32.mrb[0].mxu0
  %v832 = vpop.f32.mrb[0].mxu0
  %833 = vdwg.mxu0
  %v834 = vmul.f32 %v821, 0.35355338
  %v835 = vmul.f32 %v824, 0.35355338
  %v836 = vmul.f32 %v829, 0.35355338
  %v837 = vadd.f32 %v834, %v622
  %v838 = vadd.f32 %v835, %v623
  %v839 = vadd.f32 %v836, %v624
  %vm840 = vcmask 195584
  %v841 = vsel %vm840, %v837, -inf
  %842 = vmax.xlane.f32.xlu0 %v841
  %v843 = vpop.xlane.xlu0 %842
  %v844 = vsel %vm840, %v838, -inf
  %845 = vmax.xlane.f32.xlu0 %v844
  %v846 = vpop.xlane.xlu0 %845
  %v847 = vsel %vm840, %v839, -inf
  %848 = vmax.xlane.f32.xlu0 %v847
  %v849 = vpop.xlane.xlu0 %848
  %v850 = vsub.f32 %v837, %v843
  %v851 = vsub.f32 %v838, %v846
  %v852 = vsub.f32 %v839, %v849
  %v853 = vmul.f32 %v850, 1.442695
  %v854 = vpow.pop %v853
  %v855 = vmul.f32 %v851, 1.442695
  %v856 = vpow.pop %v855
  %v857 = vmul.f32 %v852, 1.442695
  %v858 = vpow.pop %v857
  %v859 = vsel %vm840, %v854, 0.0
  %860 = vadd.xlane.f32.xlu0 %v859
  %v861 = vpop.xlane.xlu0 %860
  %v862 = vsel %vm840, %v856, 0.0
  %863 = vadd.xlane.f32.xlu0 %v862
  %v864 = vpop.xlane.xlu0 %863
  %v865 = vsel %vm840, %v858, 0.0
  %866 = vadd.xlane.f32.xlu0 %v865
  %v867 = vpop.xlane.xlu0 %866
  %v868 = vrcp.pop %v861
  %v869 = vrcp.pop %v864
  %v870 = vrcp.pop %v867
  %v871 = vmul.f32 %v854, %v868
  %v872 = vmul.f32 %v856, %v869
  %v873 = vmul.f32 %v858, %v870
  %v874 = vpack.c.bf16 %v872, %v871
  %v875 = vpack.c.bf16 %v873, %v873
  %876 = vrot.lane.b32.xlu0 %v765, 64
  %v877 = vpop.permute.xlu0 %876
  %878 = vrot.lane.b32.xlu0 %v766, 64
  %v879 = vpop.permute.xlu0 %878
  %v882 = vsel %vm840, %v874, 0
  %v885 = vsel %vm840, %v875, 0
  %v888 = vsel %vm594, %v879, 0
  %890 = vmatprep.subr.bf16.mxu0 0
  %891 = vmatpush1.bf16.msra.mxu0 %v877
  %892 = vmatprep.subr.bf16.mxu0 0
  %893 = vmatpush1.bf16.msra.mxu0 %v888
  %894 = vmatprep.subr.bf16.mxu0 0
  %895 = vmatpush1.bf16.msra.mxu0 0
  %896 = vmatprep.subr.bf16.mxu0 0
  %897 = vmatpush1.bf16.msra.mxu0 0
  %898 = vmatprep.subr.bf16.mxu0 0
  %899 = vmatpush1.bf16.msra.mxu0 0
  %900 = vmatprep.subr.bf16.mxu0 0
  %901 = vmatpush1.bf16.msra.mxu0 0
  %902 = vmatprep.subr.bf16.mxu0 0
  %903 = vmatpush1.bf16.msra.mxu0 0
  %904 = vmatprep.subr.bf16.mxu0 0
  %905 = vmatpush1.bf16.msra.mxu0 0
  %906 = vmatprep.subr.bf16.mxu0 0
  %907 = vmatpush1.bf16.msra.mxu0 0
  %908 = vmatprep.subr.bf16.mxu0 0
  %909 = vmatpush1.bf16.msra.mxu0 0
  %910 = vmatprep.subr.bf16.mxu0 0
  %911 = vmatpush1.bf16.msra.mxu0 0
  %912 = vmatprep.subr.bf16.mxu0 0
  %913 = vmatpush1.bf16.msra.mxu0 0
  %914 = vmatprep.subr.bf16.mxu0 0
  %915 = vmatpush1.bf16.msra.mxu0 0
  %916 = vmatprep.subr.bf16.mxu0 0
  %917 = vmatpush1.bf16.msra.mxu0 0
  %918 = vmatprep.subr.bf16.mxu0 0
  %919 = vmatpush1.bf16.msra.mxu0 0
  %920 = vmatprep.subr.bf16.mxu0 0
  %921 = vmatpush1.bf16.msra.mxu0 0
  %922 = vmatprep.mubr.bf16.mxu0 0
  %923 = vmatmul.mubr.bf16.gmra.mrb[0].mxu0 %v882
  %v924 = vpop.f32.mrb[0].mxu0
  %v925 = vadd.f32 0.0, %v924
  %v926 = vpop.f32.mrb[0].mxu0
  %v927 = vpop.f32.mrb[0].mxu0
  %v928 = vadd.f32 0.0, %v927
  %v929 = vpop.f32.mrb[0].mxu0
  %930 = vmatprep.mubr.bf16.mxu0 0
  %931 = vmatmul.mubr.bf16.gmra.mrb[0].mxu0 %v885
  %v932 = vpop.f32.mrb[0].mxu0
  %v933 = vadd.f32 0.0, %v932
  %v934 = vpop.f32.mrb[0].mxu0
  %v935 = vpop.f32.mrb[0].mxu0
  %v936 = vpop.f32.mrb[0].mxu0
  %937 = vdwg.mxu0
  %938 = vrot.lane.b32.xlu0 %v765, 120
  %v939 = vpop.permute.xlu0 %938
  %940 = vrot.lane.b32.xlu0 %v766, 120
  %v941 = vpop.permute.xlu0 %940
  %942 = vrot.lane.b32.xlu0 %v765, 88
  %v943 = vpop.permute.xlu0 %942
  %944 = vrot.lane.b32.xlu0 %v766, 88
  %v945 = vpop.permute.xlu0 %944
  %v947 = vsel %vm773, %v939, 0
  %v950 = vsel %vm773, %v941, 0
  %v953 = vsel %vm773, %v943, 0
  %v956 = vsel %vm773, %v945, 0
  %958 = vmatprep.subr.bf16.mxu0 0
  %959 = vmatpush1.bf16.xpose.msra.mxu0 %v953
  %960 = vmatprep.subr.bf16.mxu0 0
  %961 = vmatpush1.bf16.xpose.msra.mxu0 %v956
  %962 = vmatprep.subr.bf16.mxu0 0
  %963 = vmatpush1.bf16.xpose.msra.mxu0 0
  %964 = vmatprep.subr.bf16.mxu0 0
  %965 = vmatpush1.bf16.xpose.msra.mxu0 0
  %966 = vmatprep.subr.bf16.mxu0 0
  %967 = vmatpush1.bf16.xpose.msra.mxu0 0
  %968 = vmatprep.subr.bf16.mxu0 0
  %969 = vmatpush1.bf16.xpose.msra.mxu0 0
  %970 = vmatprep.subr.bf16.mxu0 0
  %971 = vmatpush1.bf16.xpose.msra.mxu0 0
  %972 = vmatprep.subr.bf16.mxu0 0
  %973 = vmatpush1.bf16.xpose.msra.mxu0 0
  %974 = vmatprep.subr.bf16.mxu0 0
  %975 = vmatpush1.bf16.xpose.msra.mxu0 0
  %976 = vmatprep.subr.bf16.mxu0 0
  %977 = vmatpush1.bf16.xpose.msra.mxu0 0
  %978 = vmatprep.subr.bf16.mxu0 0
  %979 = vmatpush1.bf16.xpose.msra.mxu0 0
  %980 = vmatprep.subr.bf16.mxu0 0
  %981 = vmatpush1.bf16.xpose.msra.mxu0 0
  %982 = vmatprep.subr.bf16.mxu0 0
  %983 = vmatpush1.bf16.xpose.msra.mxu0 0
  %984 = vmatprep.subr.bf16.mxu0 0
  %985 = vmatpush1.bf16.xpose.msra.mxu0 0
  %986 = vmatprep.subr.bf16.mxu0 0
  %987 = vmatpush1.bf16.xpose.msra.mxu0 0
  %988 = vmatprep.subr.bf16.mxu0 0
  %989 = vmatpush1.bf16.xpose.msra.mxu0 0
  %990 = vmatprep.mubr.bf16.mxu0 0
  %991 = vmatmul.mubr.bf16.gmra.mrb[0].mxu0 %v947
  %v992 = vpop.f32.mrb[0].mxu0
  %v993 = vadd.f32 0.0, %v992
  %v994 = vpop.f32.mrb[0].mxu0
  %v995 = vpop.f32.mrb[0].mxu0
  %v996 = vadd.f32 0.0, %v995
  %v997 = vpop.f32.mrb[0].mxu0
  %998 = vmatprep.mubr.bf16.mxu0 0
  %999 = vmatmul.mubr.bf16.gmra.mrb[0].mxu0 %v950
  %v1000 = vpop.f32.mrb[0].mxu0
  %v1001 = vadd.f32 0.0, %v1000
  %v1002 = vpop.f32.mrb[0].mxu0
  %v1003 = vpop.f32.mrb[0].mxu0
  %v1004 = vpop.f32.mrb[0].mxu0
  %1005 = vdwg.mxu0
  %v1006 = vmul.f32 %v993, 0.35355338
  %v1007 = vmul.f32 %v996, 0.35355338
  %v1008 = vmul.f32 %v1001, 0.35355338
  %v1009 = vadd.f32 %v1006, %v622
  %v1010 = vadd.f32 %v1007, %v623
  %v1011 = vadd.f32 %v1008, %v624
  %v1012 = vsel %vm840, %v1009, -inf
  %1013 = vmax.xlane.f32.xlu0 %v1012
  %v1014 = vpop.xlane.xlu0 %1013
  %v1015 = vsel %vm840, %v1010, -inf
  %1016 = vmax.xlane.f32.xlu0 %v1015
  %v1017 = vpop.xlane.xlu0 %1016
  %v1018 = vsel %vm840, %v1011, -inf
  %1019 = vmax.xlane.f32.xlu0 %v1018
  %v1020 = vpop.xlane.xlu0 %1019
  %v1021 = vsub.f32 %v1009, %v1014
  %v1022 = vsub.f32 %v1010, %v1017
  %v1023 = vsub.f32 %v1011, %v1020
  %v1024 = vmul.f32 %v1021, 1.442695
  %v1025 = vpow.pop %v1024
  %v1026 = vmul.f32 %v1022, 1.442695
  %v1027 = vpow.pop %v1026
  %v1028 = vmul.f32 %v1023, 1.442695
  %v1029 = vpow.pop %v1028
  %v1030 = vsel %vm840, %v1025, 0.0
  %1031 = vadd.xlane.f32.xlu0 %v1030
  %v1032 = vpop.xlane.xlu0 %1031
  %v1033 = vsel %vm840, %v1027, 0.0
  %1034 = vadd.xlane.f32.xlu0 %v1033
  %v1035 = vpop.xlane.xlu0 %1034
  %v1036 = vsel %vm840, %v1029, 0.0
  %1037 = vadd.xlane.f32.xlu0 %v1036
  %v1038 = vpop.xlane.xlu0 %1037
  %v1039 = vrcp.pop %v1032
  %v1040 = vrcp.pop %v1035
  %v1041 = vrcp.pop %v1038
  %v1042 = vmul.f32 %v1025, %v1039
  %v1043 = vmul.f32 %v1027, %v1040
  %v1044 = vmul.f32 %v1029, %v1041
  %v1045 = vpack.c.bf16 %v1043, %v1042
  %v1046 = vpack.c.bf16 %v1044, %v1044
  %1047 = vrot.lane.b32.xlu0 %v765, 56
  %v1048 = vpop.permute.xlu0 %1047
  %1049 = vrot.lane.b32.xlu0 %v766, 56
  %v1050 = vpop.permute.xlu0 %1049
  %v1053 = vsel %vm840, %v1045, 0
  %v1056 = vsel %vm840, %v1046, 0
  %v1059 = vsel %vm594, %v1050, 0
  %1061 = vmatprep.subr.bf16.mxu0 0
  %1062 = vmatpush1.bf16.msra.mxu0 %v1048
  %1063 = vmatprep.subr.bf16.mxu0 0
  %1064 = vmatpush1.bf16.msra.mxu0 %v1059
  %1065 = vmatprep.subr.bf16.mxu0 0
  %1066 = vmatpush1.bf16.msra.mxu0 0
  %1067 = vmatprep.subr.bf16.mxu0 0
  %1068 = vmatpush1.bf16.msra.mxu0 0
  %1069 = vmatprep.subr.bf16.mxu0 0
  %1070 = vmatpush1.bf16.msra.mxu0 0
  %1071 = vmatprep.subr.bf16.mxu0 0
  %1072 = vmatpush1.bf16.msra.mxu0 0
  %1073 = vmatprep.subr.bf16.mxu0 0
  %1074 = vmatpush1.bf16.msra.mxu0 0
  %1075 = vmatprep.subr.bf16.mxu0 0
  %1076 = vmatpush1.bf16.msra.mxu0 0
  %1077 = vmatprep.subr.bf16.mxu0 0
  %1078 = vmatpush1.bf16.msra.mxu0 0
  %1079 = vmatprep.subr.bf16.mxu0 0
  %1080 = vmatpush1.bf16.msra.mxu0 0
  %1081 = vmatprep.subr.bf16.mxu0 0
  %1082 = vmatpush1.bf16.msra.mxu0 0
  %1083 = vmatprep.subr.bf16.mxu0 0
  %1084 = vmatpush1.bf16.msra.mxu0 0
  %1085 = vmatprep.subr.bf16.mxu0 0
  %1086 = vmatpush1.bf16.msra.mxu0 0
  %1087 = vmatprep.subr.bf16.mxu0 0
  %1088 = vmatpush1.bf16.msra.mxu0 0
  %1089 = vmatprep.subr.bf16.mxu0 0
  %1090 = vmatpush1.bf16.msra.mxu0 0
  %1091 = vmatprep.subr.bf16.mxu0 0
  %1092 = vmatpush1.bf16.msra.mxu0 0
  %1093 = vmatprep.mubr.bf16.mxu0 0
  %1094 = vmatmul.mubr.bf16.gmra.mrb[0].mxu0 %v1053
  %v1095 = vpop.f32.mrb[0].mxu0
  %v1096 = vadd.f32 0.0, %v1095
  %v1097 = vpop.f32.mrb[0].mxu0
  %v1098 = vpop.f32.mrb[0].mxu0
  %v1099 = vadd.f32 0.0, %v1098
  %v1100 = vpop.f32.mrb[0].mxu0
  %1101 = vmatprep.mubr.bf16.mxu0 0
  %1102 = vmatmul.mubr.bf16.gmra.mrb[0].mxu0 %v1056
  %v1103 = vpop.f32.mrb[0].mxu0
  %v1104 = vadd.f32 0.0, %v1103
  %v1105 = vpop.f32.mrb[0].mxu0
  %v1106 = vpop.f32.mrb[0].mxu0
  %v1107 = vpop.f32.mrb[0].mxu0
  %1108 = vdwg.mxu0
  %1109 = vrot.lane.b32.xlu0 %v765, 112
  %v1110 = vpop.permute.xlu0 %1109
  %1111 = vrot.lane.b32.xlu0 %v766, 112
  %v1112 = vpop.permute.xlu0 %1111
  %1113 = vrot.lane.b32.xlu0 %v765, 80
  %v1114 = vpop.permute.xlu0 %1113
  %1115 = vrot.lane.b32.xlu0 %v766, 80
  %v1116 = vpop.permute.xlu0 %1115
  %v1118 = vsel %vm773, %v1110, 0
  %v1121 = vsel %vm773, %v1112, 0
  %v1124 = vsel %vm773, %v1114, 0
  %v1127 = vsel %vm773, %v1116, 0
  %1129 = vmatprep.subr.bf16.mxu0 0
  %1130 = vmatpush1.bf16.xpose.msra.mxu0 %v1124
  %1131 = vmatprep.subr.bf16.mxu0 0
  %1132 = vmatpush1.bf16.xpose.msra.mxu0 %v1127
  %1133 = vmatprep.subr.bf16.mxu0 0
  %1134 = vmatpush1.bf16.xpose.msra.mxu0 0
  %1135 = vmatprep.subr.bf16.mxu0 0
  %1136 = vmatpush1.bf16.xpose.msra.mxu0 0
  %1137 = vmatprep.subr.bf16.mxu0 0
  %1138 = vmatpush1.bf16.xpose.msra.mxu0 0
  %1139 = vmatprep.subr.bf16.mxu0 0
  %1140 = vmatpush1.bf16.xpose.msra.mxu0 0
  %1141 = vmatprep.subr.bf16.mxu0 0
  %1142 = vmatpush1.bf16.xpose.msra.mxu0 0
  %1143 = vmatprep.subr.bf16.mxu0 0
  %1144 = vmatpush1.bf16.xpose.msra.mxu0 0
  %1145 = vmatprep.subr.bf16.mxu0 0
  %1146 = vmatpush1.bf16.xpose.msra.mxu0 0
  %1147 = vmatprep.subr.bf16.mxu0 0
  %1148 = vmatpush1.bf16.xpose.msra.mxu0 0
  %1149 = vmatprep.subr.bf16.mxu0 0
  %1150 = vmatpush1.bf16.xpose.msra.mxu0 0
  %1151 = vmatprep.subr.bf16.mxu0 0
  %1152 = vmatpush1.bf16.xpose.msra.mxu0 0
  %1153 = vmatprep.subr.bf16.mxu0 0
  %1154 = vmatpush1.bf16.xpose.msra.mxu0 0
  %1155 = vmatprep.subr.bf16.mxu0 0
  %1156 = vmatpush1.bf16.xpose.msra.mxu0 0
  %1157 = vmatprep.subr.bf16.mxu0 0
  %1158 = vmatpush1.bf16.xpose.msra.mxu0 0
  %1159 = vmatprep.subr.bf16.mxu0 0
  %1160 = vmatpush1.bf16.xpose.msra.mxu0 0
  %1161 = vmatprep.mubr.bf16.mxu0 0
  %1162 = vmatmul.mubr.bf16.gmra.mrb[0].mxu0 %v1118
  %v1163 = vpop.f32.mrb[0].mxu0
  %v1164 = vadd.f32 0.0, %v1163
  %v1165 = vpop.f32.mrb[0].mxu0
  %v1166 = vpop.f32.mrb[0].mxu0
  %v1167 = vadd.f32 0.0, %v1166
  %v1168 = vpop.f32.mrb[0].mxu0
  %1169 = vmatprep.mubr.bf16.mxu0 0
  %1170 = vmatmul.mubr.bf16.gmra.mrb[0].mxu0 %v1121
  %v1171 = vpop.f32.mrb[0].mxu0
  %v1172 = vadd.f32 0.0, %v1171
  %v1173 = vpop.f32.mrb[0].mxu0
  %v1174 = vpop.f32.mrb[0].mxu0
  %v1175 = vpop.f32.mrb[0].mxu0
  %1176 = vdwg.mxu0
  %v1177 = vmul.f32 %v1164, 0.35355338
  %v1178 = vmul.f32 %v1167, 0.35355338
  %v1179 = vmul.f32 %v1172, 0.35355338
  %v1180 = vadd.f32 %v1177, %v622
  %v1181 = vadd.f32 %v1178, %v623
  %v1182 = vadd.f32 %v1179, %v624
  %v1183 = vsel %vm840, %v1180, -inf
  %1184 = vmax.xlane.f32.xlu0 %v1183
  %v1185 = vpop.xlane.xlu0 %1184
  %v1186 = vsel %vm840, %v1181, -inf
  %1187 = vmax.xlane.f32.xlu0 %v1186
  %v1188 = vpop.xlane.xlu0 %1187
  %v1189 = vsel %vm840, %v1182, -inf
  %1190 = vmax.xlane.f32.xlu0 %v1189
  %v1191 = vpop.xlane.xlu0 %1190
  %v1192 = vsub.f32 %v1180, %v1185
  %v1193 = vsub.f32 %v1181, %v1188
  %v1194 = vsub.f32 %v1182, %v1191
  %v1195 = vmul.f32 %v1192, 1.442695
  %v1196 = vpow.pop %v1195
  %v1197 = vmul.f32 %v1193, 1.442695
  %v1198 = vpow.pop %v1197
  %v1199 = vmul.f32 %v1194, 1.442695
  %v1200 = vpow.pop %v1199
  %v1201 = vsel %vm840, %v1196, 0.0
  %1202 = vadd.xlane.f32.xlu0 %v1201
  %v1203 = vpop.xlane.xlu0 %1202
  %v1204 = vsel %vm840, %v1198, 0.0
  %1205 = vadd.xlane.f32.xlu0 %v1204
  %v1206 = vpop.xlane.xlu0 %1205
  %v1207 = vsel %vm840, %v1200, 0.0
  %1208 = vadd.xlane.f32.xlu0 %v1207
  %v1209 = vpop.xlane.xlu0 %1208
  %v1210 = vrcp.pop %v1203
  %v1211 = vrcp.pop %v1206
  %v1212 = vrcp.pop %v1209
  %v1213 = vmul.f32 %v1196, %v1210
  %v1214 = vmul.f32 %v1198, %v1211
  %v1215 = vmul.f32 %v1200, %v1212
  %v1216 = vpack.c.bf16 %v1214, %v1213
  %v1217 = vpack.c.bf16 %v1215, %v1215
  %1218 = vrot.lane.b32.xlu0 %v765, 48
  %v1219 = vpop.permute.xlu0 %1218
  %1220 = vrot.lane.b32.xlu0 %v766, 48
  %v1221 = vpop.permute.xlu0 %1220
  %v1224 = vsel %vm840, %v1216, 0
  %v1227 = vsel %vm840, %v1217, 0
  %v1230 = vsel %vm594, %v1221, 0
  %1232 = vmatprep.subr.bf16.mxu0 0
  %1233 = vmatpush1.bf16.msra.mxu0 %v1219
  %1234 = vmatprep.subr.bf16.mxu0 0
  %1235 = vmatpush1.bf16.msra.mxu0 %v1230
  %1236 = vmatprep.subr.bf16.mxu0 0
  %1237 = vmatpush1.bf16.msra.mxu0 0
  %1238 = vmatprep.subr.bf16.mxu0 0
  %1239 = vmatpush1.bf16.msra.mxu0 0
  %1240 = vmatprep.subr.bf16.mxu0 0
  %1241 = vmatpush1.bf16.msra.mxu0 0
  %1242 = vmatprep.subr.bf16.mxu0 0
  %1243 = vmatpush1.bf16.msra.mxu0 0
  %1244 = vmatprep.subr.bf16.mxu0 0
  %1245 = vmatpush1.bf16.msra.mxu0 0
  %1246 = vmatprep.subr.bf16.mxu0 0
  %1247 = vmatpush1.bf16.msra.mxu0 0
  %1248 = vmatprep.subr.bf16.mxu0 0
  %1249 = vmatpush1.bf16.msra.mxu0 0
  %1250 = vmatprep.subr.bf16.mxu0 0
  %1251 = vmatpush1.bf16.msra.mxu0 0
  %1252 = vmatprep.subr.bf16.mxu0 0
  %1253 = vmatpush1.bf16.msra.mxu0 0
  %1254 = vmatprep.subr.bf16.mxu0 0
  %1255 = vmatpush1.bf16.msra.mxu0 0
  %1256 = vmatprep.subr.bf16.mxu0 0
  %1257 = vmatpush1.bf16.msra.mxu0 0
  %1258 = vmatprep.subr.bf16.mxu0 0
  %1259 = vmatpush1.bf16.msra.mxu0 0
  %1260 = vmatprep.subr.bf16.mxu0 0
  %1261 = vmatpush1.bf16.msra.mxu0 0
  %1262 = vmatprep.subr.bf16.mxu0 0
  %1263 = vmatpush1.bf16.msra.mxu0 0
  %1264 = vmatprep.mubr.bf16.mxu0 0
  %1265 = vmatmul.mubr.bf16.gmra.mrb[0].mxu0 %v1224
  %v1266 = vpop.f32.mrb[0].mxu0
  %v1267 = vadd.f32 0.0, %v1266
  %v1268 = vpop.f32.mrb[0].mxu0
  %v1269 = vpop.f32.mrb[0].mxu0
  %v1270 = vadd.f32 0.0, %v1269
  %v1271 = vpop.f32.mrb[0].mxu0
  %1272 = vmatprep.mubr.bf16.mxu0 0
  %1273 = vmatmul.mubr.bf16.gmra.mrb[0].mxu0 %v1227
  %v1274 = vpop.f32.mrb[0].mxu0
  %v1275 = vadd.f32 0.0, %v1274
  %v1276 = vpop.f32.mrb[0].mxu0
  %v1277 = vpop.f32.mrb[0].mxu0
  %v1278 = vpop.f32.mrb[0].mxu0
  %1279 = vdwg.mxu0
  %1280 = vrot.lane.b32.xlu0 %v765, 104
  %v1281 = vpop.permute.xlu0 %1280
  %1282 = vrot.lane.b32.xlu0 %v766, 104
  %v1283 = vpop.permute.xlu0 %1282
  %1284 = vrot.lane.b32.xlu0 %v765, 72
  %v1285 = vpop.permute.xlu0 %1284
  %1286 = vrot.lane.b32.xlu0 %v766, 72
  %v1287 = vpop.permute.xlu0 %1286
  %v1289 = vsel %vm773, %v1281, 0
  %v1292 = vsel %vm773, %v1283, 0
  %v1295 = vsel %vm773, %v1285, 0
  %v1298 = vsel %vm773, %v1287, 0
  %1300 = vmatprep.subr.bf16.mxu0 0
  %1301 = vmatpush1.bf16.xpose.msra.mxu0 %v1295
  %1302 = vmatprep.subr.bf16.mxu0 0
  %1303 = vmatpush1.bf16.xpose.msra.mxu0 %v1298
  %1304 = vmatprep.subr.bf16.mxu0 0
  %1305 = vmatpush1.bf16.xpose.msra.mxu0 0
  %1306 = vmatprep.subr.bf16.mxu0 0
  %1307 = vmatpush1.bf16.xpose.msra.mxu0 0
  %1308 = vmatprep.subr.bf16.mxu0 0
  %1309 = vmatpush1.bf16.xpose.msra.mxu0 0
  %1310 = vmatprep.subr.bf16.mxu0 0
  %1311 = vmatpush1.bf16.xpose.msra.mxu0 0
  %1312 = vmatprep.subr.bf16.mxu0 0
  %1313 = vmatpush1.bf16.xpose.msra.mxu0 0
  %1314 = vmatprep.subr.bf16.mxu0 0
  %1315 = vmatpush1.bf16.xpose.msra.mxu0 0
  %1316 = vmatprep.subr.bf16.mxu0 0
  %1317 = vmatpush1.bf16.xpose.msra.mxu0 0
  %1318 = vmatprep.subr.bf16.mxu0 0
  %1319 = vmatpush1.bf16.xpose.msra.mxu0 0
  %1320 = vmatprep.subr.bf16.mxu0 0
  %1321 = vmatpush1.bf16.xpose.msra.mxu0 0
  %1322 = vmatprep.subr.bf16.mxu0 0
  %1323 = vmatpush1.bf16.xpose.msra.mxu0 0
  %1324 = vmatprep.subr.bf16.mxu0 0
  %1325 = vmatpush1.bf16.xpose.msra.mxu0 0
  %1326 = vmatprep.subr.bf16.mxu0 0
  %1327 = vmatpush1.bf16.xpose.msra.mxu0 0
  %1328 = vmatprep.subr.bf16.mxu0 0
  %1329 = vmatpush1.bf16.xpose.msra.mxu0 0
  %1330 = vmatprep.subr.bf16.mxu0 0
  %1331 = vmatpush1.bf16.xpose.msra.mxu0 0
  %1332 = vmatprep.mubr.bf16.mxu0 0
  %1333 = vmatmul.mubr.bf16.gmra.mrb[0].mxu0 %v1289
  %v1334 = vpop.f32.mrb[0].mxu0
  %v1335 = vadd.f32 0.0, %v1334
  %v1336 = vpop.f32.mrb[0].mxu0
  %v1337 = vpop.f32.mrb[0].mxu0
  %v1338 = vadd.f32 0.0, %v1337
  %v1339 = vpop.f32.mrb[0].mxu0
  %1340 = vmatprep.mubr.bf16.mxu0 0
  %1341 = vmatmul.mubr.bf16.gmra.mrb[0].mxu0 %v1292
  %v1342 = vpop.f32.mrb[0].mxu0
  %v1343 = vadd.f32 0.0, %v1342
  %v1344 = vpop.f32.mrb[0].mxu0
  %v1345 = vpop.f32.mrb[0].mxu0
  %v1346 = vpop.f32.mrb[0].mxu0
  %1347 = vdwg.mxu0
  %v1348 = vmul.f32 %v1335, 0.35355338
  %v1349 = vmul.f32 %v1338, 0.35355338
  %v1350 = vmul.f32 %v1343, 0.35355338
  %v1351 = vadd.f32 %v1348, %v622
  %v1352 = vadd.f32 %v1349, %v623
  %v1353 = vadd.f32 %v1350, %v624
  %v1354 = vsel %vm840, %v1351, -inf
  %1355 = vmax.xlane.f32.xlu0 %v1354
  %v1356 = vpop.xlane.xlu0 %1355
  %v1357 = vsel %vm840, %v1352, -inf
  %1358 = vmax.xlane.f32.xlu0 %v1357
  %v1359 = vpop.xlane.xlu0 %1358
  %v1360 = vsel %vm840, %v1353, -inf
  %1361 = vmax.xlane.f32.xlu0 %v1360
  %v1362 = vpop.xlane.xlu0 %1361
  %v1363 = vsub.f32 %v1351, %v1356
  %v1364 = vsub.f32 %v1352, %v1359
  %v1365 = vsub.f32 %v1353, %v1362
  %v1366 = vmul.f32 %v1363, 1.442695
  %v1367 = vpow.pop %v1366
  %v1368 = vmul.f32 %v1364, 1.442695
  %v1369 = vpow.pop %v1368
  %v1370 = vmul.f32 %v1365, 1.442695
  %v1371 = vpow.pop %v1370
  %v1372 = vsel %vm840, %v1367, 0.0
  %1373 = vadd.xlane.f32.xlu0 %v1372
  %v1374 = vpop.xlane.xlu0 %1373
  %v1375 = vsel %vm840, %v1369, 0.0
  %1376 = vadd.xlane.f32.xlu0 %v1375
  %v1377 = vpop.xlane.xlu0 %1376
  %v1378 = vsel %vm840, %v1371, 0.0
  %1379 = vadd.xlane.f32.xlu0 %v1378
  %v1380 = vpop.xlane.xlu0 %1379
  %v1381 = vrcp.pop %v1374
  %v1382 = vrcp.pop %v1377
  %v1383 = vrcp.pop %v1380
  %v1384 = vmul.f32 %v1367, %v1381
  %v1385 = vmul.f32 %v1369, %v1382
  %v1386 = vmul.f32 %v1371, %v1383
  %v1387 = vpack.c.bf16 %v1385, %v1384
  %v1388 = vpack.c.bf16 %v1386, %v1386
  %1389 = vrot.lane.b32.xlu0 %v765, 40
  %v1390 = vpop.permute.xlu0 %1389
  %1391 = vrot.lane.b32.xlu0 %v766, 40
  %v1392 = vpop.permute.xlu0 %1391
  %v1395 = vsel %vm840, %v1387, 0
  %v1398 = vsel %vm840, %v1388, 0
  %v1401 = vsel %vm594, %v1392, 0
  %1403 = vmatprep.subr.bf16.mxu0 0
  %1404 = vmatpush1.bf16.msra.mxu0 %v1390
  %1405 = vmatprep.subr.bf16.mxu0 0
  %1406 = vmatpush1.bf16.msra.mxu0 %v1401
  %1407 = vmatprep.subr.bf16.mxu0 0
  %1408 = vmatpush1.bf16.msra.mxu0 0
  %1409 = vmatprep.subr.bf16.mxu0 0
  %1410 = vmatpush1.bf16.msra.mxu0 0
  %1411 = vmatprep.subr.bf16.mxu0 0
  %1412 = vmatpush1.bf16.msra.mxu0 0
  %1413 = vmatprep.subr.bf16.mxu0 0
  %1414 = vmatpush1.bf16.msra.mxu0 0
  %1415 = vmatprep.subr.bf16.mxu0 0
  %1416 = vmatpush1.bf16.msra.mxu0 0
  %1417 = vmatprep.subr.bf16.mxu0 0
  %1418 = vmatpush1.bf16.msra.mxu0 0
  %1419 = vmatprep.subr.bf16.mxu0 0
  %1420 = vmatpush1.bf16.msra.mxu0 0
  %1421 = vmatprep.subr.bf16.mxu0 0
  %1422 = vmatpush1.bf16.msra.mxu0 0
  %1423 = vmatprep.subr.bf16.mxu0 0
  %1424 = vmatpush1.bf16.msra.mxu0 0
  %1425 = vmatprep.subr.bf16.mxu0 0
  %1426 = vmatpush1.bf16.msra.mxu0 0
  %1427 = vmatprep.subr.bf16.mxu0 0
  %1428 = vmatpush1.bf16.msra.mxu0 0
  %1429 = vmatprep.subr.bf16.mxu0 0
  %1430 = vmatpush1.bf16.msra.mxu0 0
  %1431 = vmatprep.subr.bf16.mxu0 0
  %1432 = vmatpush1.bf16.msra.mxu0 0
  %1433 = vmatprep.subr.bf16.mxu0 0
  %1434 = vmatpush1.bf16.msra.mxu0 0
  %1435 = vmatprep.mubr.bf16.mxu0 0
  %1436 = vmatmul.mubr.bf16.gmra.mrb[0].mxu0 %v1395
  %v1437 = vpop.f32.mrb[0].mxu0
  %v1438 = vadd.f32 0.0, %v1437
  %v1439 = vpop.f32.mrb[0].mxu0
  %v1440 = vpop.f32.mrb[0].mxu0
  %v1441 = vadd.f32 0.0, %v1440
  %v1442 = vpop.f32.mrb[0].mxu0
  %1443 = vmatprep.mubr.bf16.mxu0 0
  %1444 = vmatmul.mubr.bf16.gmra.mrb[0].mxu0 %v1398
  %v1445 = vpop.f32.mrb[0].mxu0
  %v1446 = vadd.f32 0.0, %v1445
  %v1447 = vpop.f32.mrb[0].mxu0
  %v1448 = vpop.f32.mrb[0].mxu0
  %v1449 = vpop.f32.mrb[0].mxu0
  %1450 = vdwg.mxu0
  %1454 = vrot.lane.b32.xlu0 %v1096, 8
  %v1455 = vpop.permute.xlu0 %1454
  %1456 = vrot.lane.b32.xlu0 %v1099, 8
  %v1457 = vpop.permute.xlu0 %1456
  %1458 = vrot.lane.b32.xlu0 %v1104, 8
  %v1459 = vpop.permute.xlu0 %1458
  %1466 = vrot.lane.b32.xlu0 %v1267, 16
  %v1467 = vpop.permute.xlu0 %1466
  %1468 = vrot.lane.b32.xlu0 %v1270, 16
  %v1469 = vpop.permute.xlu0 %1468
  %1470 = vrot.lane.b32.xlu0 %v1275, 16
  %v1471 = vpop.permute.xlu0 %1470
  %1478 = vrot.lane.b32.xlu0 %v1438, 24
  %v1479 = vpop.permute.xlu0 %1478
  %1480 = vrot.lane.b32.xlu0 %v1441, 24
  %v1481 = vpop.permute.xlu0 %1480
  %1482 = vrot.lane.b32.xlu0 %v1446, 24
  %v1483 = vpop.permute.xlu0 %1482
  %v1487 = vsel %vm773, %v925, %v1455
  %v1488 = vsel %vm773, %v928, %v1457
  %v1489 = vsel %vm773, %v933, %v1459
  %v1490 = vsel %vm202, %v1487, %v1467
  %v1491 = vsel %vm202, %v1488, %v1469
  %v1492 = vsel %vm202, %v1489, %v1471
  %v1493 = vsel %vm840, %v1490, %v1479
  %v1494 = vsel %vm840, %v1491, %v1481
  %v1495 = vsel %vm840, %v1492, %v1483
  %v1496 = vld [vmem:[%s13] sm:$0xf]
  %v1497 = vld [vmem:[%s13 + $0x4] sm:$0xf]
  %v1498 = vld [vmem:[%s13 + $0x8] sm:$0xf]
  %v1499 = vld [vmem:[%s13 + $0xc] sm:$0xf]
  %v1500 = vld [vmem:[%s14] sm:$0x1]
  %v1501 = vpack.c.bf16 %v1494, %v1493
  %v1502 = vpack.c.bf16 %v1495, %v1495
  %v1504 = vlaneseq
  %v1505 = vshrl.u32 %v1504, 7
  %v1506 = vsub.s32 0, %v1505
  %v1507 = vrot.slane %v1500, %v1506
  %v1513 = vunpack.c.l.b16 %v1496
  %v1514 = vunpack.c.l.b16 %v1497
  %v1515 = vunpack.c.l.b16 %v1498
  %v1516 = vunpack.c.l.b16 %v1499
  %v1517 = vpack.c.b16 %v1514, %v1513
  %v1518 = vpack.c.b16 %v1516, %v1515
  %v1522 = vsel %vm627, %v1501, 0
  %v1525 = vsel %vm627, %v1502, 0
  %1527 = vmatprep.subr.bf16.mxu0 0
  %1528 = vmatpush1.bf16.msra.mxu0 %v1517
  %1529 = vmatprep.subr.bf16.mxu0 0
  %1530 = vmatpush1.bf16.msra.mxu0 %v1518
  %1531 = vmatprep.subr.bf16.mxu0 0
  %1532 = vmatpush1.bf16.msra.mxu0 0
  %1533 = vmatprep.subr.bf16.mxu0 0
  %1534 = vmatpush1.bf16.msra.mxu0 0
  %1535 = vmatprep.subr.bf16.mxu0 0
  %1536 = vmatpush1.bf16.msra.mxu0 0
  %1537 = vmatprep.subr.bf16.mxu0 0
  %1538 = vmatpush1.bf16.msra.mxu0 0
  %1539 = vmatprep.subr.bf16.mxu0 0
  %1540 = vmatpush1.bf16.msra.mxu0 0
  %1541 = vmatprep.subr.bf16.mxu0 0
  %1542 = vmatpush1.bf16.msra.mxu0 0
  %1543 = vmatprep.subr.bf16.mxu0 0
  %1544 = vmatpush1.bf16.msra.mxu0 0
  %1545 = vmatprep.subr.bf16.mxu0 0
  %1546 = vmatpush1.bf16.msra.mxu0 0
  %1547 = vmatprep.subr.bf16.mxu0 0
  %1548 = vmatpush1.bf16.msra.mxu0 0
  %1549 = vmatprep.subr.bf16.mxu0 0
  %1550 = vmatpush1.bf16.msra.mxu0 0
  %1551 = vmatprep.subr.bf16.mxu0 0
  %1552 = vmatpush1.bf16.msra.mxu0 0
  %1553 = vmatprep.subr.bf16.mxu0 0
  %1554 = vmatpush1.bf16.msra.mxu0 0
  %1555 = vmatprep.subr.bf16.mxu0 0
  %1556 = vmatpush1.bf16.msra.mxu0 0
  %1557 = vmatprep.subr.bf16.mxu0 0
  %1558 = vmatpush1.bf16.msra.mxu0 0
  %1559 = vmatprep.mubr.bf16.mxu0 0
  %1560 = vmatmul.mubr.bf16.gmra.mrb[0].mxu0 %v1522
  %v1561 = vpop.f32.mrb[0].mxu0
  %v1562 = vadd.f32 %v1507, %v1561
  %v1563 = vpop.f32.mrb[0].mxu0
  %v1564 = vpop.f32.mrb[0].mxu0
  %v1565 = vadd.f32 %v1507, %v1564
  %v1566 = vpop.f32.mrb[0].mxu0
  %1567 = vmatprep.mubr.bf16.mxu0 0
  %1568 = vmatmul.mubr.bf16.gmra.mrb[0].mxu0 %v1525
  %v1569 = vpop.f32.mrb[0].mxu0
  %v1570 = vadd.f32 %v1507, %v1569
  %v1571 = vpop.f32.mrb[0].mxu0
  %v1572 = vpop.f32.mrb[0].mxu0
  %v1573 = vpop.f32.mrb[0].mxu0
  %1574 = vdwg.mxu0
  %v1575 = vadd.f32 %v596, %v1562
  %v1576 = vadd.f32 %v621, %v1565
  %v1577 = vadd.f32 %v618, %v1570
  %v1578 = vld [vmem:[%s15] sm:$0x1]
  %v1579 = vld [vmem:[%s16] sm:$0x1]
  %v1580 = vsel %vm627, %v1575, 0.0
  %1581 = vadd.xlane.f32.xlu0 %v1580
  %v1582 = vpop.xlane.xlu0 %1581
  %v1583 = vsel %vm627, %v1576, 0.0
  %1584 = vadd.xlane.f32.xlu0 %v1583
  %v1585 = vpop.xlane.xlu0 %1584
  %v1586 = vsel %vm627, %v1577, 0.0
  %1587 = vadd.xlane.f32.xlu0 %v1586
  %v1588 = vpop.xlane.xlu0 %1587
  %v1589 = vmul.f32 %v1582, %v637
  %v1590 = vmul.f32 %v1585, %v637
  %v1591 = vmul.f32 %v1588, %v637
  %v1592 = vsub.f32 %v1575, %v1589
  %v1593 = vsub.f32 %v1576, %v1590
  %v1594 = vsub.f32 %v1577, %v1591
  %v1595 = vmul.f32 %v1592, %v1592
  %v1596 = vmul.f32 %v1593, %v1593
  %v1597 = vmul.f32 %v1594, %v1594
  %v1598 = vsel %vm627, %v1595, 0.0
  %1599 = vadd.xlane.f32.xlu0 %v1598
  %v1600 = vpop.xlane.xlu0 %1599
  %v1601 = vsel %vm627, %v1596, 0.0
  %1602 = vadd.xlane.f32.xlu0 %v1601
  %v1603 = vpop.xlane.xlu0 %1602
  %v1604 = vsel %vm627, %v1597, 0.0
  %1605 = vadd.xlane.f32.xlu0 %v1604
  %v1606 = vpop.xlane.xlu0 %1605
  %v1607 = vmul.f32 %v1600, %v637
  %v1608 = vmul.f32 %v1603, %v637
  %v1609 = vmul.f32 %v1606, %v637
  %v1610 = vadd.f32 %v1607, 1e-05
  %v1611 = vadd.f32 %v1608, 1e-05
  %v1612 = vadd.f32 %v1609, 1e-05
  %v1613 = vrsqrt.pop %v1610
  %v1614 = vrsqrt.pop %v1611
  %v1615 = vrsqrt.pop %v1612
  %v1616 = vmul.f32 %v1592, %v1613
  %v1617 = vmul.f32 %v1593, %v1614
  %v1618 = vmul.f32 %v1594, %v1615
  %v1620 = vlaneseq
  %v1621 = vshrl.u32 %v1620, 7
  %v1622 = vsub.s32 0, %v1621
  %v1623 = vrot.slane %v1578, %v1622
  %v1625 = vmul.f32 %v1616, %v1623
  %v1626 = vmul.f32 %v1617, %v1623
  %v1627 = vmul.f32 %v1618, %v1623
  %v1629 = vlaneseq
  %v1630 = vshrl.u32 %v1629, 7
  %v1631 = vsub.s32 0, %v1630
  %v1632 = vrot.slane %v1579, %v1631
  %v1634 = vadd.f32 %v1625, %v1632
  %v1635 = vadd.f32 %v1626, %v1632
  %v1636 = vadd.f32 %v1627, %v1632
  %v1637 = vld [vmem:[%s17] sm:$0xf]
  %v1638 = vld [vmem:[%s17 + $0x4] sm:$0xf]
  %v1639 = vld [vmem:[%s17 + $0x8] sm:$0xf]
  %v1640 = vld [vmem:[%s17 + $0xc] sm:$0xf]
  %v1641 = vld [vmem:[%s18] sm:$0x1]
  %v1642 = vpack.c.bf16 %v1635, %v1634
  %v1643 = vpack.c.bf16 %v1636, %v1636
  %v1645 = vlaneseq
  %v1646 = vshrl.u32 %v1645, 7
  %v1647 = vsub.s32 0, %v1646
  %v1648 = vrot.slane %v1641, %v1647
  %v1654 = vunpack.c.l.b16 %v1637
  %v1655 = vunpack.c.l.b16 %v1638
  %v1656 = vunpack.c.l.b16 %v1639
  %v1657 = vunpack.c.l.b16 %v1640
  %v1658 = vpack.c.b16 %v1655, %v1654
  %v1659 = vpack.c.b16 %v1657, %v1656
  %v1663 = vsel %vm627, %v1642, 0
  %v1666 = vsel %vm627, %v1643, 0
  %1668 = vmatprep.subr.bf16.mxu0 0
  %1669 = vmatpush1.bf16.msra.mxu0 %v1658
  %1670 = vmatprep.subr.bf16.mxu0 0
  %1671 = vmatpush1.bf16.msra.mxu0 %v1659
  %1672 = vmatprep.subr.bf16.mxu0 0
  %1673 = vmatpush1.bf16.msra.mxu0 0
  %1674 = vmatprep.subr.bf16.mxu0 0
  %1675 = vmatpush1.bf16.msra.mxu0 0
  %1676 = vmatprep.subr.bf16.mxu0 0
  %1677 = vmatpush1.bf16.msra.mxu0 0
  %1678 = vmatprep.subr.bf16.mxu0 0
  %1679 = vmatpush1.bf16.msra.mxu0 0
  %1680 = vmatprep.subr.bf16.mxu0 0
  %1681 = vmatpush1.bf16.msra.mxu0 0
  %1682 = vmatprep.subr.bf16.mxu0 0
  %1683 = vmatpush1.bf16.msra.mxu0 0
  %1684 = vmatprep.subr.bf16.mxu0 0
  %1685 = vmatpush1.bf16.msra.mxu0 0
  %1686 = vmatprep.subr.bf16.mxu0 0
  %1687 = vmatpush1.bf16.msra.mxu0 0
  %1688 = vmatprep.subr.bf16.mxu0 0
  %1689 = vmatpush1.bf16.msra.mxu0 0
  %1690 = vmatprep.subr.bf16.mxu0 0
  %1691 = vmatpush1.bf16.msra.mxu0 0
  %1692 = vmatprep.subr.bf16.mxu0 0
  %1693 = vmatpush1.bf16.msra.mxu0 0
  %1694 = vmatprep.subr.bf16.mxu0 0
  %1695 = vmatpush1.bf16.msra.mxu0 0
  %1696 = vmatprep.subr.bf16.mxu0 0
  %1697 = vmatpush1.bf16.msra.mxu0 0
  %1698 = vmatprep.subr.bf16.mxu0 0
  %1699 = vmatpush1.bf16.msra.mxu0 0
  %1700 = vmatprep.mubr.bf16.mxu0 0
  %1701 = vmatmul.mubr.bf16.gmra.mrb[0].mxu0 %v1663
  %v1702 = vpop.f32.mrb[0].mxu0
  %v1703 = vadd.f32 %v1648, %v1702
  %v1704 = vpop.f32.mrb[0].mxu0
  %v1705 = vpop.f32.mrb[0].mxu0
  %v1706 = vadd.f32 %v1648, %v1705
  %v1707 = vpop.f32.mrb[0].mxu0
  %1708 = vmatprep.mubr.bf16.mxu0 0
  %1709 = vmatmul.mubr.bf16.gmra.mrb[0].mxu0 %v1666
  %v1710 = vpop.f32.mrb[0].mxu0
  %v1711 = vadd.f32 %v1648, %v1710
  %v1712 = vpop.f32.mrb[0].mxu0
  %v1713 = vpop.f32.mrb[0].mxu0
  %v1714 = vpop.f32.mrb[0].mxu0
  %1715 = vdwg.mxu0
  %v1716 = vmul.f32 %v1703, 0.5
  %v1717 = vmul.f32 %v1706, 0.5
  %v1718 = vmul.f32 %v1711, 0.5
  %v1719 = vmul.f32 %v1703, 0.044715
  %v1720 = vmul.f32 %v1706, 0.044715
  %v1721 = vmul.f32 %v1711, 0.044715
  %v1722 = vmul.f32 %v1719, %v1703
  %v1723 = vmul.f32 %v1720, %v1706
  %v1724 = vmul.f32 %v1721, %v1711
  %v1725 = vmul.f32 %v1722, %v1703
  %v1726 = vmul.f32 %v1723, %v1706
  %v1727 = vmul.f32 %v1724, %v1711
  %v1728 = vadd.f32 %v1703, %v1725
  %v1729 = vadd.f32 %v1706, %v1726
  %v1730 = vadd.f32 %v1711, %v1727
  %v1731 = vmul.f32 %v1728, 0.7978846
  %v1732 = vmul.f32 %v1729, 0.7978846
  %v1733 = vmul.f32 %v1730, 0.7978846
  %v1734 = vtanh.pop %v1731
  %v1735 = vtanh.pop %v1732
  %v1736 = vtanh.pop %v1733
  %v1737 = vadd.f32 %v1734, 1.0
  %v1738 = vadd.f32 %v1735, 1.0
  %v1739 = vadd.f32 %v1736, 1.0
  %v1740 = vmul.f32 %v1716, %v1737
  %v1741 = vmul.f32 %v1717, %v1738
  %v1742 = vmul.f32 %v1718, %v1739
  %v1743 = vld [vmem:[%s19] sm:$0xf]
  %v1744 = vld [vmem:[%s19 + $0x4] sm:$0xf]
  %v1745 = vld [vmem:[%s19 + $0x8] sm:$0xf]
  %v1746 = vld [vmem:[%s19 + $0xc] sm:$0xf]
  %v1747 = vld [vmem:[%s19 + $0x10] sm:$0xf]
  %v1748 = vld [vmem:[%s19 + $0x14] sm:$0xf]
  %v1749 = vld [vmem:[%s19 + $0x18] sm:$0xf]
  %v1750 = vld [vmem:[%s19 + $0x1c] sm:$0xf]
  %v1751 = vld [vmem:[%s19 + $0x20] sm:$0xf]
  %v1752 = vld [vmem:[%s19 + $0x24] sm:$0xf]
  %v1753 = vld [vmem:[%s19 + $0x28] sm:$0xf]
  %v1754 = vld [vmem:[%s19 + $0x2c] sm:$0xf]
  %v1755 = vld [vmem:[%s19 + $0x30] sm:$0xf]
  %v1756 = vld [vmem:[%s19 + $0x34] sm:$0xf]
  %v1757 = vld [vmem:[%s19 + $0x38] sm:$0xf]
  %v1758 = vld [vmem:[%s19 + $0x3c] sm:$0xf]
  %v1759 = vld [vmem:[%s20] sm:$0x1]
  %v1760 = vpack.c.bf16 %v1741, %v1740
  %v1761 = vpack.c.bf16 %v1742, %v1742
  %v1763 = vlaneseq
  %v1764 = vshrl.u32 %v1763, 7
  %v1765 = vsub.s32 0, %v1764
  %v1766 = vrot.slane %v1759, %v1765
  %v1784 = vunpack.c.l.b16 %v1743
  %v1785 = vunpack.c.l.b16 %v1744
  %v1786 = vunpack.c.l.b16 %v1745
  %v1787 = vunpack.c.l.b16 %v1746
  %v1788 = vunpack.c.l.b16 %v1747
  %v1789 = vunpack.c.l.b16 %v1748
  %v1790 = vunpack.c.l.b16 %v1749
  %v1791 = vunpack.c.l.b16 %v1750
  %v1792 = vunpack.c.l.b16 %v1751
  %v1793 = vunpack.c.l.b16 %v1752
  %v1794 = vunpack.c.l.b16 %v1753
  %v1795 = vunpack.c.l.b16 %v1754
  %v1796 = vunpack.c.l.b16 %v1755
  %v1797 = vunpack.c.l.b16 %v1756
  %v1798 = vunpack.c.l.b16 %v1757
  %v1799 = vunpack.c.l.b16 %v1758
  %v1800 = vpack.c.b16 %v1785, %v1784
  %v1801 = vpack.c.b16 %v1787, %v1786
  %v1802 = vpack.c.b16 %v1789, %v1788
  %v1803 = vpack.c.b16 %v1791, %v1790
  %v1804 = vpack.c.b16 %v1793, %v1792
  %v1805 = vpack.c.b16 %v1795, %v1794
  %v1806 = vpack.c.b16 %v1797, %v1796
  %v1807 = vpack.c.b16 %v1799, %v1798
  %1816 = vmatprep.subr.bf16.mxu0 0
  %1817 = vmatpush1.bf16.msra.mxu0 %v1800
  %1818 = vmatprep.subr.bf16.mxu0 0
  %1819 = vmatpush1.bf16.msra.mxu0 %v1801
  %1820 = vmatprep.subr.bf16.mxu0 0
  %1821 = vmatpush1.bf16.msra.mxu0 %v1802
  %1822 = vmatprep.subr.bf16.mxu0 0
  %1823 = vmatpush1.bf16.msra.mxu0 %v1803
  %1824 = vmatprep.subr.bf16.mxu0 0
  %1825 = vmatpush1.bf16.msra.mxu0 %v1804
  %1826 = vmatprep.subr.bf16.mxu0 0
  %1827 = vmatpush1.bf16.msra.mxu0 %v1805
  %1828 = vmatprep.subr.bf16.mxu0 0
  %1829 = vmatpush1.bf16.msra.mxu0 %v1806
  %1830 = vmatprep.subr.bf16.mxu0 0
  %1831 = vmatpush1.bf16.msra.mxu0 %v1807
  %1832 = vmatprep.subr.bf16.mxu0 0
  %1833 = vmatpush1.bf16.msra.mxu0 0
  %1834 = vmatprep.subr.bf16.mxu0 0
  %1835 = vmatpush1.bf16.msra.mxu0 0
  %1836 = vmatprep.subr.bf16.mxu0 0
  %1837 = vmatpush1.bf16.msra.mxu0 0
  %1838 = vmatprep.subr.bf16.mxu0 0
  %1839 = vmatpush1.bf16.msra.mxu0 0
  %1840 = vmatprep.subr.bf16.mxu0 0
  %1841 = vmatpush1.bf16.msra.mxu0 0
  %1842 = vmatprep.subr.bf16.mxu0 0
  %1843 = vmatpush1.bf16.msra.mxu0 0
  %1844 = vmatprep.subr.bf16.mxu0 0
  %1845 = vmatpush1.bf16.msra.mxu0 0
  %1846 = vmatprep.subr.bf16.mxu0 0
  %1847 = vmatpush1.bf16.msra.mxu0 0
  %1848 = vmatprep.mubr.bf16.mxu0 0
  %1849 = vmatmul.mubr.bf16.gmra.mrb[0].mxu0 %v1760
  %v1850 = vpop.f32.mrb[0].mxu0
  %v1851 = vadd.f32 %v1766, %v1850
  %v1852 = vpop.f32.mrb[0].mxu0
  %v1853 = vpop.f32.mrb[0].mxu0
  %v1854 = vadd.f32 %v1766, %v1853
  %v1855 = vpop.f32.mrb[0].mxu0
  %1856 = vmatprep.mubr.bf16.mxu0 0
  %1857 = vmatmul.mubr.bf16.gmra.mrb[0].mxu0 %v1761
  %v1858 = vpop.f32.mrb[0].mxu0
  %v1859 = vadd.f32 %v1766, %v1858
  %v1860 = vpop.f32.mrb[0].mxu0
  %v1861 = vpop.f32.mrb[0].mxu0
  %v1862 = vpop.f32.mrb[0].mxu0
  %1863 = vdwg.mxu0
  %v1864 = vadd.f32 %v1575, %v1851
  %v1865 = vadd.f32 %v1576, %v1854
  %v1866 = vadd.f32 %v1577, %v1859
  %s1867 = scalar_lea.vmem %s9, 1
  %v1868 = vld [vmem:[%s1867] sm:$0x1]
  %s1869 = scalar_lea.vmem %s10, 1
  %v1870 = vld [vmem:[%s1869] sm:$0x1]
  %v1871 = vsel %vm627, %v1864, 0.0
  %1872 = vadd.xlane.f32.xlu0 %v1871
  %v1873 = vpop.xlane.xlu0 %1872
  %v1874 = vsel %vm627, %v1865, 0.0
  %1875 = vadd.xlane.f32.xlu0 %v1874
  %v1876 = vpop.xlane.xlu0 %1875
  %v1877 = vsel %vm627, %v1866, 0.0
  %1878 = vadd.xlane.f32.xlu0 %v1877
  %v1879 = vpop.xlane.xlu0 %1878
  %v1880 = vmul.f32 %v1873, %v637
  %v1881 = vmul.f32 %v1876, %v637
  %v1882 = vmul.f32 %v1879, %v637
  %v1883 = vsub.f32 %v1864, %v1880
  %v1884 = vsub.f32 %v1865, %v1881
  %v1885 = vsub.f32 %v1866, %v1882
  %v1886 = vmul.f32 %v1883, %v1883
  %v1887 = vmul.f32 %v1884, %v1884
  %v1888 = vmul.f32 %v1885, %v1885
  %v1889 = vsel %vm627, %v1886, 0.0
  %1890 = vadd.xlane.f32.xlu0 %v1889
  %v1891 = vpop.xlane.xlu0 %1890
  %v1892 = vsel %vm627, %v1887, 0.0
  %1893 = vadd.xlane.f32.xlu0 %v1892
  %v1894 = vpop.xlane.xlu0 %1893
  %v1895 = vsel %vm627, %v1888, 0.0
  %1896 = vadd.xlane.f32.xlu0 %v1895
  %v1897 = vpop.xlane.xlu0 %1896
  %v1898 = vmul.f32 %v1891, %v637
  %v1899 = vmul.f32 %v1894, %v637
  %v1900 = vmul.f32 %v1897, %v637
  %v1901 = vadd.f32 %v1898, 1e-05
  %v1902 = vadd.f32 %v1899, 1e-05
  %v1903 = vadd.f32 %v1900, 1e-05
  %v1904 = vrsqrt.pop %v1901
  %v1905 = vrsqrt.pop %v1902
  %v1906 = vrsqrt.pop %v1903
  %v1907 = vmul.f32 %v1883, %v1904
  %v1908 = vmul.f32 %v1884, %v1905
  %v1909 = vmul.f32 %v1885, %v1906
  %v1911 = vlaneseq
  %v1912 = vshrl.u32 %v1911, 7
  %v1913 = vsub.s32 0, %v1912
  %v1914 = vrot.slane %v1868, %v1913
  %v1916 = vmul.f32 %v1907, %v1914
  %v1917 = vmul.f32 %v1908, %v1914
  %v1918 = vmul.f32 %v1909, %v1914
  %v1920 = vlaneseq
  %v1921 = vshrl.u32 %v1920, 7
  %v1922 = vsub.s32 0, %v1921
  %v1923 = vrot.slane %v1870, %v1922
  %v1925 = vadd.f32 %v1916, %v1923
  %v1926 = vadd.f32 %v1917, %v1923
  %v1927 = vadd.f32 %v1918, %v1923
  %s1928 = scalar_lea.vmem %s11, 16
  %v1929 = vld [vmem:[%s1928] sm:$0xf]
  %v1930 = vld [vmem:[%s1928 + $0x4] sm:$0xf]
  %v1931 = vld [vmem:[%s1928 + $0x8] sm:$0xf]
  %v1932 = vld [vmem:[%s1928 + $0xc] sm:$0xf]
  %s1933 = scalar_lea.vmem %s12, 1
  %v1934 = vld [vmem:[%s1933] sm:$0x1]
  %v1935 = vpack.c.bf16 %v1926, %v1925
  %v1936 = vpack.c.bf16 %v1927, %v1927
  %v1938 = vlaneseq
  %v1939 = vshrl.u32 %v1938, 7
  %v1940 = vsub.s32 0, %v1939
  %v1941 = vrot.slane %v1934, %v1940
  %v1947 = vunpack.c.l.b16 %v1929
  %v1948 = vunpack.c.l.b16 %v1930
  %v1949 = vunpack.c.l.b16 %v1931
  %v1950 = vunpack.c.l.b16 %v1932
  %v1951 = vpack.c.b16 %v1948, %v1947
  %v1952 = vpack.c.b16 %v1950, %v1949
  %v1956 = vsel %vm627, %v1935, 0
  %v1959 = vsel %vm627, %v1936, 0
  %1961 = vmatprep.subr.bf16.mxu0 0
  %1962 = vmatpush1.bf16.msra.mxu0 %v1951
  %1963 = vmatprep.subr.bf16.mxu0 0
  %1964 = vmatpush1.bf16.msra.mxu0 %v1952
  %1965 = vmatprep.subr.bf16.mxu0 0
  %1966 = vmatpush1.bf16.msra.mxu0 0
  %1967 = vmatprep.subr.bf16.mxu0 0
  %1968 = vmatpush1.bf16.msra.mxu0 0
  %1969 = vmatprep.subr.bf16.mxu0 0
  %1970 = vmatpush1.bf16.msra.mxu0 0
  %1971 = vmatprep.subr.bf16.mxu0 0
  %1972 = vmatpush1.bf16.msra.mxu0 0
  %1973 = vmatprep.subr.bf16.mxu0 0
  %1974 = vmatpush1.bf16.msra.mxu0 0
  %1975 = vmatprep.subr.bf16.mxu0 0
  %1976 = vmatpush1.bf16.msra.mxu0 0
  %1977 = vmatprep.subr.bf16.mxu0 0
  %1978 = vmatpush1.bf16.msra.mxu0 0
  %1979 = vmatprep.subr.bf16.mxu0 0
  %1980 = vmatpush1.bf16.msra.mxu0 0
  %1981 = vmatprep.subr.bf16.mxu0 0
  %1982 = vmatpush1.bf16.msra.mxu0 0
  %1983 = vmatprep.subr.bf16.mxu0 0
  %1984 = vmatpush1.bf16.msra.mxu0 0
  %1985 = vmatprep.subr.bf16.mxu0 0
  %1986 = vmatpush1.bf16.msra.mxu0 0
  %1987 = vmatprep.subr.bf16.mxu0 0
  %1988 = vmatpush1.bf16.msra.mxu0 0
  %1989 = vmatprep.subr.bf16.mxu0 0
  %1990 = vmatpush1.bf16.msra.mxu0 0
  %1991 = vmatprep.subr.bf16.mxu0 0
  %1992 = vmatpush1.bf16.msra.mxu0 0
  %1993 = vmatprep.mubr.bf16.mxu0 0
  %1994 = vmatmul.mubr.bf16.gmra.mrb[0].mxu0 %v1956
  %v1995 = vpop.f32.mrb[0].mxu0
  %v1996 = vadd.f32 %v1941, %v1995
  %v1997 = vpop.f32.mrb[0].mxu0
  %v1998 = vpop.f32.mrb[0].mxu0
  %v1999 = vadd.f32 %v1941, %v1998
  %v2000 = vpop.f32.mrb[0].mxu0
  %2001 = vmatprep.mubr.bf16.mxu0 0
  %2002 = vmatmul.mubr.bf16.gmra.mrb[0].mxu0 %v1959
  %v2003 = vpop.f32.mrb[0].mxu0
  %v2004 = vadd.f32 %v1941, %v2003
  %v2005 = vpop.f32.mrb[0].mxu0
  %v2006 = vpop.f32.mrb[0].mxu0
  %v2007 = vpop.f32.mrb[0].mxu0
  %2008 = vdwg.mxu0
  %v2009 = vpack.c.bf16 %v1999, %v1996
  %v2010 = vpack.c.bf16 %v2004, %v2004
  %2013 = vrot.lane.b32.xlu0 %v2009, 96
  %v2014 = vpop.permute.xlu0 %2013
  %2015 = vrot.lane.b32.xlu0 %v2010, 96
  %v2016 = vpop.permute.xlu0 %2015
  %v2018 = vsel %vm773, %v2009, 0
  %v2021 = vsel %vm773, %v2010, 0
  %v2024 = vsel %vm773, %v2014, 0
  %v2027 = vsel %vm773, %v2016, 0
  %2029 = vmatprep.subr.bf16.mxu0 0
  %2030 = vmatpush1.bf16.xpose.msra.mxu0 %v2024
  %2031 = vmatprep.subr.bf16.mxu0 0
  %2032 = vmatpush1.bf16.xpose.msra.mxu0 %v2027
  %2033 = vmatprep.subr.bf16.mxu0 0
  %2034 = vmatpush1.bf16.xpose.msra.mxu0 0
  %2035 = vmatprep.subr.bf16.mxu0 0
  %2036 = vmatpush1.bf16.xpose.msra.mxu0 0
  %2037 = vmatprep.subr.bf16.mxu0 0
  %2038 = vmatpush1.bf16.xpose.msra.mxu0 0
  %2039 = vmatprep.subr.bf16.mxu0 0
  %2040 = vmatpush1.bf16.xpose.msra.mxu0 0
  %2041 = vmatprep.subr.bf16.mxu0 0
  %2042 = vmatpush1.bf16.xpose.msra.mxu0 0
  %2043 = vmatprep.subr.bf16.mxu0 0
  %2044 = vmatpush1.bf16.xpose.msra.mxu0 0
  %2045 = vmatprep.subr.bf16.mxu0 0
  %2046 = vmatpush1.bf16.xpose.msra.mxu0 0
  %2047 = vmatprep.subr.bf16.mxu0 0
  %2048 = vmatpush1.bf16.xpose.msra.mxu0 0
  %2049 = vmatprep.subr.bf16.mxu0 0
  %2050 = vmatpush1.bf16.xpose.msra.mxu0 0
  %2051 = vmatprep.subr.bf16.mxu0 0
  %2052 = vmatpush1.bf16.xpose.msra.mxu0 0
  %2053 = vmatprep.subr.bf16.mxu0 0
  %2054 = vmatpush1.bf16.xpose.msra.mxu0 0
  %2055 = vmatprep.subr.bf16.mxu0 0
  %2056 = vmatpush1.bf16.xpose.msra.mxu0 0
  %2057 = vmatprep.subr.bf16.mxu0 0
  %2058 = vmatpush1.bf16.xpose.msra.mxu0 0
  %2059 = vmatprep.subr.bf16.mxu0 0
  %2060 = vmatpush1.bf16.xpose.msra.mxu0 0
  %2061 = vmatprep.mubr.bf16.mxu0 0
  %2062 = vmatmul.mubr.bf16.gmra.mrb[0].mxu0 %v2018
  %v2063 = vpop.f32.mrb[0].mxu0
  %v2064 = vadd.f32 0.0, %v2063
  %v2065 = vpop.f32.mrb[0].mxu0
  %v2066 = vpop.f32.mrb[0].mxu0
  %v2067 = vadd.f32 0.0, %v2066
  %v2068 = vpop.f32.mrb[0].mxu0
  %2069 = vmatprep.mubr.bf16.mxu0 0
  %2070 = vmatmul.mubr.bf16.gmra.mrb[0].mxu0 %v2021
  %v2071 = vpop.f32.mrb[0].mxu0
  %v2072 = vadd.f32 0.0, %v2071
  %v2073 = vpop.f32.mrb[0].mxu0
  %v2074 = vpop.f32.mrb[0].mxu0
  %v2075 = vpop.f32.mrb[0].mxu0
  %2076 = vdwg.mxu0
  %v2077 = vmul.f32 %v2064, 0.35355338
  %v2078 = vmul.f32 %v2067, 0.35355338
  %v2079 = vmul.f32 %v2072, 0.35355338
  %v2080 = vadd.f32 %v2077, %v622
  %v2081 = vadd.f32 %v2078, %v623
  %v2082 = vadd.f32 %v2079, %v624
  %v2083 = vsel %vm840, %v2080, -inf
  %2084 = vmax.xlane.f32.xlu0 %v2083
  %v2085 = vpop.xlane.xlu0 %2084
  %v2086 = vsel %vm840, %v2081, -inf
  %2087 = vmax.xlane.f32.xlu0 %v2086
  %v2088 = vpop.xlane.xlu0 %2087
  %v2089 = vsel %vm840, %v2082, -inf
  %2090 = vmax.xlane.f32.xlu0 %v2089
  %v2091 = vpop.xlane.xlu0 %2090
  %v2092 = vsub.f32 %v2080, %v2085
  %v2093 = vsub.f32 %v2081, %v2088
  %v2094 = vsub.f32 %v2082, %v2091
  %v2095 = vmul.f32 %v2092, 1.442695
  %v2096 = vpow.pop %v2095
  %v2097 = vmul.f32 %v2093, 1.442695
  %v2098 = vpow.pop %v2097
  %v2099 = vmul.f32 %v2094, 1.442695
  %v2100 = vpow.pop %v2099
  %v2101 = vsel %vm840, %v2096, 0.0
  %2102 = vadd.xlane.f32.xlu0 %v2101
  %v2103 = vpop.xlane.xlu0 %2102
  %v2104 = vsel %vm840, %v2098, 0.0
  %2105 = vadd.xlane.f32.xlu0 %v2104
  %v2106 = vpop.xlane.xlu0 %2105
  %v2107 = vsel %vm840, %v2100, 0.0
  %2108 = vadd.xlane.f32.xlu0 %v2107
  %v2109 = vpop.xlane.xlu0 %2108
  %v2110 = vrcp.pop %v2103
  %v2111 = vrcp.pop %v2106
  %v2112 = vrcp.pop %v2109
  %v2113 = vmul.f32 %v2096, %v2110
  %v2114 = vmul.f32 %v2098, %v2111
  %v2115 = vmul.f32 %v2100, %v2112
  %v2116 = vpack.c.bf16 %v2114, %v2113
  %v2117 = vpack.c.bf16 %v2115, %v2115
  %2118 = vrot.lane.b32.xlu0 %v2009, 64
  %v2119 = vpop.permute.xlu0 %2118
  %2120 = vrot.lane.b32.xlu0 %v2010, 64
  %v2121 = vpop.permute.xlu0 %2120
  %v2124 = vsel %vm840, %v2116, 0
  %v2127 = vsel %vm840, %v2117, 0
  %v2130 = vsel %vm594, %v2121, 0
  %2132 = vmatprep.subr.bf16.mxu0 0
  %2133 = vmatpush1.bf16.msra.mxu0 %v2119
  %2134 = vmatprep.subr.bf16.mxu0 0
  %2135 = vmatpush1.bf16.msra.mxu0 %v2130
  %2136 = vmatprep.subr.bf16.mxu0 0
  %2137 = vmatpush1.bf16.msra.mxu0 0
  %2138 = vmatprep.subr.bf16.mxu0 0
  %2139 = vmatpush1.bf16.msra.mxu0 0
  %2140 = vmatprep.subr.bf16.mxu0 0
  %2141 = vmatpush1.bf16.msra.mxu0 0
  %2142 = vmatprep.subr.bf16.mxu0 0
  %2143 = vmatpush1.bf16.msra.mxu0 0
  %2144 = vmatprep.subr.bf16.mxu0 0
  %2145 = vmatpush1.bf16.msra.mxu0 0
  %2146 = vmatprep.subr.bf16.mxu0 0
  %2147 = vmatpush1.bf16.msra.mxu0 0
  %2148 = vmatprep.subr.bf16.mxu0 0
  %2149 = vmatpush1.bf16.msra.mxu0 0
  %2150 = vmatprep.subr.bf16.mxu0 0
  %2151 = vmatpush1.bf16.msra.mxu0 0
  %2152 = vmatprep.subr.bf16.mxu0 0
  %2153 = vmatpush1.bf16.msra.mxu0 0
  %2154 = vmatprep.subr.bf16.mxu0 0
  %2155 = vmatpush1.bf16.msra.mxu0 0
  %2156 = vmatprep.subr.bf16.mxu0 0
  %2157 = vmatpush1.bf16.msra.mxu0 0
  %2158 = vmatprep.subr.bf16.mxu0 0
  %2159 = vmatpush1.bf16.msra.mxu0 0
  %2160 = vmatprep.subr.bf16.mxu0 0
  %2161 = vmatpush1.bf16.msra.mxu0 0
  %2162 = vmatprep.subr.bf16.mxu0 0
  %2163 = vmatpush1.bf16.msra.mxu0 0
  %2164 = vmatprep.mubr.bf16.mxu0 0
  %2165 = vmatmul.mubr.bf16.gmra.mrb[0].mxu0 %v2124
  %v2166 = vpop.f32.mrb[0].mxu0
  %v2167 = vadd.f32 0.0, %v2166
  %v2168 = vpop.f32.mrb[0].mxu0
  %v2169 = vpop.f32.mrb[0].mxu0
  %v2170 = vadd.f32 0.0, %v2169
  %v2171 = vpop.f32.mrb[0].mxu0
  %2172 = vmatprep.mubr.bf16.mxu0 0
  %2173 = vmatmul.mubr.bf16.gmra.mrb[0].mxu0 %v2127
  %v2174 = vpop.f32.mrb[0].mxu0
  %v2175 = vadd.f32 0.0, %v2174
  %v2176 = vpop.f32.mrb[0].mxu0
  %v2177 = vpop.f32.mrb[0].mxu0
  %v2178 = vpop.f32.mrb[0].mxu0
  %2179 = vdwg.mxu0
  %2180 = vrot.lane.b32.xlu0 %v2009, 120
  %v2181 = vpop.permute.xlu0 %2180
  %2182 = vrot.lane.b32.xlu0 %v2010, 120
  %v2183 = vpop.permute.xlu0 %2182
  %2184 = vrot.lane.b32.xlu0 %v2009, 88
  %v2185 = vpop.permute.xlu0 %2184
  %2186 = vrot.lane.b32.xlu0 %v2010, 88
  %v2187 = vpop.permute.xlu0 %2186
  %v2189 = vsel %vm773, %v2181, 0
  %v2192 = vsel %vm773, %v2183, 0
  %v2195 = vsel %vm773, %v2185, 0
  %v2198 = vsel %vm773, %v2187, 0
  %2200 = vmatprep.subr.bf16.mxu0 0
  %2201 = vmatpush1.bf16.xpose.msra.mxu0 %v2195
  %2202 = vmatprep.subr.bf16.mxu0 0
  %2203 = vmatpush1.bf16.xpose.msra.mxu0 %v2198
  %2204 = vmatprep.subr.bf16.mxu0 0
  %2205 = vmatpush1.bf16.xpose.msra.mxu0 0
  %2206 = vmatprep.subr.bf16.mxu0 0
  %2207 = vmatpush1.bf16.xpose.msra.mxu0 0
  %2208 = vmatprep.subr.bf16.mxu0 0
  %2209 = vmatpush1.bf16.xpose.msra.mxu0 0
  %2210 = vmatprep.subr.bf16.mxu0 0
  %2211 = vmatpush1.bf16.xpose.msra.mxu0 0
  %2212 = vmatprep.subr.bf16.mxu0 0
  %2213 = vmatpush1.bf16.xpose.msra.mxu0 0
  %2214 = vmatprep.subr.bf16.mxu0 0
  %2215 = vmatpush1.bf16.xpose.msra.mxu0 0
  %2216 = vmatprep.subr.bf16.mxu0 0
  %2217 = vmatpush1.bf16.xpose.msra.mxu0 0
  %2218 = vmatprep.subr.bf16.mxu0 0
  %2219 = vmatpush1.bf16.xpose.msra.mxu0 0
  %2220 = vmatprep.subr.bf16.mxu0 0
  %2221 = vmatpush1.bf16.xpose.msra.mxu0 0
  %2222 = vmatprep.subr.bf16.mxu0 0
  %2223 = vmatpush1.bf16.xpose.msra.mxu0 0
  %2224 = vmatprep.subr.bf16.mxu0 0
  %2225 = vmatpush1.bf16.xpose.msra.mxu0 0
  %2226 = vmatprep.subr.bf16.mxu0 0
  %2227 = vmatpush1.bf16.xpose.msra.mxu0 0
  %2228 = vmatprep.subr.bf16.mxu0 0
  %2229 = vmatpush1.bf16.xpose.msra.mxu0 0
  %2230 = vmatprep.subr.bf16.mxu0 0
  %2231 = vmatpush1.bf16.xpose.msra.mxu0 0
  %2232 = vmatprep.mubr.bf16.mxu0 0
  %2233 = vmatmul.mubr.bf16.gmra.mrb[0].mxu0 %v2189
  %v2234 = vpop.f32.mrb[0].mxu0
  %v2235 = vadd.f32 0.0, %v2234
  %v2236 = vpop.f32.mrb[0].mxu0
  %v2237 = vpop.f32.mrb[0].mxu0
  %v2238 = vadd.f32 0.0, %v2237
  %v2239 = vpop.f32.mrb[0].mxu0
  %2240 = vmatprep.mubr.bf16.mxu0 0
  %2241 = vmatmul.mubr.bf16.gmra.mrb[0].mxu0 %v2192
  %v2242 = vpop.f32.mrb[0].mxu0
  %v2243 = vadd.f32 0.0, %v2242
  %v2244 = vpop.f32.mrb[0].mxu0
  %v2245 = vpop.f32.mrb[0].mxu0
  %v2246 = vpop.f32.mrb[0].mxu0
  %2247 = vdwg.mxu0
  %v2248 = vmul.f32 %v2235, 0.35355338
  %v2249 = vmul.f32 %v2238, 0.35355338
  %v2250 = vmul.f32 %v2243, 0.35355338
  %v2251 = vadd.f32 %v2248, %v622
  %v2252 = vadd.f32 %v2249, %v623
  %v2253 = vadd.f32 %v2250, %v624
  %v2254 = vsel %vm840, %v2251, -inf
  %2255 = vmax.xlane.f32.xlu0 %v2254
  %v2256 = vpop.xlane.xlu0 %2255
  %v2257 = vsel %vm840, %v2252, -inf
  %2258 = vmax.xlane.f32.xlu0 %v2257
  %v2259 = vpop.xlane.xlu0 %2258
  %v2260 = vsel %vm840, %v2253, -inf
  %2261 = vmax.xlane.f32.xlu0 %v2260
  %v2262 = vpop.xlane.xlu0 %2261
  %v2263 = vsub.f32 %v2251, %v2256
  %v2264 = vsub.f32 %v2252, %v2259
  %v2265 = vsub.f32 %v2253, %v2262
  %v2266 = vmul.f32 %v2263, 1.442695
  %v2267 = vpow.pop %v2266
  %v2268 = vmul.f32 %v2264, 1.442695
  %v2269 = vpow.pop %v2268
  %v2270 = vmul.f32 %v2265, 1.442695
  %v2271 = vpow.pop %v2270
  %v2272 = vsel %vm840, %v2267, 0.0
  %2273 = vadd.xlane.f32.xlu0 %v2272
  %v2274 = vpop.xlane.xlu0 %2273
  %v2275 = vsel %vm840, %v2269, 0.0
  %2276 = vadd.xlane.f32.xlu0 %v2275
  %v2277 = vpop.xlane.xlu0 %2276
  %v2278 = vsel %vm840, %v2271, 0.0
  %2279 = vadd.xlane.f32.xlu0 %v2278
  %v2280 = vpop.xlane.xlu0 %2279
  %v2281 = vrcp.pop %v2274
  %v2282 = vrcp.pop %v2277
  %v2283 = vrcp.pop %v2280
  %v2284 = vmul.f32 %v2267, %v2281
  %v2285 = vmul.f32 %v2269, %v2282
  %v2286 = vmul.f32 %v2271, %v2283
  %v2287 = vpack.c.bf16 %v2285, %v2284
  %v2288 = vpack.c.bf16 %v2286, %v2286
  %2289 = vrot.lane.b32.xlu0 %v2009, 56
  %v2290 = vpop.permute.xlu0 %2289
  %2291 = vrot.lane.b32.xlu0 %v2010, 56
  %v2292 = vpop.permute.xlu0 %2291
  %v2295 = vsel %vm840, %v2287, 0
  %v2298 = vsel %vm840, %v2288, 0
  %v2301 = vsel %vm594, %v2292, 0
  %2303 = vmatprep.subr.bf16.mxu0 0
  %2304 = vmatpush1.bf16.msra.mxu0 %v2290
  %2305 = vmatprep.subr.bf16.mxu0 0
  %2306 = vmatpush1.bf16.msra.mxu0 %v2301
  %2307 = vmatprep.subr.bf16.mxu0 0
  %2308 = vmatpush1.bf16.msra.mxu0 0
  %2309 = vmatprep.subr.bf16.mxu0 0
  %2310 = vmatpush1.bf16.msra.mxu0 0
  %2311 = vmatprep.subr.bf16.mxu0 0
  %2312 = vmatpush1.bf16.msra.mxu0 0
  %2313 = vmatprep.subr.bf16.mxu0 0
  %2314 = vmatpush1.bf16.msra.mxu0 0
  %2315 = vmatprep.subr.bf16.mxu0 0
  %2316 = vmatpush1.bf16.msra.mxu0 0
  %2317 = vmatprep.subr.bf16.mxu0 0
  %2318 = vmatpush1.bf16.msra.mxu0 0
  %2319 = vmatprep.subr.bf16.mxu0 0
  %2320 = vmatpush1.bf16.msra.mxu0 0
  %2321 = vmatprep.subr.bf16.mxu0 0
  %2322 = vmatpush1.bf16.msra.mxu0 0
  %2323 = vmatprep.subr.bf16.mxu0 0
  %2324 = vmatpush1.bf16.msra.mxu0 0
  %2325 = vmatprep.subr.bf16.mxu0 0
  %2326 = vmatpush1.bf16.msra.mxu0 0
  %2327 = vmatprep.subr.bf16.mxu0 0
  %2328 = vmatpush1.bf16.msra.mxu0 0
  %2329 = vmatprep.subr.bf16.mxu0 0
  %2330 = vmatpush1.bf16.msra.mxu0 0
  %2331 = vmatprep.subr.bf16.mxu0 0
  %2332 = vmatpush1.bf16.msra.mxu0 0
  %2333 = vmatprep.subr.bf16.mxu0 0
  %2334 = vmatpush1.bf16.msra.mxu0 0
  %2335 = vmatprep.mubr.bf16.mxu0 0
  %2336 = vmatmul.mubr.bf16.gmra.mrb[0].mxu0 %v2295
  %v2337 = vpop.f32.mrb[0].mxu0
  %v2338 = vadd.f32 0.0, %v2337
  %v2339 = vpop.f32.mrb[0].mxu0
  %v2340 = vpop.f32.mrb[0].mxu0
  %v2341 = vadd.f32 0.0, %v2340
  %v2342 = vpop.f32.mrb[0].mxu0
  %2343 = vmatprep.mubr.bf16.mxu0 0
  %2344 = vmatmul.mubr.bf16.gmra.mrb[0].mxu0 %v2298
  %v2345 = vpop.f32.mrb[0].mxu0
  %v2346 = vadd.f32 0.0, %v2345
  %v2347 = vpop.f32.mrb[0].mxu0
  %v2348 = vpop.f32.mrb[0].mxu0
  %v2349 = vpop.f32.mrb[0].mxu0
  %2350 = vdwg.mxu0
  %2351 = vrot.lane.b32.xlu0 %v2009, 112
  %v2352 = vpop.permute.xlu0 %2351
  %2353 = vrot.lane.b32.xlu0 %v2010, 112
  %v2354 = vpop.permute.xlu0 %2353
  %2355 = vrot.lane.b32.xlu0 %v2009, 80
  %v2356 = vpop.permute.xlu0 %2355
  %2357 = vrot.lane.b32.xlu0 %v2010, 80
  %v2358 = vpop.permute.xlu0 %2357
  %v2360 = vsel %vm773, %v2352, 0
  %v2363 = vsel %vm773, %v2354, 0
  %v2366 = vsel %vm773, %v2356, 0
  %v2369 = vsel %vm773, %v2358, 0
  %2371 = vmatprep.subr.bf16.mxu0 0
  %2372 = vmatpush1.bf16.xpose.msra.mxu0 %v2366
  %2373 = vmatprep.subr.bf16.mxu0 0
  %2374 = vmatpush1.bf16.xpose.msra.mxu0 %v2369
  %2375 = vmatprep.subr.bf16.mxu0 0
  %2376 = vmatpush1.bf16.xpose.msra.mxu0 0
  %2377 = vmatprep.subr.bf16.mxu0 0
  %2378 = vmatpush1.bf16.xpose.msra.mxu0 0
  %2379 = vmatprep.subr.bf16.mxu0 0
  %2380 = vmatpush1.bf16.xpose.msra.mxu0 0
  %2381 = vmatprep.subr.bf16.mxu0 0
  %2382 = vmatpush1.bf16.xpose.msra.mxu0 0
  %2383 = vmatprep.subr.bf16.mxu0 0
  %2384 = vmatpush1.bf16.xpose.msra.mxu0 0
  %2385 = vmatprep.subr.bf16.mxu0 0
  %2386 = vmatpush1.bf16.xpose.msra.mxu0 0
  %2387 = vmatprep.subr.bf16.mxu0 0
  %2388 = vmatpush1.bf16.xpose.msra.mxu0 0
  %2389 = vmatprep.subr.bf16.mxu0 0
  %2390 = vmatpush1.bf16.xpose.msra.mxu0 0
  %2391 = vmatprep.subr.bf16.mxu0 0
  %2392 = vmatpush1.bf16.xpose.msra.mxu0 0
  %2393 = vmatprep.subr.bf16.mxu0 0
  %2394 = vmatpush1.bf16.xpose.msra.mxu0 0
  %2395 = vmatprep.subr.bf16.mxu0 0
  %2396 = vmatpush1.bf16.xpose.msra.mxu0 0
  %2397 = vmatprep.subr.bf16.mxu0 0
  %2398 = vmatpush1.bf16.xpose.msra.mxu0 0
  %2399 = vmatprep.subr.bf16.mxu0 0
  %2400 = vmatpush1.bf16.xpose.msra.mxu0 0
  %2401 = vmatprep.subr.bf16.mxu0 0
  %2402 = vmatpush1.bf16.xpose.msra.mxu0 0
  %2403 = vmatprep.mubr.bf16.mxu0 0
  %2404 = vmatmul.mubr.bf16.gmra.mrb[0].mxu0 %v2360
  %v2405 = vpop.f32.mrb[0].mxu0
  %v2406 = vadd.f32 0.0, %v2405
  %v2407 = vpop.f32.mrb[0].mxu0
  %v2408 = vpop.f32.mrb[0].mxu0
  %v2409 = vadd.f32 0.0, %v2408
  %v2410 = vpop.f32.mrb[0].mxu0
  %2411 = vmatprep.mubr.bf16.mxu0 0
  %2412 = vmatmul.mubr.bf16.gmra.mrb[0].mxu0 %v2363
  %v2413 = vpop.f32.mrb[0].mxu0
  %v2414 = vadd.f32 0.0, %v2413
  %v2415 = vpop.f32.mrb[0].mxu0
  %v2416 = vpop.f32.mrb[0].mxu0
  %v2417 = vpop.f32.mrb[0].mxu0
  %2418 = vdwg.mxu0
  %v2419 = vmul.f32 %v2406, 0.35355338
  %v2420 = vmul.f32 %v2409, 0.35355338
  %v2421 = vmul.f32 %v2414, 0.35355338
  %v2422 = vadd.f32 %v2419, %v622
  %v2423 = vadd.f32 %v2420, %v623
  %v2424 = vadd.f32 %v2421, %v624
  %v2425 = vsel %vm840, %v2422, -inf
  %2426 = vmax.xlane.f32.xlu0 %v2425
  %v2427 = vpop.xlane.xlu0 %2426
  %v2428 = vsel %vm840, %v2423, -inf
  %2429 = vmax.xlane.f32.xlu0 %v2428
  %v2430 = vpop.xlane.xlu0 %2429
  %v2431 = vsel %vm840, %v2424, -inf
  %2432 = vmax.xlane.f32.xlu0 %v2431
  %v2433 = vpop.xlane.xlu0 %2432
  %v2434 = vsub.f32 %v2422, %v2427
  %v2435 = vsub.f32 %v2423, %v2430
  %v2436 = vsub.f32 %v2424, %v2433
  %v2437 = vmul.f32 %v2434, 1.442695
  %v2438 = vpow.pop %v2437
  %v2439 = vmul.f32 %v2435, 1.442695
  %v2440 = vpow.pop %v2439
  %v2441 = vmul.f32 %v2436, 1.442695
  %v2442 = vpow.pop %v2441
  %v2443 = vsel %vm840, %v2438, 0.0
  %2444 = vadd.xlane.f32.xlu0 %v2443
  %v2445 = vpop.xlane.xlu0 %2444
  %v2446 = vsel %vm840, %v2440, 0.0
  %2447 = vadd.xlane.f32.xlu0 %v2446
  %v2448 = vpop.xlane.xlu0 %2447
  %v2449 = vsel %vm840, %v2442, 0.0
  %2450 = vadd.xlane.f32.xlu0 %v2449
  %v2451 = vpop.xlane.xlu0 %2450
  %v2452 = vrcp.pop %v2445
  %v2453 = vrcp.pop %v2448
  %v2454 = vrcp.pop %v2451
  %v2455 = vmul.f32 %v2438, %v2452
  %v2456 = vmul.f32 %v2440, %v2453
  %v2457 = vmul.f32 %v2442, %v2454
  %v2458 = vpack.c.bf16 %v2456, %v2455
  %v2459 = vpack.c.bf16 %v2457, %v2457
  %2460 = vrot.lane.b32.xlu0 %v2009, 48
  %v2461 = vpop.permute.xlu0 %2460
  %2462 = vrot.lane.b32.xlu0 %v2010, 48
  %v2463 = vpop.permute.xlu0 %2462
  %v2466 = vsel %vm840, %v2458, 0
  %v2469 = vsel %vm840, %v2459, 0
  %v2472 = vsel %vm594, %v2463, 0
  %2474 = vmatprep.subr.bf16.mxu0 0
  %2475 = vmatpush1.bf16.msra.mxu0 %v2461
  %2476 = vmatprep.subr.bf16.mxu0 0
  %2477 = vmatpush1.bf16.msra.mxu0 %v2472
  %2478 = vmatprep.subr.bf16.mxu0 0
  %2479 = vmatpush1.bf16.msra.mxu0 0
  %2480 = vmatprep.subr.bf16.mxu0 0
  %2481 = vmatpush1.bf16.msra.mxu0 0
  %2482 = vmatprep.subr.bf16.mxu0 0
  %2483 = vmatpush1.bf16.msra.mxu0 0
  %2484 = vmatprep.subr.bf16.mxu0 0
  %2485 = vmatpush1.bf16.msra.mxu0 0
  %2486 = vmatprep.subr.bf16.mxu0 0
  %2487 = vmatpush1.bf16.msra.mxu0 0
  %2488 = vmatprep.subr.bf16.mxu0 0
  %2489 = vmatpush1.bf16.msra.mxu0 0
  %2490 = vmatprep.subr.bf16.mxu0 0
  %2491 = vmatpush1.bf16.msra.mxu0 0
  %2492 = vmatprep.subr.bf16.mxu0 0
  %2493 = vmatpush1.bf16.msra.mxu0 0
  %2494 = vmatprep.subr.bf16.mxu0 0
  %2495 = vmatpush1.bf16.msra.mxu0 0
  %2496 = vmatprep.subr.bf16.mxu0 0
  %2497 = vmatpush1.bf16.msra.mxu0 0
  %2498 = vmatprep.subr.bf16.mxu0 0
  %2499 = vmatpush1.bf16.msra.mxu0 0
  %2500 = vmatprep.subr.bf16.mxu0 0
  %2501 = vmatpush1.bf16.msra.mxu0 0
  %2502 = vmatprep.subr.bf16.mxu0 0
  %2503 = vmatpush1.bf16.msra.mxu0 0
  %2504 = vmatprep.subr.bf16.mxu0 0
  %2505 = vmatpush1.bf16.msra.mxu0 0
  %2506 = vmatprep.mubr.bf16.mxu0 0
  %2507 = vmatmul.mubr.bf16.gmra.mrb[0].mxu0 %v2466
  %v2508 = vpop.f32.mrb[0].mxu0
  %v2509 = vadd.f32 0.0, %v2508
  %v2510 = vpop.f32.mrb[0].mxu0
  %v2511 = vpop.f32.mrb[0].mxu0
  %v2512 = vadd.f32 0.0, %v2511
  %v2513 = vpop.f32.mrb[0].mxu0
  %2514 = vmatprep.mubr.bf16.mxu0 0
  %2515 = vmatmul.mubr.bf16.gmra.mrb[0].mxu0 %v2469
  %v2516 = vpop.f32.mrb[0].mxu0
  %v2517 = vadd.f32 0.0, %v2516
  %v2518 = vpop.f32.mrb[0].mxu0
  %v2519 = vpop.f32.mrb[0].mxu0
  %v2520 = vpop.f32.mrb[0].mxu0
  %2521 = vdwg.mxu0
  %2522 = vrot.lane.b32.xlu0 %v2009, 104
  %v2523 = vpop.permute.xlu0 %2522
  %2524 = vrot.lane.b32.xlu0 %v2010, 104
  %v2525 = vpop.permute.xlu0 %2524
  %2526 = vrot.lane.b32.xlu0 %v2009, 72
  %v2527 = vpop.permute.xlu0 %2526
  %2528 = vrot.lane.b32.xlu0 %v2010, 72
  %v2529 = vpop.permute.xlu0 %2528
  %v2531 = vsel %vm773, %v2523, 0
  %v2534 = vsel %vm773, %v2525, 0
  %v2537 = vsel %vm773, %v2527, 0
  %v2540 = vsel %vm773, %v2529, 0
  %2542 = vmatprep.subr.bf16.mxu0 0
  %2543 = vmatpush1.bf16.xpose.msra.mxu0 %v2537
  %2544 = vmatprep.subr.bf16.mxu0 0
  %2545 = vmatpush1.bf16.xpose.msra.mxu0 %v2540
  %2546 = vmatprep.subr.bf16.mxu0 0
  %2547 = vmatpush1.bf16.xpose.msra.mxu0 0
  %2548 = vmatprep.subr.bf16.mxu0 0
  %2549 = vmatpush1.bf16.xpose.msra.mxu0 0
  %2550 = vmatprep.subr.bf16.mxu0 0
  %2551 = vmatpush1.bf16.xpose.msra.mxu0 0
  %2552 = vmatprep.subr.bf16.mxu0 0
  %2553 = vmatpush1.bf16.xpose.msra.mxu0 0
  %2554 = vmatprep.subr.bf16.mxu0 0
  %2555 = vmatpush1.bf16.xpose.msra.mxu0 0
  %2556 = vmatprep.subr.bf16.mxu0 0
  %2557 = vmatpush1.bf16.xpose.msra.mxu0 0
  %2558 = vmatprep.subr.bf16.mxu0 0
  %2559 = vmatpush1.bf16.xpose.msra.mxu0 0
  %2560 = vmatprep.subr.bf16.mxu0 0
  %2561 = vmatpush1.bf16.xpose.msra.mxu0 0
  %2562 = vmatprep.subr.bf16.mxu0 0
  %2563 = vmatpush1.bf16.xpose.msra.mxu0 0
  %2564 = vmatprep.subr.bf16.mxu0 0
  %2565 = vmatpush1.bf16.xpose.msra.mxu0 0
  %2566 = vmatprep.subr.bf16.mxu0 0
  %2567 = vmatpush1.bf16.xpose.msra.mxu0 0
  %2568 = vmatprep.subr.bf16.mxu0 0
  %2569 = vmatpush1.bf16.xpose.msra.mxu0 0
  %2570 = vmatprep.subr.bf16.mxu0 0
  %2571 = vmatpush1.bf16.xpose.msra.mxu0 0
  %2572 = vmatprep.subr.bf16.mxu0 0
  %2573 = vmatpush1.bf16.xpose.msra.mxu0 0
  %2574 = vmatprep.mubr.bf16.mxu0 0
  %2575 = vmatmul.mubr.bf16.gmra.mrb[0].mxu0 %v2531
  %v2576 = vpop.f32.mrb[0].mxu0
  %v2577 = vadd.f32 0.0, %v2576
  %v2578 = vpop.f32.mrb[0].mxu0
  %v2579 = vpop.f32.mrb[0].mxu0
  %v2580 = vadd.f32 0.0, %v2579
  %v2581 = vpop.f32.mrb[0].mxu0
  %2582 = vmatprep.mubr.bf16.mxu0 0
  %2583 = vmatmul.mubr.bf16.gmra.mrb[0].mxu0 %v2534
  %v2584 = vpop.f32.mrb[0].mxu0
  %v2585 = vadd.f32 0.0, %v2584
  %v2586 = vpop.f32.mrb[0].mxu0
  %v2587 = vpop.f32.mrb[0].mxu0
  %v2588 = vpop.f32.mrb[0].mxu0
  %2589 = vdwg.mxu0
  %v2590 = vmul.f32 %v2577, 0.35355338
  %v2591 = vmul.f32 %v2580, 0.35355338
  %v2592 = vmul.f32 %v2585, 0.35355338
  %v2593 = vadd.f32 %v2590, %v622
  %v2594 = vadd.f32 %v2591, %v623
  %v2595 = vadd.f32 %v2592, %v624
  %v2596 = vsel %vm840, %v2593, -inf
  %2597 = vmax.xlane.f32.xlu0 %v2596
  %v2598 = vpop.xlane.xlu0 %2597
  %v2599 = vsel %vm840, %v2594, -inf
  %2600 = vmax.xlane.f32.xlu0 %v2599
  %v2601 = vpop.xlane.xlu0 %2600
  %v2602 = vsel %vm840, %v2595, -inf
  %2603 = vmax.xlane.f32.xlu0 %v2602
  %v2604 = vpop.xlane.xlu0 %2603
  %v2605 = vsub.f32 %v2593, %v2598
  %v2606 = vsub.f32 %v2594, %v2601
  %v2607 = vsub.f32 %v2595, %v2604
  %v2608 = vmul.f32 %v2605, 1.442695
  %v2609 = vpow.pop %v2608
  %v2610 = vmul.f32 %v2606, 1.442695
  %v2611 = vpow.pop %v2610
  %v2612 = vmul.f32 %v2607, 1.442695
  %v2613 = vpow.pop %v2612
  %v2614 = vsel %vm840, %v2609, 0.0
  %2615 = vadd.xlane.f32.xlu0 %v2614
  %v2616 = vpop.xlane.xlu0 %2615
  %v2617 = vsel %vm840, %v2611, 0.0
  %2618 = vadd.xlane.f32.xlu0 %v2617
  %v2619 = vpop.xlane.xlu0 %2618
  %v2620 = vsel %vm840, %v2613, 0.0
  %2621 = vadd.xlane.f32.xlu0 %v2620
  %v2622 = vpop.xlane.xlu0 %2621
  %v2623 = vrcp.pop %v2616
  %v2624 = vrcp.pop %v2619
  %v2625 = vrcp.pop %v2622
  %v2626 = vmul.f32 %v2609, %v2623
  %v2627 = vmul.f32 %v2611, %v2624
  %v2628 = vmul.f32 %v2613, %v2625
  %v2629 = vpack.c.bf16 %v2627, %v2626
  %v2630 = vpack.c.bf16 %v2628, %v2628
  %2631 = vrot.lane.b32.xlu0 %v2009, 40
  %v2632 = vpop.permute.xlu0 %2631
  %2633 = vrot.lane.b32.xlu0 %v2010, 40
  %v2634 = vpop.permute.xlu0 %2633
  %v2637 = vsel %vm840, %v2629, 0
  %v2640 = vsel %vm840, %v2630, 0
  %v2643 = vsel %vm594, %v2634, 0
  %2645 = vmatprep.subr.bf16.mxu0 0
  %2646 = vmatpush1.bf16.msra.mxu0 %v2632
  %2647 = vmatprep.subr.bf16.mxu0 0
  %2648 = vmatpush1.bf16.msra.mxu0 %v2643
  %2649 = vmatprep.subr.bf16.mxu0 0
  %2650 = vmatpush1.bf16.msra.mxu0 0
  %2651 = vmatprep.subr.bf16.mxu0 0
  %2652 = vmatpush1.bf16.msra.mxu0 0
  %2653 = vmatprep.subr.bf16.mxu0 0
  %2654 = vmatpush1.bf16.msra.mxu0 0
  %2655 = vmatprep.subr.bf16.mxu0 0
  %2656 = vmatpush1.bf16.msra.mxu0 0
  %2657 = vmatprep.subr.bf16.mxu0 0
  %2658 = vmatpush1.bf16.msra.mxu0 0
  %2659 = vmatprep.subr.bf16.mxu0 0
  %2660 = vmatpush1.bf16.msra.mxu0 0
  %2661 = vmatprep.subr.bf16.mxu0 0
  %2662 = vmatpush1.bf16.msra.mxu0 0
  %2663 = vmatprep.subr.bf16.mxu0 0
  %2664 = vmatpush1.bf16.msra.mxu0 0
  %2665 = vmatprep.subr.bf16.mxu0 0
  %2666 = vmatpush1.bf16.msra.mxu0 0
  %2667 = vmatprep.subr.bf16.mxu0 0
  %2668 = vmatpush1.bf16.msra.mxu0 0
  %2669 = vmatprep.subr.bf16.mxu0 0
  %2670 = vmatpush1.bf16.msra.mxu0 0
  %2671 = vmatprep.subr.bf16.mxu0 0
  %2672 = vmatpush1.bf16.msra.mxu0 0
  %2673 = vmatprep.subr.bf16.mxu0 0
  %2674 = vmatpush1.bf16.msra.mxu0 0
  %2675 = vmatprep.subr.bf16.mxu0 0
  %2676 = vmatpush1.bf16.msra.mxu0 0
  %2677 = vmatprep.mubr.bf16.mxu0 0
  %2678 = vmatmul.mubr.bf16.gmra.mrb[0].mxu0 %v2637
  %v2679 = vpop.f32.mrb[0].mxu0
  %v2680 = vadd.f32 0.0, %v2679
  %v2681 = vpop.f32.mrb[0].mxu0
  %v2682 = vpop.f32.mrb[0].mxu0
  %v2683 = vadd.f32 0.0, %v2682
  %v2684 = vpop.f32.mrb[0].mxu0
  %2685 = vmatprep.mubr.bf16.mxu0 0
  %2686 = vmatmul.mubr.bf16.gmra.mrb[0].mxu0 %v2640
  %v2687 = vpop.f32.mrb[0].mxu0
  %v2688 = vadd.f32 0.0, %v2687
  %v2689 = vpop.f32.mrb[0].mxu0
  %v2690 = vpop.f32.mrb[0].mxu0
  %v2691 = vpop.f32.mrb[0].mxu0
  %2692 = vdwg.mxu0
  %2696 = vrot.lane.b32.xlu0 %v2338, 8
  %v2697 = vpop.permute.xlu0 %2696
  %2698 = vrot.lane.b32.xlu0 %v2341, 8
  %v2699 = vpop.permute.xlu0 %2698
  %2700 = vrot.lane.b32.xlu0 %v2346, 8
  %v2701 = vpop.permute.xlu0 %2700
  %2708 = vrot.lane.b32.xlu0 %v2509, 16
  %v2709 = vpop.permute.xlu0 %2708
  %2710 = vrot.lane.b32.xlu0 %v2512, 16
  %v2711 = vpop.permute.xlu0 %2710
  %2712 = vrot.lane.b32.xlu0 %v2517, 16
  %v2713 = vpop.permute.xlu0 %2712
  %2720 = vrot.lane.b32.xlu0 %v2680, 24
  %v2721 = vpop.permute.xlu0 %2720
  %2722 = vrot.lane.b32.xlu0 %v2683, 24
  %v2723 = vpop.permute.xlu0 %2722
  %2724 = vrot.lane.b32.xlu0 %v2688, 24
  %v2725 = vpop.permute.xlu0 %2724
  %v2729 = vsel %vm773, %v2167, %v2697
  %v2730 = vsel %vm773, %v2170, %v2699
  %v2731 = vsel %vm773, %v2175, %v2701
  %v2732 = vsel %vm202, %v2729, %v2709
  %v2733 = vsel %vm202, %v2730, %v2711
  %v2734 = vsel %vm202, %v2731, %v2713
  %v2735 = vsel %vm840, %v2732, %v2721
  %v2736 = vsel %vm840, %v2733, %v2723
  %v2737 = vsel %vm840, %v2734, %v2725
  %s2738 = scalar_lea.vmem %s13, 16
  %v2739 = vld [vmem:[%s2738] sm:$0xf]
  %v2740 = vld [vmem:[%s2738 + $0x4] sm:$0xf]
  %v2741 = vld [vmem:[%s2738 + $0x8] sm:$0xf]
  %v2742 = vld [vmem:[%s2738 + $0xc] sm:$0xf]
  %s2743 = scalar_lea.vmem %s14, 1
  %v2744 = vld [vmem:[%s2743] sm:$0x1]
  %v2745 = vpack.c.bf16 %v2736, %v2735
  %v2746 = vpack.c.bf16 %v2737, %v2737
  %v2748 = vlaneseq
  %v2749 = vshrl.u32 %v2748, 7
  %v2750 = vsub.s32 0, %v2749
  %v2751 = vrot.slane %v2744, %v2750
  %v2757 = vunpack.c.l.b16 %v2739
  %v2758 = vunpack.c.l.b16 %v2740
  %v2759 = vunpack.c.l.b16 %v2741
  %v2760 = vunpack.c.l.b16 %v2742
  %v2761 = vpack.c.b16 %v2758, %v2757
  %v2762 = vpack.c.b16 %v2760, %v2759
  %v2766 = vsel %vm627, %v2745, 0
  %v2769 = vsel %vm627, %v2746, 0
  %2771 = vmatprep.subr.bf16.mxu0 0
  %2772 = vmatpush1.bf16.msra.mxu0 %v2761
  %2773 = vmatprep.subr.bf16.mxu0 0
  %2774 = vmatpush1.bf16.msra.mxu0 %v2762
  %2775 = vmatprep.subr.bf16.mxu0 0
  %2776 = vmatpush1.bf16.msra.mxu0 0
  %2777 = vmatprep.subr.bf16.mxu0 0
  %2778 = vmatpush1.bf16.msra.mxu0 0
  %2779 = vmatprep.subr.bf16.mxu0 0
  %2780 = vmatpush1.bf16.msra.mxu0 0
  %2781 = vmatprep.subr.bf16.mxu0 0
  %2782 = vmatpush1.bf16.msra.mxu0 0
  %2783 = vmatprep.subr.bf16.mxu0 0
  %2784 = vmatpush1.bf16.msra.mxu0 0
  %2785 = vmatprep.subr.bf16.mxu0 0
  %2786 = vmatpush1.bf16.msra.mxu0 0
  %2787 = vmatprep.subr.bf16.mxu0 0
  %2788 = vmatpush1.bf16.msra.mxu0 0
  %2789 = vmatprep.subr.bf16.mxu0 0
  %2790 = vmatpush1.bf16.msra.mxu0 0
  %2791 = vmatprep.subr.bf16.mxu0 0
  %2792 = vmatpush1.bf16.msra.mxu0 0
  %2793 = vmatprep.subr.bf16.mxu0 0
  %2794 = vmatpush1.bf16.msra.mxu0 0
  %2795 = vmatprep.subr.bf16.mxu0 0
  %2796 = vmatpush1.bf16.msra.mxu0 0
  %2797 = vmatprep.subr.bf16.mxu0 0
  %2798 = vmatpush1.bf16.msra.mxu0 0
  %2799 = vmatprep.subr.bf16.mxu0 0
  %2800 = vmatpush1.bf16.msra.mxu0 0
  %2801 = vmatprep.subr.bf16.mxu0 0
  %2802 = vmatpush1.bf16.msra.mxu0 0
  %2803 = vmatprep.mubr.bf16.mxu0 0
  %2804 = vmatmul.mubr.bf16.gmra.mrb[0].mxu0 %v2766
  %v2805 = vpop.f32.mrb[0].mxu0
  %v2806 = vadd.f32 %v2751, %v2805
  %v2807 = vpop.f32.mrb[0].mxu0
  %v2808 = vpop.f32.mrb[0].mxu0
  %v2809 = vadd.f32 %v2751, %v2808
  %v2810 = vpop.f32.mrb[0].mxu0
  %2811 = vmatprep.mubr.bf16.mxu0 0
  %2812 = vmatmul.mubr.bf16.gmra.mrb[0].mxu0 %v2769
  %v2813 = vpop.f32.mrb[0].mxu0
  %v2814 = vadd.f32 %v2751, %v2813
  %v2815 = vpop.f32.mrb[0].mxu0
  %v2816 = vpop.f32.mrb[0].mxu0
  %v2817 = vpop.f32.mrb[0].mxu0
  %2818 = vdwg.mxu0
  %v2819 = vadd.f32 %v1864, %v2806
  %v2820 = vadd.f32 %v1865, %v2809
  %v2821 = vadd.f32 %v1866, %v2814
  %s2822 = scalar_lea.vmem %s15, 1
  %v2823 = vld [vmem:[%s2822] sm:$0x1]
  %s2824 = scalar_lea.vmem %s16, 1
  %v2825 = vld [vmem:[%s2824] sm:$0x1]
  %v2826 = vsel %vm627, %v2819, 0.0
  %2827 = vadd.xlane.f32.xlu0 %v2826
  %v2828 = vpop.xlane.xlu0 %2827
  %v2829 = vsel %vm627, %v2820, 0.0
  %2830 = vadd.xlane.f32.xlu0 %v2829
  %v2831 = vpop.xlane.xlu0 %2830
  %v2832 = vsel %vm627, %v2821, 0.0
  %2833 = vadd.xlane.f32.xlu0 %v2832
  %v2834 = vpop.xlane.xlu0 %2833
  %v2835 = vmul.f32 %v2828, %v637
  %v2836 = vmul.f32 %v2831, %v637
  %v2837 = vmul.f32 %v2834, %v637
  %v2838 = vsub.f32 %v2819, %v2835
  %v2839 = vsub.f32 %v2820, %v2836
  %v2840 = vsub.f32 %v2821, %v2837
  %v2841 = vmul.f32 %v2838, %v2838
  %v2842 = vmul.f32 %v2839, %v2839
  %v2843 = vmul.f32 %v2840, %v2840
  %v2844 = vsel %vm627, %v2841, 0.0
  %2845 = vadd.xlane.f32.xlu0 %v2844
  %v2846 = vpop.xlane.xlu0 %2845
  %v2847 = vsel %vm627, %v2842, 0.0
  %2848 = vadd.xlane.f32.xlu0 %v2847
  %v2849 = vpop.xlane.xlu0 %2848
  %v2850 = vsel %vm627, %v2843, 0.0
  %2851 = vadd.xlane.f32.xlu0 %v2850
  %v2852 = vpop.xlane.xlu0 %2851
  %v2853 = vmul.f32 %v2846, %v637
  %v2854 = vmul.f32 %v2849, %v637
  %v2855 = vmul.f32 %v2852, %v637
  %v2856 = vadd.f32 %v2853, 1e-05
  %v2857 = vadd.f32 %v2854, 1e-05
  %v2858 = vadd.f32 %v2855, 1e-05
  %v2859 = vrsqrt.pop %v2856
  %v2860 = vrsqrt.pop %v2857
  %v2861 = vrsqrt.pop %v2858
  %v2862 = vmul.f32 %v2838, %v2859
  %v2863 = vmul.f32 %v2839, %v2860
  %v2864 = vmul.f32 %v2840, %v2861
  %v2866 = vlaneseq
  %v2867 = vshrl.u32 %v2866, 7
  %v2868 = vsub.s32 0, %v2867
  %v2869 = vrot.slane %v2823, %v2868
  %v2871 = vmul.f32 %v2862, %v2869
  %v2872 = vmul.f32 %v2863, %v2869
  %v2873 = vmul.f32 %v2864, %v2869
  %v2875 = vlaneseq
  %v2876 = vshrl.u32 %v2875, 7
  %v2877 = vsub.s32 0, %v2876
  %v2878 = vrot.slane %v2825, %v2877
  %v2880 = vadd.f32 %v2871, %v2878
  %v2881 = vadd.f32 %v2872, %v2878
  %v2882 = vadd.f32 %v2873, %v2878
  %s2883 = scalar_lea.vmem %s17, 16
  %v2884 = vld [vmem:[%s2883] sm:$0xf]
  %v2885 = vld [vmem:[%s2883 + $0x4] sm:$0xf]
  %v2886 = vld [vmem:[%s2883 + $0x8] sm:$0xf]
  %v2887 = vld [vmem:[%s2883 + $0xc] sm:$0xf]
  %s2888 = scalar_lea.vmem %s18, 1
  %v2889 = vld [vmem:[%s2888] sm:$0x1]
  %v2890 = vpack.c.bf16 %v2881, %v2880
  %v2891 = vpack.c.bf16 %v2882, %v2882
  %v2893 = vlaneseq
  %v2894 = vshrl.u32 %v2893, 7
  %v2895 = vsub.s32 0, %v2894
  %v2896 = vrot.slane %v2889, %v2895
  %v2902 = vunpack.c.l.b16 %v2884
  %v2903 = vunpack.c.l.b16 %v2885
  %v2904 = vunpack.c.l.b16 %v2886
  %v2905 = vunpack.c.l.b16 %v2887
  %v2906 = vpack.c.b16 %v2903, %v2902
  %v2907 = vpack.c.b16 %v2905, %v2904
  %v2911 = vsel %vm627, %v2890, 0
  %v2914 = vsel %vm627, %v2891, 0
  %2916 = vmatprep.subr.bf16.mxu0 0
  %2917 = vmatpush1.bf16.msra.mxu0 %v2906
  %2918 = vmatprep.subr.bf16.mxu0 0
  %2919 = vmatpush1.bf16.msra.mxu0 %v2907
  %2920 = vmatprep.subr.bf16.mxu0 0
  %2921 = vmatpush1.bf16.msra.mxu0 0
  %2922 = vmatprep.subr.bf16.mxu0 0
  %2923 = vmatpush1.bf16.msra.mxu0 0
  %2924 = vmatprep.subr.bf16.mxu0 0
  %2925 = vmatpush1.bf16.msra.mxu0 0
  %2926 = vmatprep.subr.bf16.mxu0 0
  %2927 = vmatpush1.bf16.msra.mxu0 0
  %2928 = vmatprep.subr.bf16.mxu0 0
  %2929 = vmatpush1.bf16.msra.mxu0 0
  %2930 = vmatprep.subr.bf16.mxu0 0
  %2931 = vmatpush1.bf16.msra.mxu0 0
  %2932 = vmatprep.subr.bf16.mxu0 0
  %2933 = vmatpush1.bf16.msra.mxu0 0
  %2934 = vmatprep.subr.bf16.mxu0 0
  %2935 = vmatpush1.bf16.msra.mxu0 0
  %2936 = vmatprep.subr.bf16.mxu0 0
  %2937 = vmatpush1.bf16.msra.mxu0 0
  %2938 = vmatprep.subr.bf16.mxu0 0
  %2939 = vmatpush1.bf16.msra.mxu0 0
  %2940 = vmatprep.subr.bf16.mxu0 0
  %2941 = vmatpush1.bf16.msra.mxu0 0
  %2942 = vmatprep.subr.bf16.mxu0 0
  %2943 = vmatpush1.bf16.msra.mxu0 0
  %2944 = vmatprep.subr.bf16.mxu0 0
  %2945 = vmatpush1.bf16.msra.mxu0 0
  %2946 = vmatprep.subr.bf16.mxu0 0
  %2947 = vmatpush1.bf16.msra.mxu0 0
  %2948 = vmatprep.mubr.bf16.mxu0 0
  %2949 = vmatmul.mubr.bf16.gmra.mrb[0].mxu0 %v2911
  %v2950 = vpop.f32.mrb[0].mxu0
  %v2951 = vadd.f32 %v2896, %v2950
  %v2952 = vpop.f32.mrb[0].mxu0
  %v2953 = vpop.f32.mrb[0].mxu0
  %v2954 = vadd.f32 %v2896, %v2953
  %v2955 = vpop.f32.mrb[0].mxu0
  %2956 = vmatprep.mubr.bf16.mxu0 0
  %2957 = vmatmul.mubr.bf16.gmra.mrb[0].mxu0 %v2914
  %v2958 = vpop.f32.mrb[0].mxu0
  %v2959 = vadd.f32 %v2896, %v2958
  %v2960 = vpop.f32.mrb[0].mxu0
  %v2961 = vpop.f32.mrb[0].mxu0
  %v2962 = vpop.f32.mrb[0].mxu0
  %2963 = vdwg.mxu0
  %v2964 = vmul.f32 %v2951, 0.5
  %v2965 = vmul.f32 %v2954, 0.5
  %v2966 = vmul.f32 %v2959, 0.5
  %v2967 = vmul.f32 %v2951, 0.044715
  %v2968 = vmul.f32 %v2954, 0.044715
  %v2969 = vmul.f32 %v2959, 0.044715
  %v2970 = vmul.f32 %v2967, %v2951
  %v2971 = vmul.f32 %v2968, %v2954
  %v2972 = vmul.f32 %v2969, %v2959
  %v2973 = vmul.f32 %v2970, %v2951
  %v2974 = vmul.f32 %v2971, %v2954
  %v2975 = vmul.f32 %v2972, %v2959
  %v2976 = vadd.f32 %v2951, %v2973
  %v2977 = vadd.f32 %v2954, %v2974
  %v2978 = vadd.f32 %v2959, %v2975
  %v2979 = vmul.f32 %v2976, 0.7978846
  %v2980 = vmul.f32 %v2977, 0.7978846
  %v2981 = vmul.f32 %v2978, 0.7978846
  %v2982 = vtanh.pop %v2979
  %v2983 = vtanh.pop %v2980
  %v2984 = vtanh.pop %v2981
  %v2985 = vadd.f32 %v2982, 1.0
  %v2986 = vadd.f32 %v2983, 1.0
  %v2987 = vadd.f32 %v2984, 1.0
  %v2988 = vmul.f32 %v2964, %v2985
  %v2989 = vmul.f32 %v2965, %v2986
  %v2990 = vmul.f32 %v2966, %v2987
  %s2991 = scalar_lea.vmem %s19, 64
  %v2992 = vld [vmem:[%s2991] sm:$0xf]
  %v2993 = vld [vmem:[%s2991 + $0x4] sm:$0xf]
  %v2994 = vld [vmem:[%s2991 + $0x8] sm:$0xf]
  %v2995 = vld [vmem:[%s2991 + $0xc] sm:$0xf]
  %v2996 = vld [vmem:[%s2991 + $0x10] sm:$0xf]
  %v2997 = vld [vmem:[%s2991 + $0x14] sm:$0xf]
  %v2998 = vld [vmem:[%s2991 + $0x18] sm:$0xf]
  %v2999 = vld [vmem:[%s2991 + $0x1c] sm:$0xf]
  %v3000 = vld [vmem:[%s2991 + $0x20] sm:$0xf]
  %v3001 = vld [vmem:[%s2991 + $0x24] sm:$0xf]
  %v3002 = vld [vmem:[%s2991 + $0x28] sm:$0xf]
  %v3003 = vld [vmem:[%s2991 + $0x2c] sm:$0xf]
  %v3004 = vld [vmem:[%s2991 + $0x30] sm:$0xf]
  %v3005 = vld [vmem:[%s2991 + $0x34] sm:$0xf]
  %v3006 = vld [vmem:[%s2991 + $0x38] sm:$0xf]
  %v3007 = vld [vmem:[%s2991 + $0x3c] sm:$0xf]
  %s3008 = scalar_lea.vmem %s20, 1
  %v3009 = vld [vmem:[%s3008] sm:$0x1]
  %v3010 = vpack.c.bf16 %v2989, %v2988
  %v3011 = vpack.c.bf16 %v2990, %v2990
  %v3013 = vlaneseq
  %v3014 = vshrl.u32 %v3013, 7
  %v3015 = vsub.s32 0, %v3014
  %v3016 = vrot.slane %v3009, %v3015
  %v3034 = vunpack.c.l.b16 %v2992
  %v3035 = vunpack.c.l.b16 %v2993
  %v3036 = vunpack.c.l.b16 %v2994
  %v3037 = vunpack.c.l.b16 %v2995
  %v3038 = vunpack.c.l.b16 %v2996
  %v3039 = vunpack.c.l.b16 %v2997
  %v3040 = vunpack.c.l.b16 %v2998
  %v3041 = vunpack.c.l.b16 %v2999
  %v3042 = vunpack.c.l.b16 %v3000
  %v3043 = vunpack.c.l.b16 %v3001
  %v3044 = vunpack.c.l.b16 %v3002
  %v3045 = vunpack.c.l.b16 %v3003
  %v3046 = vunpack.c.l.b16 %v3004
  %v3047 = vunpack.c.l.b16 %v3005
  %v3048 = vunpack.c.l.b16 %v3006
  %v3049 = vunpack.c.l.b16 %v3007
  %v3050 = vpack.c.b16 %v3035, %v3034
  %v3051 = vpack.c.b16 %v3037, %v3036
  %v3052 = vpack.c.b16 %v3039, %v3038
  %v3053 = vpack.c.b16 %v3041, %v3040
  %v3054 = vpack.c.b16 %v3043, %v3042
  %v3055 = vpack.c.b16 %v3045, %v3044
  %v3056 = vpack.c.b16 %v3047, %v3046
  %v3057 = vpack.c.b16 %v3049, %v3048
  %3066 = vmatprep.subr.bf16.mxu0 0
  %3067 = vmatpush1.bf16.msra.mxu0 %v3050
  %3068 = vmatprep.subr.bf16.mxu0 0
  %3069 = vmatpush1.bf16.msra.mxu0 %v3051
  %3070 = vmatprep.subr.bf16.mxu0 0
  %3071 = vmatpush1.bf16.msra.mxu0 %v3052
  %3072 = vmatprep.subr.bf16.mxu0 0
  %3073 = vmatpush1.bf16.msra.mxu0 %v3053
  %3074 = vmatprep.subr.bf16.mxu0 0
  %3075 = vmatpush1.bf16.msra.mxu0 %v3054
  %3076 = vmatprep.subr.bf16.mxu0 0
  %3077 = vmatpush1.bf16.msra.mxu0 %v3055
  %3078 = vmatprep.subr.bf16.mxu0 0
  %3079 = vmatpush1.bf16.msra.mxu0 %v3056
  %3080 = vmatprep.subr.bf16.mxu0 0
  %3081 = vmatpush1.bf16.msra.mxu0 %v3057
  %3082 = vmatprep.subr.bf16.mxu0 0
  %3083 = vmatpush1.bf16.msra.mxu0 0
  %3084 = vmatprep.subr.bf16.mxu0 0
  %3085 = vmatpush1.bf16.msra.mxu0 0
  %3086 = vmatprep.subr.bf16.mxu0 0
  %3087 = vmatpush1.bf16.msra.mxu0 0
  %3088 = vmatprep.subr.bf16.mxu0 0
  %3089 = vmatpush1.bf16.msra.mxu0 0
  %3090 = vmatprep.subr.bf16.mxu0 0
  %3091 = vmatpush1.bf16.msra.mxu0 0
  %3092 = vmatprep.subr.bf16.mxu0 0
  %3093 = vmatpush1.bf16.msra.mxu0 0
  %3094 = vmatprep.subr.bf16.mxu0 0
  %3095 = vmatpush1.bf16.msra.mxu0 0
  %3096 = vmatprep.subr.bf16.mxu0 0
  %3097 = vmatpush1.bf16.msra.mxu0 0
  %3098 = vmatprep.mubr.bf16.mxu0 0
  %3099 = vmatmul.mubr.bf16.gmra.mrb[0].mxu0 %v3010
  %v3100 = vpop.f32.mrb[0].mxu0
  %v3101 = vadd.f32 %v3016, %v3100
  %v3102 = vpop.f32.mrb[0].mxu0
  %v3103 = vpop.f32.mrb[0].mxu0
  %v3104 = vadd.f32 %v3016, %v3103
  %v3105 = vpop.f32.mrb[0].mxu0
  %3106 = vmatprep.mubr.bf16.mxu0 0
  %3107 = vmatmul.mubr.bf16.gmra.mrb[0].mxu0 %v3011
  %v3108 = vpop.f32.mrb[0].mxu0
  %v3109 = vadd.f32 %v3016, %v3108
  %v3110 = vpop.f32.mrb[0].mxu0
  %v3111 = vpop.f32.mrb[0].mxu0
  %v3112 = vpop.f32.mrb[0].mxu0
  %3113 = vdwg.mxu0
  %v3114 = vadd.f32 %v2819, %v3101
  %v3115 = vadd.f32 %v2820, %v3104
  %v3116 = vadd.f32 %v2821, %v3109
  %v3117 = vld [vmem:[%s21] sm:$0x1]
  %v3118 = vld [vmem:[%s22] sm:$0x1]
  %v3119 = vsel %vm627, %v3114, 0.0
  %3120 = vadd.xlane.f32.xlu0 %v3119
  %v3121 = vpop.xlane.xlu0 %3120
  %v3122 = vsel %vm627, %v3115, 0.0
  %3123 = vadd.xlane.f32.xlu0 %v3122
  %v3124 = vpop.xlane.xlu0 %3123
  %v3125 = vsel %vm627, %v3116, 0.0
  %3126 = vadd.xlane.f32.xlu0 %v3125
  %v3127 = vpop.xlane.xlu0 %3126
  %v3128 = vmul.f32 %v3121, %v637
  %v3129 = vmul.f32 %v3124, %v637
  %v3130 = vmul.f32 %v3127, %v637
  %v3131 = vsub.f32 %v3114, %v3128
  %v3132 = vsub.f32 %v3115, %v3129
  %v3133 = vsub.f32 %v3116, %v3130
  %v3134 = vmul.f32 %v3131, %v3131
  %v3135 = vmul.f32 %v3132, %v3132
  %v3136 = vmul.f32 %v3133, %v3133
  %v3137 = vsel %vm627, %v3134, 0.0
  %3138 = vadd.xlane.f32.xlu0 %v3137
  %v3139 = vpop.xlane.xlu0 %3138
  %v3140 = vsel %vm627, %v3135, 0.0
  %3141 = vadd.xlane.f32.xlu0 %v3140
  %v3142 = vpop.xlane.xlu0 %3141
  %v3143 = vsel %vm627, %v3136, 0.0
  %3144 = vadd.xlane.f32.xlu0 %v3143
  %v3145 = vpop.xlane.xlu0 %3144
  %v3146 = vmul.f32 %v3139, %v637
  %v3147 = vmul.f32 %v3142, %v637
  %v3148 = vmul.f32 %v3145, %v637
  %v3149 = vadd.f32 %v3146, 1e-05
  %v3150 = vadd.f32 %v3147, 1e-05
  %v3151 = vadd.f32 %v3148, 1e-05
  %v3152 = vrsqrt.pop %v3149
  %v3153 = vrsqrt.pop %v3150
  %v3154 = vrsqrt.pop %v3151
  %v3155 = vmul.f32 %v3131, %v3152
  %v3156 = vmul.f32 %v3132, %v3153
  %v3157 = vmul.f32 %v3133, %v3154
  %v3159 = vlaneseq
  %v3160 = vshrl.u32 %v3159, 7
  %v3161 = vsub.s32 0, %v3160
  %v3162 = vrot.slane %v3117, %v3161
  %v3164 = vmul.f32 %v3155, %v3162
  %v3165 = vmul.f32 %v3156, %v3162
  %v3166 = vmul.f32 %v3157, %v3162
  %v3168 = vlaneseq
  %v3169 = vshrl.u32 %v3168, 7
  %v3170 = vsub.s32 0, %v3169
  %v3171 = vrot.slane %v3118, %v3170
  %v3173 = vadd.f32 %v3164, %v3171
  %v3174 = vadd.f32 %v3165, %v3171
  %v3175 = vadd.f32 %v3166, %v3171
  %v3176 = vpack.c.bf16 %v3174, %v3173
  %v3177 = vpack.c.bf16 %v3175, %v3175
  %v3178 = vld [vmem:[%s23] sm:$0xf]
  %v3179 = vld [vmem:[%s23 + $0x4] sm:$0xf]
  %v3180 = vld [vmem:[%s23 + $0x8] sm:$0xf]
  %v3181 = vld [vmem:[%s23 + $0xc] sm:$0xf]
  %v3182 = vld [vmem:[%s23 + $0x10] sm:$0xf]
  %v3183 = vld [vmem:[%s23 + $0x14] sm:$0xf]
  %v3184 = vld [vmem:[%s23 + $0x18] sm:$0xf]
  %v3185 = vld [vmem:[%s23 + $0x1c] sm:$0xf]
  %v3186 = vld [vmem:[%s23 + $0x20] sm:$0xf]
  %v3187 = vld [vmem:[%s23 + $0x24] sm:$0xf]
  %v3188 = vld [vmem:[%s23 + $0x28] sm:$0xf]
  %v3189 = vld [vmem:[%s23 + $0x2c] sm:$0xf]
  %v3190 = vld [vmem:[%s23 + $0x30] sm:$0xf]
  %v3191 = vld [vmem:[%s23 + $0x34] sm:$0xf]
  %v3192 = vld [vmem:[%s23 + $0x38] sm:$0xf]
  %v3193 = vld [vmem:[%s23 + $0x3c] sm:$0xf]
  %v3210 = vunpack.c.l.b16 %v3178
  %v3211 = vunpack.c.l.b16 %v3179
  %v3212 = vunpack.c.l.b16 %v3180
  %v3213 = vunpack.c.l.b16 %v3181
  %v3214 = vunpack.c.l.b16 %v3182
  %v3215 = vunpack.c.l.b16 %v3183
  %v3216 = vunpack.c.l.b16 %v3184
  %v3217 = vunpack.c.l.b16 %v3185
  %v3218 = vunpack.c.l.b16 %v3186
  %v3219 = vunpack.c.l.b16 %v3187
  %v3220 = vunpack.c.l.b16 %v3188
  %v3221 = vunpack.c.l.b16 %v3189
  %v3222 = vunpack.c.l.b16 %v3190
  %v3223 = vunpack.c.l.b16 %v3191
  %v3224 = vunpack.c.l.b16 %v3192
  %v3225 = vunpack.c.l.b16 %v3193
  %v3226 = vpack.c.b16 %v3211, %v3210
  %v3227 = vpack.c.b16 %v3213, %v3212
  %v3228 = vpack.c.b16 %v3215, %v3214
  %v3229 = vpack.c.b16 %v3217, %v3216
  %v3230 = vpack.c.b16 %v3219, %v3218
  %v3231 = vpack.c.b16 %v3221, %v3220
  %v3232 = vpack.c.b16 %v3223, %v3222
  %v3233 = vpack.c.b16 %v3225, %v3224
  %v3235 = vsel %vm627, %v3176, 0
  %v3238 = vsel %vm627, %v3177, 0
  %v3241 = vsel %vm627, %v3226, 0
  %v3244 = vsel %vm627, %v3227, 0
  %v3247 = vsel %vm627, %v3228, 0
  %v3250 = vsel %vm627, %v3229, 0
  %v3253 = vsel %vm627, %v3230, 0
  %v3256 = vsel %vm627, %v3231, 0
  %v3259 = vsel %vm627, %v3232, 0
  %v3262 = vsel %vm627, %v3233, 0
  %3264 = vmatprep.subr.bf16.mxu0 0
  %3265 = vmatpush1.bf16.xpose.msra.mxu0 %v3241
  %3266 = vmatprep.subr.bf16.mxu0 0
  %3267 = vmatpush1.bf16.xpose.msra.mxu0 %v3244
  %3268 = vmatprep.subr.bf16.mxu0 0
  %3269 = vmatpush1.bf16.xpose.msra.mxu0 %v3247
  %3270 = vmatprep.subr.bf16.mxu0 0
  %3271 = vmatpush1.bf16.xpose.msra.mxu0 %v3250
  %3272 = vmatprep.subr.bf16.mxu0 0
  %3273 = vmatpush1.bf16.xpose.msra.mxu0 %v3253
  %3274 = vmatprep.subr.bf16.mxu0 0
  %3275 = vmatpush1.bf16.xpose.msra.mxu0 %v3256
  %3276 = vmatprep.subr.bf16.mxu0 0
  %3277 = vmatpush1.bf16.xpose.msra.mxu0 %v3259
  %3278 = vmatprep.subr.bf16.mxu0 0
  %3279 = vmatpush1.bf16.xpose.msra.mxu0 %v3262
  %3280 = vmatprep.subr.bf16.mxu0 0
  %3281 = vmatpush1.bf16.xpose.msra.mxu0 0
  %3282 = vmatprep.subr.bf16.mxu0 0
  %3283 = vmatpush1.bf16.xpose.msra.mxu0 0
  %3284 = vmatprep.subr.bf16.mxu0 0
  %3285 = vmatpush1.bf16.xpose.msra.mxu0 0
  %3286 = vmatprep.subr.bf16.mxu0 0
  %3287 = vmatpush1.bf16.xpose.msra.mxu0 0
  %3288 = vmatprep.subr.bf16.mxu0 0
  %3289 = vmatpush1.bf16.xpose.msra.mxu0 0
  %3290 = vmatprep.subr.bf16.mxu0 0
  %3291 = vmatpush1.bf16.xpose.msra.mxu0 0
  %3292 = vmatprep.subr.bf16.mxu0 0
  %3293 = vmatpush1.bf16.xpose.msra.mxu0 0
  %3294 = vmatprep.subr.bf16.mxu0 0
  %3295 = vmatpush1.bf16.xpose.msra.mxu0 0
  %3296 = vmatprep.mubr.bf16.mxu0 0
  %3297 = vmatmul.mubr.bf16.gmra.mrb[0].mxu0 %v3235
  %v3298 = vpop.f32.mrb[0].mxu0
  %v3299 = vadd.f32 0.0, %v3298
  %v3300 = vpop.f32.mrb[0].mxu0
  %v3301 = vpop.f32.mrb[0].mxu0
  %v3302 = vadd.f32 0.0, %v3301
  %v3303 = vpop.f32.mrb[0].mxu0
  %3304 = vmatprep.mubr.bf16.mxu0 0
  %3305 = vmatmul.mubr.bf16.gmra.mrb[0].mxu0 %v3238
  %v3306 = vpop.f32.mrb[0].mxu0
  %v3307 = vadd.f32 0.0, %v3306
  %v3308 = vpop.f32.mrb[0].mxu0
  %v3309 = vpop.f32.mrb[0].mxu0
  %v3310 = vpop.f32.mrb[0].mxu0
  %3311 = vdwg.mxu0
  %3312 = vst [vmem:[%s24] sm:$0xff] %v3299
  %3313 = vst [vmem:[%s24 + $0x8] sm:$0xff] %v3302
  %3314 = vst [vmem:[%s24 + $0x10] sm:$0xff] %v3307
  // Predicated region
  $region98: #{clip_caption_forward.1} parent=0 // pred_check
    _
  $region99: #{clip_caption_forward.1} parent=0 // pred_check_branch
    %3316 = sbr.rel (0) target = $region101
  $region100: #{clip_caption_forward.1} parent=0 // pred_region
    _
  $region101: #{clip_caption_forward.1} parent=0 // pred_fallthru
    _
  // Predicated region
  $region102: #{clip_caption_forward.1} parent=0 // pred_check
    _
  $region103: #{clip_caption_forward.1} parent=0 // pred_check_branch
    %3318 = sbr.rel (0) target = $region105
  $region104: #{clip_caption_forward.1} parent=0 // pred_region
    _
  $region105: #{clip_caption_forward.1} parent=0 // pred_fallthru
    _

</llo_original>
